<compile_context>
chip_gen: v7x
topology: tpu7x:2x2x1
jax: 0.10.0
libtpu: 0.0.40
codegen_flags: <defaults>
</compile_context>

<pallas_src>
import jax
import jax.numpy as jnp
from jax.experimental import pallas as pl
from jax.experimental.pallas import tpu as pltpu

NUM_CLASS = 30
OBJ_CENTER_BIN = 6
OBJ_ORI_BIN = 6

FEAT = 2048
HID = 256
NHEAD = 4
HID_ALL = NHEAD * HID            # 1024 fused hidden width
N_BLOCKS = 2                     # grid: heads {size, ori} | {centroid, offset}
HID_BLK = HID_ALL // N_BLOCKS    # 512
OUT_BLK = 256                    # lane-dense padded output per block
OUT_PAD = N_BLOCKS * OUT_BLK     # 512

# True head output widths and their column offsets in the padded fused output.
SIZE_W = NUM_CLASS * 4           # 120
ORI_W = OBJ_ORI_BIN * 2          # 12
CENT_W = OBJ_CENTER_BIN * 2      # 12
OFF_W = 2
SIZE_OFF = 0
ORI_OFF = 128
CENT_OFF = 256
OFF_OFF = 384


def bdb3d_head_kernel(x_ref, mask_ref, wA_ref, bA_ref, w2_ref, b2_ref, out_ref):
    """One grid step = two of the four heads (one 512-wide hidden column block).

    x_ref    : (B, 2048)  bf16   backbone feature (resident across grid steps)
    mask_ref : (B, 512)   f32    inverted-dropout mask, values in {0., 2.}
    wA_ref   : (2048, 512) bf16  fused first-layer weight column block
    bA_ref   : (1, 512)   f32    fused first-layer bias block
    w2_ref   : (512, 256) f32    block-diagonal second-layer weight block
    b2_ref   : (1, 256)   f32    padded second-layer bias block
    out_ref  : (B, 256)   f32    lane-dense padded output block
    """
    x = x_ref[...]
    # First layer (bf16 MXU operands, f32 accumulation).
    h = jnp.dot(x, wA_ref[...], preferred_element_type=jnp.float32)
    h = h + bA_ref[...]
    # leaky_relu(0.2) and dropout(p=0.5, training=True) in f32 on the VPU.
    h = jnp.where(h >= 0.0, h, 0.2 * h)
    h = h * mask_ref[...]
    # Second layer: one block-diagonal matmul, one unmasked lane-dense store.
    out_ref[...] = (jnp.dot(h, w2_ref[...], preferred_element_type=jnp.float32)
                    + b2_ref[...])


def _fused_heads(x_bf16, mask, wA, bA, W2, B2):
    B = x_bf16.shape[0]

    flops = 2 * B * FEAT * HID_ALL + 2 * B * HID_ALL * OUT_BLK
    bytes_accessed = (wA.size * 2 + x_bf16.size * 2 + mask.size * 4
                      + bA.size * 4 + N_BLOCKS * HID_BLK * OUT_BLK * 4
                      + B2.size * 4 + B * OUT_PAD * 4)

    grid_spec = pltpu.PrefetchScalarGridSpec(
        num_scalar_prefetch=0,
        grid=(N_BLOCKS,),
        in_specs=[
            pl.BlockSpec((B, FEAT), lambda i: (0, 0)),          # x (resident)
            pl.BlockSpec((B, HID_BLK), lambda i: (0, i)),       # dropout mask
            pl.BlockSpec((FEAT, HID_BLK), lambda i: (0, i)),    # wA column block
            pl.BlockSpec((1, HID_BLK), lambda i: (0, i)),       # bA block
            pl.BlockSpec((HID_BLK, OUT_BLK), lambda i: (i, i)), # block-diag W2
            pl.BlockSpec((1, OUT_BLK), lambda i: (0, i)),       # B2 block
        ],
        out_specs=pl.BlockSpec((B, OUT_BLK), lambda i: (0, i)),
    )

    return pl.pallas_call(
        bdb3d_head_kernel,
        out_shape=jax.ShapeDtypeStruct((B, OUT_PAD), jnp.float32),
        grid_spec=grid_spec,
        compiler_params=pltpu.CompilerParams(
            dimension_semantics=("parallel",),
            vmem_limit_bytes=24 << 20,
        ),
        cost_estimate=pl.CostEstimate(
            flops=flops, transcendentals=0, bytes_accessed=bytes_accessed),
    )(x_bf16, mask, wA, bA, W2, B2)


def init_params(key):
    """Init matching the module (weight ~ N(0, 0.01), bias = 0), with the
    weight fusion done ONCE here instead of per forward call.
    Weights are stored [in, out] (transposed vs. torch's [out, in])."""
    ks = jax.random.split(key, 8)
    rnd = lambda k, shp: 0.01 * jax.random.normal(k, shp, jnp.float32)

    w1, b1 = rnd(ks[0], (FEAT, HID)), jnp.zeros((HID,), jnp.float32)     # fc1
    w2, b2 = rnd(ks[1], (HID, SIZE_W)), jnp.zeros((SIZE_W,), jnp.float32)  # fc2
    w3, b3 = rnd(ks[2], (FEAT, HID)), jnp.zeros((HID,), jnp.float32)     # fc3
    w4, b4 = rnd(ks[3], (HID, ORI_W)), jnp.zeros((ORI_W,), jnp.float32)  # fc4
    w5, b5 = rnd(ks[4], (FEAT, HID)), jnp.zeros((HID,), jnp.float32)     # fc5
    wc, bc = rnd(ks[5], (HID, CENT_W)), jnp.zeros((CENT_W,), jnp.float32)  # fc_centroid
    wo1, bo1 = rnd(ks[6], (FEAT, HID)), jnp.zeros((HID,), jnp.float32)   # fc_off_1
    wo2, bo2 = rnd(ks[7], (HID, OFF_W)), jnp.zeros((OFF_W,), jnp.float32)  # fc_off_2

    # Fused first layer: [2048, 1024] bf16 (halves the dominant HBM load).
    wA = jnp.concatenate([w1, w3, w5, wo1], axis=1).astype(jnp.bfloat16)
    bA = jnp.concatenate([b1, b3, b5, bo1], axis=0)[None, :]   # f32

    # Block-diagonal fused second layer, padded to a lane-dense [1024, 512].
    W2 = jnp.zeros((HID_ALL, OUT_PAD), jnp.float32)
    W2 = W2.at[0 * HID:1 * HID, SIZE_OFF:SIZE_OFF + SIZE_W].set(w2)
    W2 = W2.at[1 * HID:2 * HID, ORI_OFF:ORI_OFF + ORI_W].set(w4)
    W2 = W2.at[2 * HID:3 * HID, CENT_OFF:CENT_OFF + CENT_W].set(wc)
    W2 = W2.at[3 * HID:4 * HID, OFF_OFF:OFF_OFF + OFF_W].set(wo2)

    B2 = jnp.zeros((1, OUT_PAD), jnp.float32)
    B2 = B2.at[0, SIZE_OFF:SIZE_OFF + SIZE_W].set(b2)
    B2 = B2.at[0, ORI_OFF:ORI_OFF + ORI_W].set(b4)
    B2 = B2.at[0, CENT_OFF:CENT_OFF + CENT_W].set(bc)
    B2 = B2.at[0, OFF_OFF:OFF_OFF + OFF_W].set(bo2)

    return {'wA': wA, 'bA': bA, 'W2': W2, 'B2': B2}


def bdb3d_forward(flatten, params, dropout_key):
    """flatten: [B, 2048] f32 feature (resnet34 backbone output, flattened)."""
    B = flatten.shape[0]

    # Inverted dropout mask, p=0.5, training=True (kept units scaled by 2).
    keep = jax.random.bernoulli(dropout_key, 0.5, (B, HID_ALL))
    mask = keep.astype(jnp.float32) * 2.0

    x_bf16 = flatten.astype(jnp.bfloat16)

    fused = _fused_heads(x_bf16, mask,
                         params['wA'], params['bA'], params['W2'], params['B2'])

    # Plain-JAX glue: the view()/slice bookkeeping of the torch forward.
    size = fused[:, SIZE_OFF:SIZE_OFF + SIZE_W].reshape(B, NUM_CLASS, 4)
    size_reg = size[:, :, :3]
    size_cls = size[:, :, 3]

    ori = fused[:, ORI_OFF:ORI_OFF + ORI_W].reshape(B, OBJ_ORI_BIN, 2)
    ori_reg = ori[:, :, 0]
    ori_cls = ori[:, :, 1]

    centroid = fused[:, CENT_OFF:CENT_OFF + CENT_W].reshape(B, OBJ_CENTER_BIN, 2)
    centroid_cls = centroid[:, :, 0]
    centroid_reg = centroid[:, :, 1]

    offset = fused[:, OFF_OFF:OFF_OFF + OFF_W]

    return size_reg, size_cls, ori_reg, ori_cls, centroid_reg, centroid_cls, offset


if __name__ == "__main__":
    key = jax.random.PRNGKey(0)
    k_in, k_param, k_drop = jax.random.split(key, 3)

    B = 2
    # Flattened backbone feature (resnet34 output flattened to 2048 dims).
    flatten = jax.random.normal(k_in, (B, FEAT), dtype=jnp.float32)

    params = init_params(k_param)

    outs = bdb3d_forward(flatten, params, k_drop)
    outs = jax.block_until_ready(outs)

    expected = [(B, NUM_CLASS, 3), (B, NUM_CLASS), (B, OBJ_ORI_BIN),
                (B, OBJ_ORI_BIN), (B, OBJ_CENTER_BIN), (B, OBJ_CENTER_BIN),
                (B, 2)]
    assert [tuple(o.shape) for o in outs] == expected, \
        [tuple(o.shape) for o in outs]
    assert all(bool(jnp.isfinite(o).all()) for o in outs)

    print("KERNEL_OK")
</pallas_src>

<mosaic_0001>
module attributes {stable_mosaic.version = 11 : i64} {
  func.func @bdb3d_head_kernel(%arg0: i32, %arg1: memref<2x2048xbf16, #tpu.memory_space<vmem>>, %arg2: memref<2x512xf32, #tpu.memory_space<vmem>>, %arg3: memref<2048x512xbf16, #tpu.memory_space<vmem>>, %arg4: memref<1x512xf32, #tpu.memory_space<vmem>>, %arg5: memref<512x256xf32, #tpu.memory_space<vmem>>, %arg6: memref<1x256xf32, #tpu.memory_space<vmem>>, %arg7: memref<2x256xf32, #tpu.memory_space<vmem>>) attributes {dimension_semantics = [#tpu.dimension_semantics<parallel>], iteration_bounds = array<i64: 2>, scalar_prefetch = 0 : i64, scratch_operands = 0 : i64, tpu.core_type = #tpu.core_type<tc>, window_params = [{pipeline_mode = #tpu.pipeline_mode<synchronous>, transform_indices = @transform_0, window_bounds = array<i64: 2, 2048>}, {transform_indices = @transform_1, window_bounds = array<i64: 2, 512>}, {transform_indices = @transform_2, window_bounds = array<i64: 2048, 512>}, {transform_indices = @transform_3, window_bounds = array<i64: 1, 512>}, {transform_indices = @transform_4, window_bounds = array<i64: 512, 256>}, {transform_indices = @transform_5, window_bounds = array<i64: 1, 256>}, {transform_indices = @transform_6, window_bounds = array<i64: 2, 256>}]} {
    %c0 = arith.constant 0 : index
    %c0_0 = arith.constant 0 : index
    %0 = vector.load %arg1[%c0, %c0_0] : memref<2x2048xbf16, #tpu.memory_space<vmem>>, vector<2x2048xbf16>
    %c0_1 = arith.constant 0 : index
    %c0_2 = arith.constant 0 : index
    %1 = vector.load %arg3[%c0_1, %c0_2] : memref<2048x512xbf16, #tpu.memory_space<vmem>>, vector<2048x512xbf16>
    %cst = arith.constant dense<0.000000e+00> : vector<2x512xf32>
    %2 = tpu.matmul %0, %1, %cst {dimension_numbers = #tpu.dot_dimension_numbers<[1], [0], [0], [1], [0, 0, 1, 1], [], []>} : vector<2x2048xbf16>, vector<2048x512xbf16>, vector<2x512xf32> -> vector<2x512xf32>
    %c0_3 = arith.constant 0 : index
    %c0_4 = arith.constant 0 : index
    %3 = vector.load %arg4[%c0_3, %c0_4] : memref<1x512xf32, #tpu.memory_space<vmem>>, vector<1x512xf32>
    %4 = vector.broadcast %3 : vector<1x512xf32> to vector<2x512xf32>
    %5 = arith.addf %2, %4 : vector<2x512xf32>
    %cst_5 = arith.constant 0.000000e+00 : f32
    %6 = vector.broadcast %cst_5 : f32 to vector<2x512xf32>
    %7 = arith.cmpf oge, %5, %6 : vector<2x512xf32>
    %cst_6 = arith.constant 2.000000e-01 : f32
    %8 = vector.broadcast %cst_6 : f32 to vector<2x512xf32>
    %9 = arith.mulf %8, %5 : vector<2x512xf32>
    %10 = arith.select %7, %5, %9 : vector<2x512xi1>, vector<2x512xf32>
    %c0_7 = arith.constant 0 : index
    %c0_8 = arith.constant 0 : index
    %11 = vector.load %arg2[%c0_7, %c0_8] : memref<2x512xf32, #tpu.memory_space<vmem>>, vector<2x512xf32>
    %12 = arith.mulf %10, %11 : vector<2x512xf32>
    %c0_9 = arith.constant 0 : index
    %c0_10 = arith.constant 0 : index
    %13 = vector.load %arg5[%c0_9, %c0_10] : memref<512x256xf32, #tpu.memory_space<vmem>>, vector<512x256xf32>
    %cst_11 = arith.constant dense<0.000000e+00> : vector<2x256xf32>
    %14 = tpu.matmul %12, %13, %cst_11 {dimension_numbers = #tpu.dot_dimension_numbers<[1], [0], [0], [1], [0, 0, 1, 1], [], []>} : vector<2x512xf32>, vector<512x256xf32>, vector<2x256xf32> -> vector<2x256xf32>
    %c0_12 = arith.constant 0 : index
    %c0_13 = arith.constant 0 : index
    %15 = vector.load %arg6[%c0_12, %c0_13] : memref<1x256xf32, #tpu.memory_space<vmem>>, vector<1x256xf32>
    %16 = vector.broadcast %15 : vector<1x256xf32> to vector<2x256xf32>
    %17 = arith.addf %14, %16 : vector<2x256xf32>
    %c0_14 = arith.constant 0 : index
    %c0_15 = arith.constant 0 : index
    %18 = vector.load %arg7[%c0_14, %c0_15] : memref<2x256xf32, #tpu.memory_space<vmem>>, vector<2x256xf32>
    tpu.vector_store %arg7[%c0_14, %c0_15], %17 {strides = array<i32>} : memref<2x256xf32, #tpu.memory_space<vmem>>, vector<2x256xf32>,
    return
  }
  func.func @transform_0(%arg0: i32) -> (i32, i32) {
    %c0_i32 = arith.constant 0 : i32
    %c0_i32_0 = arith.constant 0 : i32
    %c0_i32_1 = arith.constant 0 : i32
    return %c0_i32, %c0_i32_0 : i32, i32
  }
  func.func @transform_1(%arg0: i32) -> (i32, i32) {
    %c0_i32 = arith.constant 0 : i32
    %c0_i32_0 = arith.constant 0 : i32
    return %c0_i32, %arg0 : i32, i32
  }
  func.func @transform_2(%arg0: i32) -> (i32, i32) {
    %c0_i32 = arith.constant 0 : i32
    %c0_i32_0 = arith.constant 0 : i32
    return %c0_i32, %arg0 : i32, i32
  }
  func.func @transform_3(%arg0: i32) -> (i32, i32) {
    %c0_i32 = arith.constant 0 : i32
    %c0_i32_0 = arith.constant 0 : i32
    return %c0_i32, %arg0 : i32, i32
  }
  func.func @transform_4(%arg0: i32) -> (i32, i32) {
    %c0_i32 = arith.constant 0 : i32
    return %arg0, %arg0 : i32, i32
  }
  func.func @transform_5(%arg0: i32) -> (i32, i32) {
    %c0_i32 = arith.constant 0 : i32
    %c0_i32_0 = arith.constant 0 : i32
    return %c0_i32, %arg0 : i32, i32
  }
  func.func @transform_6(%arg0: i32) -> (i32, i32) {
    %c0_i32 = arith.constant 0 : i32
    %c0_i32_0 = arith.constant 0 : i32
    return %c0_i32, %arg0 : i32, i32
  }
}

</mosaic_0001>

<llo_original>
// kernel: tpu_custom_call.1
$region0: #{tpu_custom_call.1}
  #allocation0 [shape = 'u32[]', space=smem, size = 0x4, offset = 0x4, fixed_abs, tag = 'smem constant byte address 0x4 - core index']
  #allocation1 [shape = 'u32[144,128]{1,0:T(1,128)}', space=vmem, size = 0x12000, scoped, tag = 'internal scratch']
  %s0 = inlined_call_operand.hbm [shape: bf16[2,2048], index: 0, kind: input, shape index: {}]
  %s1 = inlined_call_operand.hbm [shape: f32[2,1024], index: 1, kind: input, shape index: {}]
  %s2 = inlined_call_operand.hbm [shape: bf16[2048,1024], index: 2, kind: input, shape index: {}]
  %s3 = inlined_call_operand.hbm [shape: f32[1,1024], index: 3, kind: input, shape index: {}]
  %s4 = inlined_call_operand.hbm [shape: f32[1024,512], index: 4, kind: input, shape index: {}]
  %s5 = inlined_call_operand.hbm [shape: f32[1,512], index: 5, kind: input, shape index: {}]
  %s6 = inlined_call_operand.hbm [shape: f32[2,512], index: 6, kind: output, shape index: {}]
  %s7 = sld [smem:[#allocation0]]
  $region81: #{tpu_custom_call.1} parent=0
    _
  %s9 = ssub.s32 1, %s7
  %s10 = scalar_select 0, %s9, %s7
  $region1: #{tpu_custom_call.1} parent=0
    #allocation2 [shape = 'u8[8192]{0}', space=vmem, size = 0x2000, scoped, tag = 'input window, operand 0, single buffered']
    #allocation3 [shape = 's32[2]{0}', space=sflag, size = 0x8, scoped, tag = 'scoped memory for tpu_custom_call.1']
    #allocation4 [shape = 's32[2]{0}', space=sflag, size = 0x8, scoped, tag = 'scoped memory for tpu_custom_call.1']
    #allocation5 [shape = 'u8[8192]{0}', space=vmem, size = 0x2000, scoped, tag = 'input window, operand 1']
    #allocation6 [shape = 's32[2]{0}', space=sflag, size = 0x8, scoped, tag = 'scoped memory for tpu_custom_call.1']
    #allocation7 [shape = 'u8[4194304]{0}', space=vmem, size = 0x400000, scoped, tag = 'input window, operand 2']
    #allocation8 [shape = 'u8[4096]{0}', space=vmem, size = 0x1000, scoped, tag = 'input window, operand 3']
    #allocation9 [shape = 's32[2]{0}', space=sflag, size = 0x8, scoped, tag = 'scoped memory for tpu_custom_call.1']
    #allocation10 [shape = 'u8[1048576]{0}', space=vmem, size = 0x100000, scoped, tag = 'input window, operand 4']
    #allocation11 [shape = 'u8[2048]{0}', space=vmem, size = 0x800, scoped, tag = 'input window, operand 5']
    #allocation12 [shape = 's32[2]{0}', space=sflag, size = 0x8, scoped, tag = 'scoped memory for tpu_custom_call.1']
    #allocation13 [shape = 'u8[4096]{0}', space=vmem, size = 0x1000, scoped, tag = 'output window, operand 0']
    %11 = vsyncpa [#allocation3], 0
    %12 = vsyncpa [#allocation6], 0
    %s13 = scalar_lea.sflag [#allocation6], 1
    %14 = vsyncpa %s13, 0
    %15 = vsyncpa [#allocation9], 0
    %s16 = scalar_lea.sflag [#allocation9], 1
    %17 = vsyncpa %s16, 0
    %18 = vsyncpa [#allocation12], 0
    %s19 = scalar_lea.sflag [#allocation12], 1
    %20 = vsyncpa %s19, 0
    %21 = vsyncpa [#allocation4], 0
    %s22 = scalar_lea.sflag [#allocation4], 1
    %23 = vsyncpa %s22, 0
    loop: start=0, step=1, limit=4
    $region2: #{tpu_custom_call.1} parent=1 // loop_pre_header
      _
    $region3: #{tpu_custom_call.1} parent=1 // loop_header
      %s25 = sphi 0, %s29
      %p26 = scmp.ge.s32.totalorder %s25, 4
      %s33 = sphi 0, %s33
      %s35 = sphi 0, %s33
      %s36 = sphi 0, %s35
      %s50 = sphi 0, %s36
      %s56 = sphi 0, %s58
      %s59 = sphi 0, %s56
      %s60 = sphi 0, %s59
      %s76 = sphi 0, %s60
      %s82 = sphi 0, %s84
      %s85 = sphi 0, %s82
      %s86 = sphi 0, %s85
      %s102 = sphi 0, %s86
      %s108 = sphi 0, %s110
      %s111 = sphi 0, %s108
      %s112 = sphi 0, %s111
      %s128 = sphi 0, %s112
      %s136 = sphi 0, %s138
      %s139 = sphi 0, %s136
      %s140 = sphi 0, %s139
      %s156 = sphi 0, %s140
      %s162 = sphi 0, %s164
      %s165 = sphi 0, %s162
      %s166 = sphi 0, %s165
      %s182 = sphi 0, %s166
      %s188 = sphi 0, %s190
      %s191 = sphi 0, %s188
      %s192 = sphi 0, %s191
      %s208 = sphi 0, %s192
    $region4: #{tpu_custom_call.1} parent=1 // loop_header_branch
      %28 = sbr.rel (%p26) target = $region8
    $region5: #{tpu_custom_call.1} parent=1 // loop_body
      %s30 = ssub.s32 %s25, 1
      %s31 = ssub.s32 %s25, 2
      %s32 = sadd.s32 %s25, 1
      %s34 = sadd.s32 %s33, 1
      %p37 = scmp.eq.s32.totalorder %s25, 1
      %p38 = scmp.ne.s32.totalorder %s33, %s35
      %p39 = scmp.eq.s32.totalorder %s25, 0
      %p40 = por %p38, %p39
      %p41 = scmp.ne.s32.totalorder %s33, %s35
      %p42 = scmp.eq.s32.totalorder %s30, 1
      %p43 = por %p41, %p42
      %p44 = scmp.ne.s32.totalorder %s35, %s36
      %p45 = scmp.eq.s32.totalorder %s30, 0
      %p46 = por %p44, %p45
      %p47 = scmp.ne.s32.totalorder %s35, %s36
      %p48 = scmp.eq.s32.totalorder %s31, 1
      %p49 = por %p47, %p48
      %p51 = scmp.ne.s32.totalorder %s36, %s50
      %p52 = scmp.eq.s32.totalorder %s31, 0
      %p53 = por %p51, %p52
      %s54 = ssub.s32 %s25, %s32
      %p55 = scmp.eq.s32.totalorder %s54, 0
      %s57 = sadd.s32 %s56, 1
      %s58 = scalar_select %p55, %s56, %s57
      %p61 = pneg %p55
      %p62 = scmp.eq.s32.totalorder %s25, 1
      %p63 = por %p61, %p62
      %p64 = scmp.ne.s32.totalorder %s56, %s59
      %p65 = scmp.eq.s32.totalorder %s25, 0
      %p66 = por %p64, %p65
      %p67 = scmp.ne.s32.totalorder %s56, %s59
      %p68 = scmp.eq.s32.totalorder %s30, 1
      %p69 = por %p67, %p68
      %p70 = scmp.ne.s32.totalorder %s59, %s60
      %p71 = scmp.eq.s32.totalorder %s30, 0
      %p72 = por %p70, %p71
      %p73 = scmp.ne.s32.totalorder %s59, %s60
      %p74 = scmp.eq.s32.totalorder %s31, 1
      %p75 = por %p73, %p74
      %p77 = scmp.ne.s32.totalorder %s60, %s76
      %p78 = scmp.eq.s32.totalorder %s31, 0
      %p79 = por %p77, %p78
      %s80 = ssub.s32 %s25, %s32
      %p81 = scmp.eq.s32.totalorder %s80, 0
      %s83 = sadd.s32 %s82, 1
      %s84 = scalar_select %p81, %s82, %s83
      %p87 = pneg %p81
      %p88 = scmp.eq.s32.totalorder %s25, 1
      %p89 = por %p87, %p88
      %p90 = scmp.ne.s32.totalorder %s82, %s85
      %p91 = scmp.eq.s32.totalorder %s25, 0
      %p92 = por %p90, %p91
      %p93 = scmp.ne.s32.totalorder %s82, %s85
      %p94 = scmp.eq.s32.totalorder %s30, 1
      %p95 = por %p93, %p94
      %p96 = scmp.ne.s32.totalorder %s85, %s86
      %p97 = scmp.eq.s32.totalorder %s30, 0
      %p98 = por %p96, %p97
      %p99 = scmp.ne.s32.totalorder %s85, %s86
      %p100 = scmp.eq.s32.totalorder %s31, 1
      %p101 = por %p99, %p100
      %p103 = scmp.ne.s32.totalorder %s86, %s102
      %p104 = scmp.eq.s32.totalorder %s31, 0
      %p105 = por %p103, %p104
      %s106 = ssub.s32 %s25, %s32
      %p107 = scmp.eq.s32.totalorder %s106, 0
      %s109 = sadd.s32 %s108, 1
      %s110 = scalar_select %p107, %s108, %s109
      %p113 = pneg %p107
      %p114 = scmp.eq.s32.totalorder %s25, 1
      %p115 = por %p113, %p114
      %p116 = scmp.ne.s32.totalorder %s108, %s111
      %p117 = scmp.eq.s32.totalorder %s25, 0
      %p118 = por %p116, %p117
      %p119 = scmp.ne.s32.totalorder %s108, %s111
      %p120 = scmp.eq.s32.totalorder %s30, 1
      %p121 = por %p119, %p120
      %p122 = scmp.ne.s32.totalorder %s111, %s112
      %p123 = scmp.eq.s32.totalorder %s30, 0
      %p124 = por %p122, %p123
      %p125 = scmp.ne.s32.totalorder %s111, %s112
      %p126 = scmp.eq.s32.totalorder %s31, 1
      %p127 = por %p125, %p126
      %p129 = scmp.ne.s32.totalorder %s112, %s128
      %p130 = scmp.eq.s32.totalorder %s31, 0
      %p131 = por %p129, %p130
      %s132 = ssub.s32 %s25, %s32
      %s133 = ssub.s32 %s25, %s32
      %s134 = sor.u32 %s132, %s133
      %p135 = scmp.eq.s32.totalorder %s134, 0
      %s137 = sadd.s32 %s136, 1
      %s138 = scalar_select %p135, %s136, %s137
      %p141 = pneg %p135
      %p142 = scmp.eq.s32.totalorder %s25, 1
      %p143 = por %p141, %p142
      %p144 = scmp.ne.s32.totalorder %s136, %s139
      %p145 = scmp.eq.s32.totalorder %s25, 0
      %p146 = por %p144, %p145
      %p147 = scmp.ne.s32.totalorder %s136, %s139
      %p148 = scmp.eq.s32.totalorder %s30, 1
      %p149 = por %p147, %p148
      %p150 = scmp.ne.s32.totalorder %s139, %s140
      %p151 = scmp.eq.s32.totalorder %s30, 0
      %p152 = por %p150, %p151
      %p153 = scmp.ne.s32.totalorder %s139, %s140
      %p154 = scmp.eq.s32.totalorder %s31, 1
      %p155 = por %p153, %p154
      %p157 = scmp.ne.s32.totalorder %s140, %s156
      %p158 = scmp.eq.s32.totalorder %s31, 0
      %p159 = por %p157, %p158
      %s160 = ssub.s32 %s25, %s32
      %p161 = scmp.eq.s32.totalorder %s160, 0
      %s163 = sadd.s32 %s162, 1
      %s164 = scalar_select %p161, %s162, %s163
      %p167 = pneg %p161
      %p168 = scmp.eq.s32.totalorder %s25, 1
      %p169 = por %p167, %p168
      %p170 = scmp.ne.s32.totalorder %s162, %s165
      %p171 = scmp.eq.s32.totalorder %s25, 0
      %p172 = por %p170, %p171
      %p173 = scmp.ne.s32.totalorder %s162, %s165
      %p174 = scmp.eq.s32.totalorder %s30, 1
      %p175 = por %p173, %p174
      %p176 = scmp.ne.s32.totalorder %s165, %s166
      %p177 = scmp.eq.s32.totalorder %s30, 0
      %p178 = por %p176, %p177
      %p179 = scmp.ne.s32.totalorder %s165, %s166
      %p180 = scmp.eq.s32.totalorder %s31, 1
      %p181 = por %p179, %p180
      %p183 = scmp.ne.s32.totalorder %s166, %s182
      %p184 = scmp.eq.s32.totalorder %s31, 0
      %p185 = por %p183, %p184
      %s186 = ssub.s32 %s25, %s32
      %p187 = scmp.eq.s32.totalorder %s186, 0
      %s189 = sadd.s32 %s188, 1
      %s190 = scalar_select %p187, %s188, %s189
      %p193 = pneg %p187
      %p194 = scmp.eq.s32.totalorder %s25, 1
      %p195 = por %p193, %p194
      %p196 = scmp.ne.s32.totalorder %s188, %s191
      %p197 = scmp.eq.s32.totalorder %s25, 0
      %p198 = por %p196, %p197
      %p199 = scmp.ne.s32.totalorder %s188, %s191
      %p200 = scmp.eq.s32.totalorder %s30, 1
      %p201 = por %p199, %p200
      %p202 = scmp.ne.s32.totalorder %s191, %s192
      %p203 = scmp.eq.s32.totalorder %s30, 0
      %p204 = por %p202, %p203
      %p205 = scmp.ne.s32.totalorder %s191, %s192
      %p206 = scmp.eq.s32.totalorder %s31, 1
      %p207 = por %p205, %p206
      %p209 = scmp.ne.s32.totalorder %s192, %s208
      %p210 = scmp.eq.s32.totalorder %s31, 0
      %p211 = por %p209, %p210
      %p212 = scmp.le.s32.totalorder 1, %s25
      %p213 = scmp.lt.s32.totalorder %s25, 3
      %p214 = pnand %p212, %p213
      %p215 = pneg %p214
      // Predicated region
      $region9: #{tpu_custom_call.1} parent=5 // pred_check
        _
      $region10: #{tpu_custom_call.1} parent=5 // pred_check_branch
        %217 = sbr.rel (%p214) target = $region12
      $region11: #{tpu_custom_call.1} parent=5 // pred_region
        %s218 = ssub.s32 %s25, 1
        // Predicated region
        $region13: #{tpu_custom_call.1} parent=11 // pred_check
          %p219 = pneg %p46
        $region14: #{tpu_custom_call.1} parent=11 // pred_check_branch
          %221 = sbr.rel (%p219) target = $region16
        $region15: #{tpu_custom_call.1} parent=11 // pred_region
          %s223 = ssub.s32 256, 256
          %224 = vsyncadd [#allocation3], %s223
          %s226 = sshll.u32 [#allocation2], 4
          %s227 = int_to_ptr.vmem [resolvable:$true] %s226
          %229 = dma.hbm_to_vmem [thread:$0]  %s0, 256, %s227, [#allocation3]
        $region16: #{tpu_custom_call.1} parent=11 // pred_fallthru
          _
      $region12: #{tpu_custom_call.1} parent=5 // pred_fallthru
        _
      %p230 = scmp.lt.s32.totalorder %s25, 2
      // Predicated region
      $region17: #{tpu_custom_call.1} parent=5 // pred_check
        %p231 = pneg %p230
      $region18: #{tpu_custom_call.1} parent=5 // pred_check_branch
        %233 = sbr.rel (%p231) target = $region20
      $region19: #{tpu_custom_call.1} parent=5 // pred_region
        // Predicated region
        $region21: #{tpu_custom_call.1} parent=19 // pred_check
          %p234 = pneg %p66
        $region22: #{tpu_custom_call.1} parent=19 // pred_check_branch
          %236 = sbr.rel (%p234) target = $region24
        $region23: #{tpu_custom_call.1} parent=19 // pred_region
          %s237 = sand.u32 %s25, 1
          %s238 = scalar_lea.sflag [#allocation6], %s237
          %s239 = sand.u32 %s56, 1
          %s240 = smul.addr %s239, 8
          %s241 = scalar_lea.vmem [#allocation5], %s240
          %s242 = smul.u32 4, %s25
          %s244 = ssub.s32 128, 128
          %245 = vsyncadd %s238, %s244
          %s246 = smul.addr %s242, 32
          %s247 = scalar_lea.hbm %s1, %s246
          %s249 = sshll.u32 %s241, 4
          %s250 = int_to_ptr.vmem [resolvable:$true] %s249
          %252 = dma.hbm_to_vmem [thread:$0]  %s247, 128, %s250, %s238
        $region24: #{tpu_custom_call.1} parent=19 // pred_fallthru
          _
        // Predicated region
        $region25: #{tpu_custom_call.1} parent=19 // pred_check
          %p253 = pneg %p92
        $region26: #{tpu_custom_call.1} parent=19 // pred_check_branch
          %255 = sbr.rel (%p253) target = $region28
        $region27: #{tpu_custom_call.1} parent=19 // pred_region
          %s256 = sand.u32 %s25, 1
          %s257 = scalar_lea.sflag [#allocation6], %s256
          %s258 = sand.u32 %s82, 1
          %s259 = smul.addr %s258, 4096
          %s260 = scalar_lea.vmem [#allocation7], %s259
          %s261 = smul.u32 4, %s25
          %s263 = ssub.s32 65536, 65536
          %264 = vsyncadd %s257, %s263
          %s265 = smul.addr %s261, 64
          %s266 = scalar_lea.hbm %s2, %s265
          %s267 = sshll.u32 %s260, 4
          %s268 = int_to_ptr.vmem [resolvable:$true] %s267
          %273 = dma.hbm_to_vmem [thread:$0]  %s266, 65536, %s268, %s257, 512, 256, 16
        $region28: #{tpu_custom_call.1} parent=19 // pred_fallthru
          _
        // Predicated region
        $region29: #{tpu_custom_call.1} parent=19 // pred_check
          %p274 = pneg %p118
        $region30: #{tpu_custom_call.1} parent=19 // pred_check_branch
          %276 = sbr.rel (%p274) target = $region32
        $region31: #{tpu_custom_call.1} parent=19 // pred_region
          %s277 = sand.u32 %s25, 1
          %s278 = scalar_lea.sflag [#allocation9], %s277
          %s279 = sand.u32 %s108, 1
          %s280 = smul.addr %s279, 4
          %s281 = scalar_lea.vmem [#allocation8], %s280
          %s282 = smul.u32 4, %s25
          %s284 = ssub.s32 64, 64
          %285 = vsyncadd %s278, %s284
          %s286 = smul.addr %s282, 16
          %s287 = scalar_lea.hbm %s3, %s286
          %s289 = sshll.u32 %s281, 4
          %s290 = int_to_ptr.vmem [resolvable:$true] %s289
          %292 = dma.hbm_to_vmem [thread:$0]  %s287, 64, %s290, %s278
        $region32: #{tpu_custom_call.1} parent=19 // pred_fallthru
          _
        // Predicated region
        $region33: #{tpu_custom_call.1} parent=19 // pred_check
          %p293 = pneg %p146
        $region34: #{tpu_custom_call.1} parent=19 // pred_check_branch
          %295 = sbr.rel (%p293) target = $region36
        $region35: #{tpu_custom_call.1} parent=19 // pred_region
          %s296 = sand.u32 %s25, 1
          %s297 = scalar_lea.sflag [#allocation9], %s296
          %s298 = sand.u32 %s136, 1
          %s299 = smul.addr %s298, 1024
          %s300 = scalar_lea.vmem [#allocation10], %s299
          %s301 = smul.u32 64, %s25
          %s302 = smul.u32 2, %s25
          %s304 = ssub.s32 16384, 16384
          %305 = vsyncadd %s297, %s304
          %s306 = smul.addr %s301, 4
          %s307 = sadd.s32 %s302, %s306
          %s308 = smul.addr %s307, 128
          %s309 = scalar_lea.hbm %s4, %s308
          %s310 = sshll.u32 %s300, 4
          %s311 = int_to_ptr.vmem [resolvable:$true] %s310
          %316 = dma.hbm_to_vmem [thread:$0]  %s309, 16384, %s311, %s297, 512, 256, 16
        $region36: #{tpu_custom_call.1} parent=19 // pred_fallthru
          _
        // Predicated region
        $region37: #{tpu_custom_call.1} parent=19 // pred_check
          %p317 = pneg %p172
        $region38: #{tpu_custom_call.1} parent=19 // pred_check_branch
          %319 = sbr.rel (%p317) target = $region40
        $region39: #{tpu_custom_call.1} parent=19 // pred_region
          %s320 = sand.u32 %s162, 1
          %s321 = scalar_lea.sflag [#allocation12], %s320
          %s322 = sand.u32 %s162, 1
          %s323 = smul.addr %s322, 2
          %s324 = scalar_lea.vmem [#allocation11], %s323
          %s325 = smul.u32 2, %s25
          %s327 = ssub.s32 32, 32
          %328 = vsyncadd %s321, %s327
          %s329 = smul.addr %s325, 16
          %s330 = scalar_lea.hbm %s5, %s329
          %s332 = sshll.u32 %s324, 4
          %s333 = int_to_ptr.vmem [resolvable:$true] %s332
          %335 = dma.hbm_to_vmem [thread:$0]  %s330, 32, %s333, %s321
        $region40: #{tpu_custom_call.1} parent=19 // pred_fallthru
          _
      $region20: #{tpu_custom_call.1} parent=5 // pred_fallthru
        _
      %p336 = scmp.le.s32.totalorder 1, %s25
      %p337 = scmp.lt.s32.totalorder %s25, 3
      %p338 = pnand %p336, %p337
      %p339 = pneg %p338
      // Predicated region
      $region41: #{tpu_custom_call.1} parent=5 // pred_check
        _
      $region42: #{tpu_custom_call.1} parent=5 // pred_check_branch
        %341 = sbr.rel (%p338) target = $region44
      $region43: #{tpu_custom_call.1} parent=5 // pred_region
        %s342 = ssub.s32 %s25, 1
        // Predicated region
        $region45: #{tpu_custom_call.1} parent=43 // pred_check
          %p343 = pneg %p46
        $region46: #{tpu_custom_call.1} parent=43 // pred_check_branch
          %345 = sbr.rel (%p343) target = $region48
        $region47: #{tpu_custom_call.1} parent=43 // pred_region
          %346 = dma.done [#allocation3], 256
        $region48: #{tpu_custom_call.1} parent=43 // pred_fallthru
          _
        %s347 = sand.u32 %s30, 1
        %s348 = scalar_lea.sflag [#allocation6], %s347
        %s349 = sand.u32 %s59, 1
        %s350 = smul.addr %s349, 8
        %s351 = scalar_lea.vmem [#allocation5], %s350
        // Predicated region
        $region49: #{tpu_custom_call.1} parent=43 // pred_check
          %p352 = pneg %p72
        $region50: #{tpu_custom_call.1} parent=43 // pred_check_branch
          %354 = sbr.rel (%p352) target = $region52
        $region51: #{tpu_custom_call.1} parent=43 // pred_region
          %355 = dma.done %s348, 128
        $region52: #{tpu_custom_call.1} parent=43 // pred_fallthru
          _
        %s356 = sand.u32 %s30, 1
        %s357 = scalar_lea.sflag [#allocation6], %s356
        %s358 = sand.u32 %s85, 1
        %s359 = smul.addr %s358, 4096
        %s360 = scalar_lea.vmem [#allocation7], %s359
        // Predicated region
        $region53: #{tpu_custom_call.1} parent=43 // pred_check
          %p361 = pneg %p98
        $region54: #{tpu_custom_call.1} parent=43 // pred_check_branch
          %363 = sbr.rel (%p361) target = $region56
        $region55: #{tpu_custom_call.1} parent=43 // pred_region
          %364 = dma.done %s357, 65536
        $region56: #{tpu_custom_call.1} parent=43 // pred_fallthru
          _
        %s365 = sand.u32 %s30, 1
        %s366 = scalar_lea.sflag [#allocation9], %s365
        %s367 = sand.u32 %s111, 1
        %s368 = smul.addr %s367, 4
        %s369 = scalar_lea.vmem [#allocation8], %s368
        // Predicated region
        $region57: #{tpu_custom_call.1} parent=43 // pred_check
          %p370 = pneg %p124
        $region58: #{tpu_custom_call.1} parent=43 // pred_check_branch
          %372 = sbr.rel (%p370) target = $region60
        $region59: #{tpu_custom_call.1} parent=43 // pred_region
          %373 = dma.done %s366, 64
        $region60: #{tpu_custom_call.1} parent=43 // pred_fallthru
          _
        %s374 = sand.u32 %s30, 1
        %s375 = scalar_lea.sflag [#allocation9], %s374
        %s376 = sand.u32 %s139, 1
        %s377 = smul.addr %s376, 1024
        %s378 = scalar_lea.vmem [#allocation10], %s377
        // Predicated region
        $region61: #{tpu_custom_call.1} parent=43 // pred_check
          %p379 = pneg %p152
        $region62: #{tpu_custom_call.1} parent=43 // pred_check_branch
          %381 = sbr.rel (%p379) target = $region64
        $region63: #{tpu_custom_call.1} parent=43 // pred_region
          %382 = dma.done %s375, 16384
        $region64: #{tpu_custom_call.1} parent=43 // pred_fallthru
          _
        %s383 = sand.u32 %s165, 1
        %s384 = scalar_lea.sflag [#allocation12], %s383
        %s385 = sand.u32 %s165, 1
        %s386 = smul.addr %s385, 2
        %s387 = scalar_lea.vmem [#allocation11], %s386
        // Predicated region
        $region65: #{tpu_custom_call.1} parent=43 // pred_check
          %p388 = pneg %p178
        $region66: #{tpu_custom_call.1} parent=43 // pred_check_branch
          %390 = sbr.rel (%p388) target = $region68
        $region67: #{tpu_custom_call.1} parent=43 // pred_region
          %391 = dma.done %s384, 32
        $region68: #{tpu_custom_call.1} parent=43 // pred_fallthru
          _
        %p392 = pneg %p46
        %p393 = pneg %p43
        %s394 = sand.u32 %s30, 1
        %s395 = scalar_lea.sflag [#allocation6], %s394
        %s396 = sand.u32 %s59, 1
        %s397 = smul.addr %s396, 8
        %s398 = scalar_lea.vmem [#allocation5], %s397
        %p399 = pneg %p72
        %p400 = pneg %p69
        %s401 = sand.u32 %s30, 1
        %s402 = scalar_lea.sflag [#allocation6], %s401
        %s403 = sand.u32 %s85, 1
        %s404 = smul.addr %s403, 4096
        %s405 = scalar_lea.vmem [#allocation7], %s404
        %p406 = pneg %p98
        %p407 = pneg %p95
        %s408 = sand.u32 %s30, 1
        %s409 = scalar_lea.sflag [#allocation9], %s408
        %s410 = sand.u32 %s111, 1
        %s411 = smul.addr %s410, 4
        %s412 = scalar_lea.vmem [#allocation8], %s411
        %p413 = pneg %p124
        %p414 = pneg %p121
        %s415 = sand.u32 %s30, 1
        %s416 = scalar_lea.sflag [#allocation9], %s415
        %s417 = sand.u32 %s139, 1
        %s418 = smul.addr %s417, 1024
        %s419 = scalar_lea.vmem [#allocation10], %s418
        %p420 = pneg %p152
        %p421 = pneg %p149
        %s422 = sand.u32 %s165, 1
        %s423 = scalar_lea.sflag [#allocation12], %s422
        %s424 = sand.u32 %s165, 1
        %s425 = smul.addr %s424, 2
        %s426 = scalar_lea.vmem [#allocation11], %s425
        %p427 = pneg %p178
        %p428 = pneg %p175
        %p429 = pneg %p204
        %p430 = pneg %p201
        %s431 = sand.u32 %s191, 1
        %s432 = scalar_lea.sflag [#allocation4], %s431
        %s433 = sand.u32 %s191, 1
        %s434 = smul.addr %s433, 4
        %s435 = scalar_lea.vmem [#allocation13], %s434
        %s436 = smul.u32 4, %s30
        %s437 = smul.u32 4, %s30
        %s438 = smul.u32 4, %s30
        %s439 = smul.u32 64, %s30
        %s440 = smul.u32 2, %s30
        %s441 = smul.u32 2, %s30
        %s442 = smul.u32 2, %s30
        %v443 = vld [vmem:[#allocation2] sm:$0xff]
        %v444 = vld [vmem:[#allocation2 + $0x8] sm:$0xff]
        %v445 = vld [vmem:[%s360] sm:$0xff]
        %v446 = vld [vmem:[%s360 + $0x8] sm:$0xff]
        %v447 = vld [vmem:[%s360 + $0x10] sm:$0xff]
        %v448 = vld [vmem:[%s360 + $0x18] sm:$0xff]
        %v449 = vld [vmem:[%s360 + $0x20] sm:$0xff]
        %v450 = vld [vmem:[%s360 + $0x28] sm:$0xff]
        %v451 = vld [vmem:[%s360 + $0x30] sm:$0xff]
        %v452 = vld [vmem:[%s360 + $0x38] sm:$0xff]
        %v453 = vld [vmem:[%s360 + $0x40] sm:$0xff]
        %v454 = vld [vmem:[%s360 + $0x48] sm:$0xff]
        %v455 = vld [vmem:[%s360 + $0x50] sm:$0xff]
        %v456 = vld [vmem:[%s360 + $0x58] sm:$0xff]
        %v457 = vld [vmem:[%s360 + $0x60] sm:$0xff]
        %v458 = vld [vmem:[%s360 + $0x68] sm:$0xff]
        %v459 = vld [vmem:[%s360 + $0x70] sm:$0xff]
        %v460 = vld [vmem:[%s360 + $0x78] sm:$0xff]
        %v461 = vld [vmem:[%s360 + $0x80] sm:$0xff]
        %v462 = vld [vmem:[%s360 + $0x88] sm:$0xff]
        %v463 = vld [vmem:[%s360 + $0x90] sm:$0xff]
        %v464 = vld [vmem:[%s360 + $0x98] sm:$0xff]
        %v465 = vld [vmem:[%s360 + $0xa0] sm:$0xff]
        %v466 = vld [vmem:[%s360 + $0xa8] sm:$0xff]
        %v467 = vld [vmem:[%s360 + $0xb0] sm:$0xff]
        %v468 = vld [vmem:[%s360 + $0xb8] sm:$0xff]
        %v469 = vld [vmem:[%s360 + $0xc0] sm:$0xff]
        %v470 = vld [vmem:[%s360 + $0xc8] sm:$0xff]
        %v471 = vld [vmem:[%s360 + $0xd0] sm:$0xff]
        %v472 = vld [vmem:[%s360 + $0xd8] sm:$0xff]
        %v473 = vld [vmem:[%s360 + $0xe0] sm:$0xff]
        %v474 = vld [vmem:[%s360 + $0xe8] sm:$0xff]
        %v475 = vld [vmem:[%s360 + $0xf0] sm:$0xff]
        %v476 = vld [vmem:[%s360 + $0xf8] sm:$0xff]
        %v477 = vld [vmem:[%s360 + $0x100] sm:$0xff]
        %v478 = vld [vmem:[%s360 + $0x108] sm:$0xff]
        %v479 = vld [vmem:[%s360 + $0x110] sm:$0xff]
        %v480 = vld [vmem:[%s360 + $0x118] sm:$0xff]
        %v481 = vld [vmem:[%s360 + $0x120] sm:$0xff]
        %v482 = vld [vmem:[%s360 + $0x128] sm:$0xff]
        %v483 = vld [vmem:[%s360 + $0x130] sm:$0xff]
        %v484 = vld [vmem:[%s360 + $0x138] sm:$0xff]
        %v485 = vld [vmem:[%s360 + $0x140] sm:$0xff]
        %v486 = vld [vmem:[%s360 + $0x148] sm:$0xff]
        %v487 = vld [vmem:[%s360 + $0x150] sm:$0xff]
        %v488 = vld [vmem:[%s360 + $0x158] sm:$0xff]
        %v489 = vld [vmem:[%s360 + $0x160] sm:$0xff]
        %v490 = vld [vmem:[%s360 + $0x168] sm:$0xff]
        %v491 = vld [vmem:[%s360 + $0x170] sm:$0xff]
        %v492 = vld [vmem:[%s360 + $0x178] sm:$0xff]
        %v493 = vld [vmem:[%s360 + $0x180] sm:$0xff]
        %v494 = vld [vmem:[%s360 + $0x188] sm:$0xff]
        %v495 = vld [vmem:[%s360 + $0x190] sm:$0xff]
        %v496 = vld [vmem:[%s360 + $0x198] sm:$0xff]
        %v497 = vld [vmem:[%s360 + $0x1a0] sm:$0xff]
        %v498 = vld [vmem:[%s360 + $0x1a8] sm:$0xff]
        %v499 = vld [vmem:[%s360 + $0x1b0] sm:$0xff]
        %v500 = vld [vmem:[%s360 + $0x1b8] sm:$0xff]
        %v501 = vld [vmem:[%s360 + $0x1c0] sm:$0xff]
        %v502 = vld [vmem:[%s360 + $0x1c8] sm:$0xff]
        %v503 = vld [vmem:[%s360 + $0x1d0] sm:$0xff]
        %v504 = vld [vmem:[%s360 + $0x1d8] sm:$0xff]
        %v505 = vld [vmem:[%s360 + $0x1e0] sm:$0xff]
        %v506 = vld [vmem:[%s360 + $0x1e8] sm:$0xff]
        %v507 = vld [vmem:[%s360 + $0x1f0] sm:$0xff]
        %v508 = vld [vmem:[%s360 + $0x1f8] sm:$0xff]
        %v509 = vld [vmem:[%s360 + $0x200] sm:$0xff]
        %v510 = vld [vmem:[%s360 + $0x208] sm:$0xff]
        %v511 = vld [vmem:[%s360 + $0x210] sm:$0xff]
        %v512 = vld [vmem:[%s360 + $0x218] sm:$0xff]
        %v513 = vld [vmem:[%s360 + $0x220] sm:$0xff]
        %v514 = vld [vmem:[%s360 + $0x228] sm:$0xff]
        %v515 = vld [vmem:[%s360 + $0x230] sm:$0xff]
        %v516 = vld [vmem:[%s360 + $0x238] sm:$0xff]
        %v517 = vld [vmem:[%s360 + $0x240] sm:$0xff]
        %v518 = vld [vmem:[%s360 + $0x248] sm:$0xff]
        %v519 = vld [vmem:[%s360 + $0x250] sm:$0xff]
        %v520 = vld [vmem:[%s360 + $0x258] sm:$0xff]
        %v521 = vld [vmem:[%s360 + $0x260] sm:$0xff]
        %v522 = vld [vmem:[%s360 + $0x268] sm:$0xff]
        %v523 = vld [vmem:[%s360 + $0x270] sm:$0xff]
        %v524 = vld [vmem:[%s360 + $0x278] sm:$0xff]
        %v525 = vld [vmem:[%s360 + $0x280] sm:$0xff]
        %v526 = vld [vmem:[%s360 + $0x288] sm:$0xff]
        %v527 = vld [vmem:[%s360 + $0x290] sm:$0xff]
        %v528 = vld [vmem:[%s360 + $0x298] sm:$0xff]
        %v529 = vld [vmem:[%s360 + $0x2a0] sm:$0xff]
        %v530 = vld [vmem:[%s360 + $0x2a8] sm:$0xff]
        %v531 = vld [vmem:[%s360 + $0x2b0] sm:$0xff]
        %v532 = vld [vmem:[%s360 + $0x2b8] sm:$0xff]
        %v533 = vld [vmem:[%s360 + $0x2c0] sm:$0xff]
        %v534 = vld [vmem:[%s360 + $0x2c8] sm:$0xff]
        %v535 = vld [vmem:[%s360 + $0x2d0] sm:$0xff]
        %v536 = vld [vmem:[%s360 + $0x2d8] sm:$0xff]
        %v537 = vld [vmem:[%s360 + $0x2e0] sm:$0xff]
        %v538 = vld [vmem:[%s360 + $0x2e8] sm:$0xff]
        %v539 = vld [vmem:[%s360 + $0x2f0] sm:$0xff]
        %v540 = vld [vmem:[%s360 + $0x2f8] sm:$0xff]
        %v541 = vld [vmem:[%s360 + $0x300] sm:$0xff]
        %v542 = vld [vmem:[%s360 + $0x308] sm:$0xff]
        %v543 = vld [vmem:[%s360 + $0x310] sm:$0xff]
        %v544 = vld [vmem:[%s360 + $0x318] sm:$0xff]
        %v545 = vld [vmem:[%s360 + $0x320] sm:$0xff]
        %v546 = vld [vmem:[%s360 + $0x328] sm:$0xff]
        %v547 = vld [vmem:[%s360 + $0x330] sm:$0xff]
        %v548 = vld [vmem:[%s360 + $0x338] sm:$0xff]
        %v549 = vld [vmem:[%s360 + $0x340] sm:$0xff]
        %v550 = vld [vmem:[%s360 + $0x348] sm:$0xff]
        %v551 = vld [vmem:[%s360 + $0x350] sm:$0xff]
        %v552 = vld [vmem:[%s360 + $0x358] sm:$0xff]
        %v553 = vld [vmem:[%s360 + $0x360] sm:$0xff]
        %v554 = vld [vmem:[%s360 + $0x368] sm:$0xff]
        %v555 = vld [vmem:[%s360 + $0x370] sm:$0xff]
        %v556 = vld [vmem:[%s360 + $0x378] sm:$0xff]
        %v557 = vld [vmem:[%s360 + $0x380] sm:$0xff]
        %v558 = vld [vmem:[%s360 + $0x388] sm:$0xff]
        %v559 = vld [vmem:[%s360 + $0x390] sm:$0xff]
        %v560 = vld [vmem:[%s360 + $0x398] sm:$0xff]
        %v561 = vld [vmem:[%s360 + $0x3a0] sm:$0xff]
        %v562 = vld [vmem:[%s360 + $0x3a8] sm:$0xff]
        %v563 = vld [vmem:[%s360 + $0x3b0] sm:$0xff]
        %v564 = vld [vmem:[%s360 + $0x3b8] sm:$0xff]
        %v565 = vld [vmem:[%s360 + $0x3c0] sm:$0xff]
        %v566 = vld [vmem:[%s360 + $0x3c8] sm:$0xff]
        %v567 = vld [vmem:[%s360 + $0x3d0] sm:$0xff]
        %v568 = vld [vmem:[%s360 + $0x3d8] sm:$0xff]
        %v569 = vld [vmem:[%s360 + $0x3e0] sm:$0xff]
        %v570 = vld [vmem:[%s360 + $0x3e8] sm:$0xff]
        %v571 = vld [vmem:[%s360 + $0x3f0] sm:$0xff]
        %v572 = vld [vmem:[%s360 + $0x3f8] sm:$0xff]
        %v573 = vld [vmem:[%s360 + $0x400] sm:$0xff]
        %v574 = vld [vmem:[%s360 + $0x408] sm:$0xff]
        %v575 = vld [vmem:[%s360 + $0x410] sm:$0xff]
        %v576 = vld [vmem:[%s360 + $0x418] sm:$0xff]
        %v577 = vld [vmem:[%s360 + $0x420] sm:$0xff]
        %v578 = vld [vmem:[%s360 + $0x428] sm:$0xff]
        %v579 = vld [vmem:[%s360 + $0x430] sm:$0xff]
        %v580 = vld [vmem:[%s360 + $0x438] sm:$0xff]
        %v581 = vld [vmem:[%s360 + $0x440] sm:$0xff]
        %v582 = vld [vmem:[%s360 + $0x448] sm:$0xff]
        %v583 = vld [vmem:[%s360 + $0x450] sm:$0xff]
        %v584 = vld [vmem:[%s360 + $0x458] sm:$0xff]
        %v585 = vld [vmem:[%s360 + $0x460] sm:$0xff]
        %v586 = vld [vmem:[%s360 + $0x468] sm:$0xff]
        %v587 = vld [vmem:[%s360 + $0x470] sm:$0xff]
        %v588 = vld [vmem:[%s360 + $0x478] sm:$0xff]
        %v589 = vld [vmem:[%s360 + $0x480] sm:$0xff]
        %v590 = vld [vmem:[%s360 + $0x488] sm:$0xff]
        %v591 = vld [vmem:[%s360 + $0x490] sm:$0xff]
        %v592 = vld [vmem:[%s360 + $0x498] sm:$0xff]
        %v593 = vld [vmem:[%s360 + $0x4a0] sm:$0xff]
        %v594 = vld [vmem:[%s360 + $0x4a8] sm:$0xff]
        %v595 = vld [vmem:[%s360 + $0x4b0] sm:$0xff]
        %v596 = vld [vmem:[%s360 + $0x4b8] sm:$0xff]
        %v597 = vld [vmem:[%s360 + $0x4c0] sm:$0xff]
        %v598 = vld [vmem:[%s360 + $0x4c8] sm:$0xff]
        %v599 = vld [vmem:[%s360 + $0x4d0] sm:$0xff]
        %v600 = vld [vmem:[%s360 + $0x4d8] sm:$0xff]
        %v601 = vld [vmem:[%s360 + $0x4e0] sm:$0xff]
        %v602 = vld [vmem:[%s360 + $0x4e8] sm:$0xff]
        %v603 = vld [vmem:[%s360 + $0x4f0] sm:$0xff]
        %v604 = vld [vmem:[%s360 + $0x4f8] sm:$0xff]
        %v605 = vld [vmem:[%s360 + $0x500] sm:$0xff]
        %v606 = vld [vmem:[%s360 + $0x508] sm:$0xff]
        %v607 = vld [vmem:[%s360 + $0x510] sm:$0xff]
        %v608 = vld [vmem:[%s360 + $0x518] sm:$0xff]
        %v609 = vld [vmem:[%s360 + $0x520] sm:$0xff]
        %v610 = vld [vmem:[%s360 + $0x528] sm:$0xff]
        %v611 = vld [vmem:[%s360 + $0x530] sm:$0xff]
        %v612 = vld [vmem:[%s360 + $0x538] sm:$0xff]
        %v613 = vld [vmem:[%s360 + $0x540] sm:$0xff]
        %v614 = vld [vmem:[%s360 + $0x548] sm:$0xff]
        %v615 = vld [vmem:[%s360 + $0x550] sm:$0xff]
        %v616 = vld [vmem:[%s360 + $0x558] sm:$0xff]
        %v617 = vld [vmem:[%s360 + $0x560] sm:$0xff]
        %v618 = vld [vmem:[%s360 + $0x568] sm:$0xff]
        %v619 = vld [vmem:[%s360 + $0x570] sm:$0xff]
        %v620 = vld [vmem:[%s360 + $0x578] sm:$0xff]
        %v621 = vld [vmem:[%s360 + $0x580] sm:$0xff]
        %v622 = vld [vmem:[%s360 + $0x588] sm:$0xff]
        %v623 = vld [vmem:[%s360 + $0x590] sm:$0xff]
        %v624 = vld [vmem:[%s360 + $0x598] sm:$0xff]
        %v625 = vld [vmem:[%s360 + $0x5a0] sm:$0xff]
        %v626 = vld [vmem:[%s360 + $0x5a8] sm:$0xff]
        %v627 = vld [vmem:[%s360 + $0x5b0] sm:$0xff]
        %v628 = vld [vmem:[%s360 + $0x5b8] sm:$0xff]
        %v629 = vld [vmem:[%s360 + $0x5c0] sm:$0xff]
        %v630 = vld [vmem:[%s360 + $0x5c8] sm:$0xff]
        %v631 = vld [vmem:[%s360 + $0x5d0] sm:$0xff]
        %v632 = vld [vmem:[%s360 + $0x5d8] sm:$0xff]
        %v633 = vld [vmem:[%s360 + $0x5e0] sm:$0xff]
        %v634 = vld [vmem:[%s360 + $0x5e8] sm:$0xff]
        %v635 = vld [vmem:[%s360 + $0x5f0] sm:$0xff]
        %v636 = vld [vmem:[%s360 + $0x5f8] sm:$0xff]
        %v637 = vld [vmem:[%s360 + $0x600] sm:$0xff]
        %v638 = vld [vmem:[%s360 + $0x608] sm:$0xff]
        %v639 = vld [vmem:[%s360 + $0x610] sm:$0xff]
        %v640 = vld [vmem:[%s360 + $0x618] sm:$0xff]
        %v641 = vld [vmem:[%s360 + $0x620] sm:$0xff]
        %v642 = vld [vmem:[%s360 + $0x628] sm:$0xff]
        %v643 = vld [vmem:[%s360 + $0x630] sm:$0xff]
        %v644 = vld [vmem:[%s360 + $0x638] sm:$0xff]
        %v645 = vld [vmem:[%s360 + $0x640] sm:$0xff]
        %v646 = vld [vmem:[%s360 + $0x648] sm:$0xff]
        %v647 = vld [vmem:[%s360 + $0x650] sm:$0xff]
        %v648 = vld [vmem:[%s360 + $0x658] sm:$0xff]
        %v649 = vld [vmem:[%s360 + $0x660] sm:$0xff]
        %v650 = vld [vmem:[%s360 + $0x668] sm:$0xff]
        %v651 = vld [vmem:[%s360 + $0x670] sm:$0xff]
        %v652 = vld [vmem:[%s360 + $0x678] sm:$0xff]
        %v653 = vld [vmem:[%s360 + $0x680] sm:$0xff]
        %v654 = vld [vmem:[%s360 + $0x688] sm:$0xff]
        %v655 = vld [vmem:[%s360 + $0x690] sm:$0xff]
        %v656 = vld [vmem:[%s360 + $0x698] sm:$0xff]
        %v657 = vld [vmem:[%s360 + $0x6a0] sm:$0xff]
        %v658 = vld [vmem:[%s360 + $0x6a8] sm:$0xff]
        %v659 = vld [vmem:[%s360 + $0x6b0] sm:$0xff]
        %v660 = vld [vmem:[%s360 + $0x6b8] sm:$0xff]
        %v661 = vld [vmem:[%s360 + $0x6c0] sm:$0xff]
        %v662 = vld [vmem:[%s360 + $0x6c8] sm:$0xff]
        %v663 = vld [vmem:[%s360 + $0x6d0] sm:$0xff]
        %v664 = vld [vmem:[%s360 + $0x6d8] sm:$0xff]
        %v665 = vld [vmem:[%s360 + $0x6e0] sm:$0xff]
        %v666 = vld [vmem:[%s360 + $0x6e8] sm:$0xff]
        %v667 = vld [vmem:[%s360 + $0x6f0] sm:$0xff]
        %v668 = vld [vmem:[%s360 + $0x6f8] sm:$0xff]
        %v669 = vld [vmem:[%s360 + $0x700] sm:$0xff]
        %v670 = vld [vmem:[%s360 + $0x708] sm:$0xff]
        %v671 = vld [vmem:[%s360 + $0x710] sm:$0xff]
        %v672 = vld [vmem:[%s360 + $0x718] sm:$0xff]
        %v673 = vld [vmem:[%s360 + $0x720] sm:$0xff]
        %v674 = vld [vmem:[%s360 + $0x728] sm:$0xff]
        %v675 = vld [vmem:[%s360 + $0x730] sm:$0xff]
        %v676 = vld [vmem:[%s360 + $0x738] sm:$0xff]
        %v677 = vld [vmem:[%s360 + $0x740] sm:$0xff]
        %v678 = vld [vmem:[%s360 + $0x748] sm:$0xff]
        %v679 = vld [vmem:[%s360 + $0x750] sm:$0xff]
        %v680 = vld [vmem:[%s360 + $0x758] sm:$0xff]
        %v681 = vld [vmem:[%s360 + $0x760] sm:$0xff]
        %v682 = vld [vmem:[%s360 + $0x768] sm:$0xff]
        %v683 = vld [vmem:[%s360 + $0x770] sm:$0xff]
        %v684 = vld [vmem:[%s360 + $0x778] sm:$0xff]
        %v685 = vld [vmem:[%s360 + $0x780] sm:$0xff]
        %v686 = vld [vmem:[%s360 + $0x788] sm:$0xff]
        %v687 = vld [vmem:[%s360 + $0x790] sm:$0xff]
        %v688 = vld [vmem:[%s360 + $0x798] sm:$0xff]
        %v689 = vld [vmem:[%s360 + $0x7a0] sm:$0xff]
        %v690 = vld [vmem:[%s360 + $0x7a8] sm:$0xff]
        %v691 = vld [vmem:[%s360 + $0x7b0] sm:$0xff]
        %v692 = vld [vmem:[%s360 + $0x7b8] sm:$0xff]
        %v693 = vld [vmem:[%s360 + $0x7c0] sm:$0xff]
        %v694 = vld [vmem:[%s360 + $0x7c8] sm:$0xff]
        %v695 = vld [vmem:[%s360 + $0x7d0] sm:$0xff]
        %v696 = vld [vmem:[%s360 + $0x7d8] sm:$0xff]
        %v697 = vld [vmem:[%s360 + $0x7e0] sm:$0xff]
        %v698 = vld [vmem:[%s360 + $0x7e8] sm:$0xff]
        %v699 = vld [vmem:[%s360 + $0x7f0] sm:$0xff]
        %v700 = vld [vmem:[%s360 + $0x7f8] sm:$0xff]
        %v701 = vld [vmem:[%s360 + $0x800] sm:$0xff]
        %v702 = vld [vmem:[%s360 + $0x808] sm:$0xff]
        %v703 = vld [vmem:[%s360 + $0x810] sm:$0xff]
        %v704 = vld [vmem:[%s360 + $0x818] sm:$0xff]
        %v705 = vld [vmem:[%s360 + $0x820] sm:$0xff]
        %v706 = vld [vmem:[%s360 + $0x828] sm:$0xff]
        %v707 = vld [vmem:[%s360 + $0x830] sm:$0xff]
        %v708 = vld [vmem:[%s360 + $0x838] sm:$0xff]
        %v709 = vld [vmem:[%s360 + $0x840] sm:$0xff]
        %v710 = vld [vmem:[%s360 + $0x848] sm:$0xff]
        %v711 = vld [vmem:[%s360 + $0x850] sm:$0xff]
        %v712 = vld [vmem:[%s360 + $0x858] sm:$0xff]
        %v713 = vld [vmem:[%s360 + $0x860] sm:$0xff]
        %v714 = vld [vmem:[%s360 + $0x868] sm:$0xff]
        %v715 = vld [vmem:[%s360 + $0x870] sm:$0xff]
        %v716 = vld [vmem:[%s360 + $0x878] sm:$0xff]
        %v717 = vld [vmem:[%s360 + $0x880] sm:$0xff]
        %v718 = vld [vmem:[%s360 + $0x888] sm:$0xff]
        %v719 = vld [vmem:[%s360 + $0x890] sm:$0xff]
        %v720 = vld [vmem:[%s360 + $0x898] sm:$0xff]
        %v721 = vld [vmem:[%s360 + $0x8a0] sm:$0xff]
        %v722 = vld [vmem:[%s360 + $0x8a8] sm:$0xff]
        %v723 = vld [vmem:[%s360 + $0x8b0] sm:$0xff]
        %v724 = vld [vmem:[%s360 + $0x8b8] sm:$0xff]
        %v725 = vld [vmem:[%s360 + $0x8c0] sm:$0xff]
        %v726 = vld [vmem:[%s360 + $0x8c8] sm:$0xff]
        %v727 = vld [vmem:[%s360 + $0x8d0] sm:$0xff]
        %v728 = vld [vmem:[%s360 + $0x8d8] sm:$0xff]
        %v729 = vld [vmem:[%s360 + $0x8e0] sm:$0xff]
        %v730 = vld [vmem:[%s360 + $0x8e8] sm:$0xff]
        %v731 = vld [vmem:[%s360 + $0x8f0] sm:$0xff]
        %v732 = vld [vmem:[%s360 + $0x8f8] sm:$0xff]
        %v733 = vld [vmem:[%s360 + $0x900] sm:$0xff]
        %v734 = vld [vmem:[%s360 + $0x908] sm:$0xff]
        %v735 = vld [vmem:[%s360 + $0x910] sm:$0xff]
        %v736 = vld [vmem:[%s360 + $0x918] sm:$0xff]
        %v737 = vld [vmem:[%s360 + $0x920] sm:$0xff]
        %v738 = vld [vmem:[%s360 + $0x928] sm:$0xff]
        %v739 = vld [vmem:[%s360 + $0x930] sm:$0xff]
        %v740 = vld [vmem:[%s360 + $0x938] sm:$0xff]
        %v741 = vld [vmem:[%s360 + $0x940] sm:$0xff]
        %v742 = vld [vmem:[%s360 + $0x948] sm:$0xff]
        %v743 = vld [vmem:[%s360 + $0x950] sm:$0xff]
        %v744 = vld [vmem:[%s360 + $0x958] sm:$0xff]
        %v745 = vld [vmem:[%s360 + $0x960] sm:$0xff]
        %v746 = vld [vmem:[%s360 + $0x968] sm:$0xff]
        %v747 = vld [vmem:[%s360 + $0x970] sm:$0xff]
        %v748 = vld [vmem:[%s360 + $0x978] sm:$0xff]
        %v749 = vld [vmem:[%s360 + $0x980] sm:$0xff]
        %v750 = vld [vmem:[%s360 + $0x988] sm:$0xff]
        %v751 = vld [vmem:[%s360 + $0x990] sm:$0xff]
        %v752 = vld [vmem:[%s360 + $0x998] sm:$0xff]
        %v753 = vld [vmem:[%s360 + $0x9a0] sm:$0xff]
        %v754 = vld [vmem:[%s360 + $0x9a8] sm:$0xff]
        %v755 = vld [vmem:[%s360 + $0x9b0] sm:$0xff]
        %v756 = vld [vmem:[%s360 + $0x9b8] sm:$0xff]
        %v757 = vld [vmem:[%s360 + $0x9c0] sm:$0xff]
        %v758 = vld [vmem:[%s360 + $0x9c8] sm:$0xff]
        %v759 = vld [vmem:[%s360 + $0x9d0] sm:$0xff]
        %v760 = vld [vmem:[%s360 + $0x9d8] sm:$0xff]
        %v761 = vld [vmem:[%s360 + $0x9e0] sm:$0xff]
        %v762 = vld [vmem:[%s360 + $0x9e8] sm:$0xff]
        %v763 = vld [vmem:[%s360 + $0x9f0] sm:$0xff]
        %v764 = vld [vmem:[%s360 + $0x9f8] sm:$0xff]
        %v765 = vld [vmem:[%s360 + $0xa00] sm:$0xff]
        %v766 = vld [vmem:[%s360 + $0xa08] sm:$0xff]
        %v767 = vld [vmem:[%s360 + $0xa10] sm:$0xff]
        %v768 = vld [vmem:[%s360 + $0xa18] sm:$0xff]
        %v769 = vld [vmem:[%s360 + $0xa20] sm:$0xff]
        %v770 = vld [vmem:[%s360 + $0xa28] sm:$0xff]
        %v771 = vld [vmem:[%s360 + $0xa30] sm:$0xff]
        %v772 = vld [vmem:[%s360 + $0xa38] sm:$0xff]
        %v773 = vld [vmem:[%s360 + $0xa40] sm:$0xff]
        %v774 = vld [vmem:[%s360 + $0xa48] sm:$0xff]
        %v775 = vld [vmem:[%s360 + $0xa50] sm:$0xff]
        %v776 = vld [vmem:[%s360 + $0xa58] sm:$0xff]
        %v777 = vld [vmem:[%s360 + $0xa60] sm:$0xff]
        %v778 = vld [vmem:[%s360 + $0xa68] sm:$0xff]
        %v779 = vld [vmem:[%s360 + $0xa70] sm:$0xff]
        %v780 = vld [vmem:[%s360 + $0xa78] sm:$0xff]
        %v781 = vld [vmem:[%s360 + $0xa80] sm:$0xff]
        %v782 = vld [vmem:[%s360 + $0xa88] sm:$0xff]
        %v783 = vld [vmem:[%s360 + $0xa90] sm:$0xff]
        %v784 = vld [vmem:[%s360 + $0xa98] sm:$0xff]
        %v785 = vld [vmem:[%s360 + $0xaa0] sm:$0xff]
        %v786 = vld [vmem:[%s360 + $0xaa8] sm:$0xff]
        %v787 = vld [vmem:[%s360 + $0xab0] sm:$0xff]
        %v788 = vld [vmem:[%s360 + $0xab8] sm:$0xff]
        %v789 = vld [vmem:[%s360 + $0xac0] sm:$0xff]
        %v790 = vld [vmem:[%s360 + $0xac8] sm:$0xff]
        %v791 = vld [vmem:[%s360 + $0xad0] sm:$0xff]
        %v792 = vld [vmem:[%s360 + $0xad8] sm:$0xff]
        %v793 = vld [vmem:[%s360 + $0xae0] sm:$0xff]
        %v794 = vld [vmem:[%s360 + $0xae8] sm:$0xff]
        %v795 = vld [vmem:[%s360 + $0xaf0] sm:$0xff]
        %v796 = vld [vmem:[%s360 + $0xaf8] sm:$0xff]
        %v797 = vld [vmem:[%s360 + $0xb00] sm:$0xff]
        %v798 = vld [vmem:[%s360 + $0xb08] sm:$0xff]
        %v799 = vld [vmem:[%s360 + $0xb10] sm:$0xff]
        %v800 = vld [vmem:[%s360 + $0xb18] sm:$0xff]
        %v801 = vld [vmem:[%s360 + $0xb20] sm:$0xff]
        %v802 = vld [vmem:[%s360 + $0xb28] sm:$0xff]
        %v803 = vld [vmem:[%s360 + $0xb30] sm:$0xff]
        %v804 = vld [vmem:[%s360 + $0xb38] sm:$0xff]
        %v805 = vld [vmem:[%s360 + $0xb40] sm:$0xff]
        %v806 = vld [vmem:[%s360 + $0xb48] sm:$0xff]
        %v807 = vld [vmem:[%s360 + $0xb50] sm:$0xff]
        %v808 = vld [vmem:[%s360 + $0xb58] sm:$0xff]
        %v809 = vld [vmem:[%s360 + $0xb60] sm:$0xff]
        %v810 = vld [vmem:[%s360 + $0xb68] sm:$0xff]
        %v811 = vld [vmem:[%s360 + $0xb70] sm:$0xff]
        %v812 = vld [vmem:[%s360 + $0xb78] sm:$0xff]
        %v813 = vld [vmem:[%s360 + $0xb80] sm:$0xff]
        %v814 = vld [vmem:[%s360 + $0xb88] sm:$0xff]
        %v815 = vld [vmem:[%s360 + $0xb90] sm:$0xff]
        %v816 = vld [vmem:[%s360 + $0xb98] sm:$0xff]
        %v817 = vld [vmem:[%s360 + $0xba0] sm:$0xff]
        %v818 = vld [vmem:[%s360 + $0xba8] sm:$0xff]
        %v819 = vld [vmem:[%s360 + $0xbb0] sm:$0xff]
        %v820 = vld [vmem:[%s360 + $0xbb8] sm:$0xff]
        %v821 = vld [vmem:[%s360 + $0xbc0] sm:$0xff]
        %v822 = vld [vmem:[%s360 + $0xbc8] sm:$0xff]
        %v823 = vld [vmem:[%s360 + $0xbd0] sm:$0xff]
        %v824 = vld [vmem:[%s360 + $0xbd8] sm:$0xff]
        %v825 = vld [vmem:[%s360 + $0xbe0] sm:$0xff]
        %v826 = vld [vmem:[%s360 + $0xbe8] sm:$0xff]
        %v827 = vld [vmem:[%s360 + $0xbf0] sm:$0xff]
        %v828 = vld [vmem:[%s360 + $0xbf8] sm:$0xff]
        %v829 = vld [vmem:[%s360 + $0xc00] sm:$0xff]
        %v830 = vld [vmem:[%s360 + $0xc08] sm:$0xff]
        %v831 = vld [vmem:[%s360 + $0xc10] sm:$0xff]
        %v832 = vld [vmem:[%s360 + $0xc18] sm:$0xff]
        %v833 = vld [vmem:[%s360 + $0xc20] sm:$0xff]
        %v834 = vld [vmem:[%s360 + $0xc28] sm:$0xff]
        %v835 = vld [vmem:[%s360 + $0xc30] sm:$0xff]
        %v836 = vld [vmem:[%s360 + $0xc38] sm:$0xff]
        %v837 = vld [vmem:[%s360 + $0xc40] sm:$0xff]
        %v838 = vld [vmem:[%s360 + $0xc48] sm:$0xff]
        %v839 = vld [vmem:[%s360 + $0xc50] sm:$0xff]
        %v840 = vld [vmem:[%s360 + $0xc58] sm:$0xff]
        %v841 = vld [vmem:[%s360 + $0xc60] sm:$0xff]
        %v842 = vld [vmem:[%s360 + $0xc68] sm:$0xff]
        %v843 = vld [vmem:[%s360 + $0xc70] sm:$0xff]
        %v844 = vld [vmem:[%s360 + $0xc78] sm:$0xff]
        %v845 = vld [vmem:[%s360 + $0xc80] sm:$0xff]
        %v846 = vld [vmem:[%s360 + $0xc88] sm:$0xff]
        %v847 = vld [vmem:[%s360 + $0xc90] sm:$0xff]
        %v848 = vld [vmem:[%s360 + $0xc98] sm:$0xff]
        %v849 = vld [vmem:[%s360 + $0xca0] sm:$0xff]
        %v850 = vld [vmem:[%s360 + $0xca8] sm:$0xff]
        %v851 = vld [vmem:[%s360 + $0xcb0] sm:$0xff]
        %v852 = vld [vmem:[%s360 + $0xcb8] sm:$0xff]
        %v853 = vld [vmem:[%s360 + $0xcc0] sm:$0xff]
        %v854 = vld [vmem:[%s360 + $0xcc8] sm:$0xff]
        %v855 = vld [vmem:[%s360 + $0xcd0] sm:$0xff]
        %v856 = vld [vmem:[%s360 + $0xcd8] sm:$0xff]
        %v857 = vld [vmem:[%s360 + $0xce0] sm:$0xff]
        %v858 = vld [vmem:[%s360 + $0xce8] sm:$0xff]
        %v859 = vld [vmem:[%s360 + $0xcf0] sm:$0xff]
        %v860 = vld [vmem:[%s360 + $0xcf8] sm:$0xff]
        %v861 = vld [vmem:[%s360 + $0xd00] sm:$0xff]
        %v862 = vld [vmem:[%s360 + $0xd08] sm:$0xff]
        %v863 = vld [vmem:[%s360 + $0xd10] sm:$0xff]
        %v864 = vld [vmem:[%s360 + $0xd18] sm:$0xff]
        %v865 = vld [vmem:[%s360 + $0xd20] sm:$0xff]
        %v866 = vld [vmem:[%s360 + $0xd28] sm:$0xff]
        %v867 = vld [vmem:[%s360 + $0xd30] sm:$0xff]
        %v868 = vld [vmem:[%s360 + $0xd38] sm:$0xff]
        %v869 = vld [vmem:[%s360 + $0xd40] sm:$0xff]
        %v870 = vld [vmem:[%s360 + $0xd48] sm:$0xff]
        %v871 = vld [vmem:[%s360 + $0xd50] sm:$0xff]
        %v872 = vld [vmem:[%s360 + $0xd58] sm:$0xff]
        %v873 = vld [vmem:[%s360 + $0xd60] sm:$0xff]
        %v874 = vld [vmem:[%s360 + $0xd68] sm:$0xff]
        %v875 = vld [vmem:[%s360 + $0xd70] sm:$0xff]
        %v876 = vld [vmem:[%s360 + $0xd78] sm:$0xff]
        %v877 = vld [vmem:[%s360 + $0xd80] sm:$0xff]
        %v878 = vld [vmem:[%s360 + $0xd88] sm:$0xff]
        %v879 = vld [vmem:[%s360 + $0xd90] sm:$0xff]
        %v880 = vld [vmem:[%s360 + $0xd98] sm:$0xff]
        %v881 = vld [vmem:[%s360 + $0xda0] sm:$0xff]
        %v882 = vld [vmem:[%s360 + $0xda8] sm:$0xff]
        %v883 = vld [vmem:[%s360 + $0xdb0] sm:$0xff]
        %v884 = vld [vmem:[%s360 + $0xdb8] sm:$0xff]
        %v885 = vld [vmem:[%s360 + $0xdc0] sm:$0xff]
        %v886 = vld [vmem:[%s360 + $0xdc8] sm:$0xff]
        %v887 = vld [vmem:[%s360 + $0xdd0] sm:$0xff]
        %v888 = vld [vmem:[%s360 + $0xdd8] sm:$0xff]
        %v889 = vld [vmem:[%s360 + $0xde0] sm:$0xff]
        %v890 = vld [vmem:[%s360 + $0xde8] sm:$0xff]
        %v891 = vld [vmem:[%s360 + $0xdf0] sm:$0xff]
        %v892 = vld [vmem:[%s360 + $0xdf8] sm:$0xff]
        %v893 = vld [vmem:[%s360 + $0xe00] sm:$0xff]
        %v894 = vld [vmem:[%s360 + $0xe08] sm:$0xff]
        %v895 = vld [vmem:[%s360 + $0xe10] sm:$0xff]
        %v896 = vld [vmem:[%s360 + $0xe18] sm:$0xff]
        %v897 = vld [vmem:[%s360 + $0xe20] sm:$0xff]
        %v898 = vld [vmem:[%s360 + $0xe28] sm:$0xff]
        %v899 = vld [vmem:[%s360 + $0xe30] sm:$0xff]
        %v900 = vld [vmem:[%s360 + $0xe38] sm:$0xff]
        %v901 = vld [vmem:[%s360 + $0xe40] sm:$0xff]
        %v902 = vld [vmem:[%s360 + $0xe48] sm:$0xff]
        %v903 = vld [vmem:[%s360 + $0xe50] sm:$0xff]
        %v904 = vld [vmem:[%s360 + $0xe58] sm:$0xff]
        %v905 = vld [vmem:[%s360 + $0xe60] sm:$0xff]
        %v906 = vld [vmem:[%s360 + $0xe68] sm:$0xff]
        %v907 = vld [vmem:[%s360 + $0xe70] sm:$0xff]
        %v908 = vld [vmem:[%s360 + $0xe78] sm:$0xff]
        %v909 = vld [vmem:[%s360 + $0xe80] sm:$0xff]
        %v910 = vld [vmem:[%s360 + $0xe88] sm:$0xff]
        %v911 = vld [vmem:[%s360 + $0xe90] sm:$0xff]
        %v912 = vld [vmem:[%s360 + $0xe98] sm:$0xff]
        %v913 = vld [vmem:[%s360 + $0xea0] sm:$0xff]
        %v914 = vld [vmem:[%s360 + $0xea8] sm:$0xff]
        %v915 = vld [vmem:[%s360 + $0xeb0] sm:$0xff]
        %v916 = vld [vmem:[%s360 + $0xeb8] sm:$0xff]
        %v917 = vld [vmem:[%s360 + $0xec0] sm:$0xff]
        %v918 = vld [vmem:[%s360 + $0xec8] sm:$0xff]
        %v919 = vld [vmem:[%s360 + $0xed0] sm:$0xff]
        %v920 = vld [vmem:[%s360 + $0xed8] sm:$0xff]
        %v921 = vld [vmem:[%s360 + $0xee0] sm:$0xff]
        %v922 = vld [vmem:[%s360 + $0xee8] sm:$0xff]
        %v923 = vld [vmem:[%s360 + $0xef0] sm:$0xff]
        %v924 = vld [vmem:[%s360 + $0xef8] sm:$0xff]
        %v925 = vld [vmem:[%s360 + $0xf00] sm:$0xff]
        %v926 = vld [vmem:[%s360 + $0xf08] sm:$0xff]
        %v927 = vld [vmem:[%s360 + $0xf10] sm:$0xff]
        %v928 = vld [vmem:[%s360 + $0xf18] sm:$0xff]
        %v929 = vld [vmem:[%s360 + $0xf20] sm:$0xff]
        %v930 = vld [vmem:[%s360 + $0xf28] sm:$0xff]
        %v931 = vld [vmem:[%s360 + $0xf30] sm:$0xff]
        %v932 = vld [vmem:[%s360 + $0xf38] sm:$0xff]
        %v933 = vld [vmem:[%s360 + $0xf40] sm:$0xff]
        %v934 = vld [vmem:[%s360 + $0xf48] sm:$0xff]
        %v935 = vld [vmem:[%s360 + $0xf50] sm:$0xff]
        %v936 = vld [vmem:[%s360 + $0xf58] sm:$0xff]
        %v937 = vld [vmem:[%s360 + $0xf60] sm:$0xff]
        %v938 = vld [vmem:[%s360 + $0xf68] sm:$0xff]
        %v939 = vld [vmem:[%s360 + $0xf70] sm:$0xff]
        %v940 = vld [vmem:[%s360 + $0xf78] sm:$0xff]
        %v941 = vld [vmem:[%s360 + $0xf80] sm:$0xff]
        %v942 = vld [vmem:[%s360 + $0xf88] sm:$0xff]
        %v943 = vld [vmem:[%s360 + $0xf90] sm:$0xff]
        %v944 = vld [vmem:[%s360 + $0xf98] sm:$0xff]
        %v945 = vld [vmem:[%s360 + $0xfa0] sm:$0xff]
        %v946 = vld [vmem:[%s360 + $0xfa8] sm:$0xff]
        %v947 = vld [vmem:[%s360 + $0xfb0] sm:$0xff]
        %v948 = vld [vmem:[%s360 + $0xfb8] sm:$0xff]
        %v949 = vld [vmem:[%s360 + $0xfc0] sm:$0xff]
        %v950 = vld [vmem:[%s360 + $0xfc8] sm:$0xff]
        %v951 = vld [vmem:[%s360 + $0xfd0] sm:$0xff]
        %v952 = vld [vmem:[%s360 + $0xfd8] sm:$0xff]
        %v953 = vld [vmem:[%s360 + $0xfe0] sm:$0xff]
        %v954 = vld [vmem:[%s360 + $0xfe8] sm:$0xff]
        %v955 = vld [vmem:[%s360 + $0xff0] sm:$0xff]
        %v956 = vld [vmem:[%s360 + $0xff8] sm:$0xff]
        %v957 = vld [vmem:[%s369] sm:$0xf]
        %v959 = vlaneseq
        %v960 = vshrl.u32 %v959, 7
        %v961 = vsub.s32 0, %v960
        %v962 = vrot.slane %v957, %v961
        %v963 = vlaneseq
        %v964 = vshrl.u32 %v963, 7
        %v965 = vsub.s32 1, %v964
        %v966 = vrot.slane %v957, %v965
        %v967 = vlaneseq
        %v968 = vshrl.u32 %v967, 7
        %v969 = vsub.s32 2, %v968
        %v970 = vrot.slane %v957, %v969
        %v971 = vlaneseq
        %v972 = vshrl.u32 %v971, 7
        %v973 = vsub.s32 3, %v972
        %v974 = vrot.slane %v957, %v973
        %v981 = vcombine.high %v443, %v443
        %v983 = vunpack.c.l.s4 1966171168
        %v984 = vunpack.c.0.s8 %v983
        %v985 = vlaneseq
        %v986 = vshrl.u32 %v985, 7
        %v987 = vsub.s32 %v984, %v986
        %v988 = vrot.slane %v443, %v987
        %v990 = vunpack.c.l.s4 1966171168
        %v991 = vunpack.c.0.s8 %v990
        %v992 = vlaneseq
        %v993 = vshrl.u32 %v992, 7
        %v994 = vsub.s32 %v991, %v993
        %v995 = vrot.slane %v981, %v994
        %v996 = vcombine.high %v988, %v988
        %v997 = vcombine.high %v995, %v995
        %v999 = vunpack.c.l.s4 1966171168
        %v1000 = vunpack.c.0.s8 %v999
        %v1001 = vlaneseq
        %v1002 = vshrl.u32 %v1001, 7
        %v1003 = vsub.s32 %v1000, %v1002
        %v1004 = vrot.slane %v988, %v1003
        %v1006 = vunpack.c.l.s4 1966171168
        %v1007 = vunpack.c.0.s8 %v1006
        %v1008 = vlaneseq
        %v1009 = vshrl.u32 %v1008, 7
        %v1010 = vsub.s32 %v1007, %v1009
        %v1011 = vrot.slane %v995, %v1010
        %v1013 = vunpack.c.l.s4 1966171168
        %v1014 = vunpack.c.0.s8 %v1013
        %v1015 = vlaneseq
        %v1016 = vshrl.u32 %v1015, 7
        %v1017 = vsub.s32 %v1014, %v1016
        %v1018 = vrot.slane %v996, %v1017
        %v1020 = vunpack.c.l.s4 1966171168
        %v1021 = vunpack.c.0.s8 %v1020
        %v1022 = vlaneseq
        %v1023 = vshrl.u32 %v1022, 7
        %v1024 = vsub.s32 %v1021, %v1023
        %v1025 = vrot.slane %v997, %v1024
        %v1026 = vcombine.high %v1004, %v1004
        %v1027 = vcombine.high %v1011, %v1011
        %v1028 = vcombine.high %v1018, %v1018
        %v1029 = vcombine.high %v1025, %v1025
        %v1030 = vcombine.high %v444, %v444
        %v1032 = vunpack.c.l.s4 1966171168
        %v1033 = vunpack.c.0.s8 %v1032
        %v1034 = vlaneseq
        %v1035 = vshrl.u32 %v1034, 7
        %v1036 = vsub.s32 %v1033, %v1035
        %v1037 = vrot.slane %v444, %v1036
        %v1039 = vunpack.c.l.s4 1966171168
        %v1040 = vunpack.c.0.s8 %v1039
        %v1041 = vlaneseq
        %v1042 = vshrl.u32 %v1041, 7
        %v1043 = vsub.s32 %v1040, %v1042
        %v1044 = vrot.slane %v1030, %v1043
        %v1045 = vcombine.high %v1037, %v1037
        %v1046 = vcombine.high %v1044, %v1044
        %v1048 = vunpack.c.l.s4 1966171168
        %v1049 = vunpack.c.0.s8 %v1048
        %v1050 = vlaneseq
        %v1051 = vshrl.u32 %v1050, 7
        %v1052 = vsub.s32 %v1049, %v1051
        %v1053 = vrot.slane %v1037, %v1052
        %v1055 = vunpack.c.l.s4 1966171168
        %v1056 = vunpack.c.0.s8 %v1055
        %v1057 = vlaneseq
        %v1058 = vshrl.u32 %v1057, 7
        %v1059 = vsub.s32 %v1056, %v1058
        %v1060 = vrot.slane %v1044, %v1059
        %v1062 = vunpack.c.l.s4 1966171168
        %v1063 = vunpack.c.0.s8 %v1062
        %v1064 = vlaneseq
        %v1065 = vshrl.u32 %v1064, 7
        %v1066 = vsub.s32 %v1063, %v1065
        %v1067 = vrot.slane %v1045, %v1066
        %v1069 = vunpack.c.l.s4 1966171168
        %v1070 = vunpack.c.0.s8 %v1069
        %v1071 = vlaneseq
        %v1072 = vshrl.u32 %v1071, 7
        %v1073 = vsub.s32 %v1070, %v1072
        %v1074 = vrot.slane %v1046, %v1073
        %v1075 = vcombine.high %v1053, %v1053
        %v1076 = vcombine.high %v1060, %v1060
        %v1077 = vcombine.high %v1067, %v1067
        %v1078 = vcombine.high %v1074, %v1074
        %v1607 = vunpack.c.l.b16 %v445
        %v1608 = vunpack.c.h.b16 %v445
        %v1609 = vunpack.c.l.b16 %v446
        %v1610 = vunpack.c.h.b16 %v446
        %v1611 = vunpack.c.l.b16 %v447
        %v1612 = vunpack.c.h.b16 %v447
        %v1613 = vunpack.c.l.b16 %v448
        %v1614 = vunpack.c.h.b16 %v448
        %v1615 = vunpack.c.l.b16 %v449
        %v1616 = vunpack.c.h.b16 %v449
        %v1617 = vunpack.c.l.b16 %v450
        %v1618 = vunpack.c.h.b16 %v450
        %v1619 = vunpack.c.l.b16 %v451
        %v1620 = vunpack.c.h.b16 %v451
        %v1621 = vunpack.c.l.b16 %v452
        %v1622 = vunpack.c.h.b16 %v452
        %v1623 = vunpack.c.l.b16 %v453
        %v1624 = vunpack.c.h.b16 %v453
        %v1625 = vunpack.c.l.b16 %v454
        %v1626 = vunpack.c.h.b16 %v454
        %v1627 = vunpack.c.l.b16 %v455
        %v1628 = vunpack.c.h.b16 %v455
        %v1629 = vunpack.c.l.b16 %v456
        %v1630 = vunpack.c.h.b16 %v456
        %v1631 = vunpack.c.l.b16 %v457
        %v1632 = vunpack.c.h.b16 %v457
        %v1633 = vunpack.c.l.b16 %v458
        %v1634 = vunpack.c.h.b16 %v458
        %v1635 = vunpack.c.l.b16 %v459
        %v1636 = vunpack.c.h.b16 %v459
        %v1637 = vunpack.c.l.b16 %v460
        %v1638 = vunpack.c.h.b16 %v460
        %v1639 = vunpack.c.l.b16 %v461
        %v1640 = vunpack.c.h.b16 %v461
        %v1641 = vunpack.c.l.b16 %v462
        %v1642 = vunpack.c.h.b16 %v462
        %v1643 = vunpack.c.l.b16 %v463
        %v1644 = vunpack.c.h.b16 %v463
        %v1645 = vunpack.c.l.b16 %v464
        %v1646 = vunpack.c.h.b16 %v464
        %v1647 = vunpack.c.l.b16 %v465
        %v1648 = vunpack.c.h.b16 %v465
        %v1649 = vunpack.c.l.b16 %v466
        %v1650 = vunpack.c.h.b16 %v466
        %v1651 = vunpack.c.l.b16 %v467
        %v1652 = vunpack.c.h.b16 %v467
        %v1653 = vunpack.c.l.b16 %v468
        %v1654 = vunpack.c.h.b16 %v468
        %v1655 = vunpack.c.l.b16 %v469
        %v1656 = vunpack.c.h.b16 %v469
        %v1657 = vunpack.c.l.b16 %v470
        %v1658 = vunpack.c.h.b16 %v470
        %v1659 = vunpack.c.l.b16 %v471
        %v1660 = vunpack.c.h.b16 %v471
        %v1661 = vunpack.c.l.b16 %v472
        %v1662 = vunpack.c.h.b16 %v472
        %v1663 = vunpack.c.l.b16 %v473
        %v1664 = vunpack.c.h.b16 %v473
        %v1665 = vunpack.c.l.b16 %v474
        %v1666 = vunpack.c.h.b16 %v474
        %v1667 = vunpack.c.l.b16 %v475
        %v1668 = vunpack.c.h.b16 %v475
        %v1669 = vunpack.c.l.b16 %v476
        %v1670 = vunpack.c.h.b16 %v476
        %v1671 = vunpack.c.l.b16 %v477
        %v1672 = vunpack.c.h.b16 %v477
        %v1673 = vunpack.c.l.b16 %v478
        %v1674 = vunpack.c.h.b16 %v478
        %v1675 = vunpack.c.l.b16 %v479
        %v1676 = vunpack.c.h.b16 %v479
        %v1677 = vunpack.c.l.b16 %v480
        %v1678 = vunpack.c.h.b16 %v480
        %v1679 = vunpack.c.l.b16 %v481
        %v1680 = vunpack.c.h.b16 %v481
        %v1681 = vunpack.c.l.b16 %v482
        %v1682 = vunpack.c.h.b16 %v482
        %v1683 = vunpack.c.l.b16 %v483
        %v1684 = vunpack.c.h.b16 %v483
        %v1685 = vunpack.c.l.b16 %v484
        %v1686 = vunpack.c.h.b16 %v484
        %v1687 = vunpack.c.l.b16 %v485
        %v1688 = vunpack.c.h.b16 %v485
        %v1689 = vunpack.c.l.b16 %v486
        %v1690 = vunpack.c.h.b16 %v486
        %v1691 = vunpack.c.l.b16 %v487
        %v1692 = vunpack.c.h.b16 %v487
        %v1693 = vunpack.c.l.b16 %v488
        %v1694 = vunpack.c.h.b16 %v488
        %v1695 = vunpack.c.l.b16 %v489
        %v1696 = vunpack.c.h.b16 %v489
        %v1697 = vunpack.c.l.b16 %v490
        %v1698 = vunpack.c.h.b16 %v490
        %v1699 = vunpack.c.l.b16 %v491
        %v1700 = vunpack.c.h.b16 %v491
        %v1701 = vunpack.c.l.b16 %v492
        %v1702 = vunpack.c.h.b16 %v492
        %v1703 = vunpack.c.l.b16 %v493
        %v1704 = vunpack.c.h.b16 %v493
        %v1705 = vunpack.c.l.b16 %v494
        %v1706 = vunpack.c.h.b16 %v494
        %v1707 = vunpack.c.l.b16 %v495
        %v1708 = vunpack.c.h.b16 %v495
        %v1709 = vunpack.c.l.b16 %v496
        %v1710 = vunpack.c.h.b16 %v496
        %v1711 = vunpack.c.l.b16 %v497
        %v1712 = vunpack.c.h.b16 %v497
        %v1713 = vunpack.c.l.b16 %v498
        %v1714 = vunpack.c.h.b16 %v498
        %v1715 = vunpack.c.l.b16 %v499
        %v1716 = vunpack.c.h.b16 %v499
        %v1717 = vunpack.c.l.b16 %v500
        %v1718 = vunpack.c.h.b16 %v500
        %v1719 = vunpack.c.l.b16 %v501
        %v1720 = vunpack.c.h.b16 %v501
        %v1721 = vunpack.c.l.b16 %v502
        %v1722 = vunpack.c.h.b16 %v502
        %v1723 = vunpack.c.l.b16 %v503
        %v1724 = vunpack.c.h.b16 %v503
        %v1725 = vunpack.c.l.b16 %v504
        %v1726 = vunpack.c.h.b16 %v504
        %v1727 = vunpack.c.l.b16 %v505
        %v1728 = vunpack.c.h.b16 %v505
        %v1729 = vunpack.c.l.b16 %v506
        %v1730 = vunpack.c.h.b16 %v506
        %v1731 = vunpack.c.l.b16 %v507
        %v1732 = vunpack.c.h.b16 %v507
        %v1733 = vunpack.c.l.b16 %v508
        %v1734 = vunpack.c.h.b16 %v508
        %v1735 = vunpack.c.l.b16 %v509
        %v1736 = vunpack.c.h.b16 %v509
        %v1737 = vunpack.c.l.b16 %v510
        %v1738 = vunpack.c.h.b16 %v510
        %v1739 = vunpack.c.l.b16 %v511
        %v1740 = vunpack.c.h.b16 %v511
        %v1741 = vunpack.c.l.b16 %v512
        %v1742 = vunpack.c.h.b16 %v512
        %v1743 = vunpack.c.l.b16 %v513
        %v1744 = vunpack.c.h.b16 %v513
        %v1745 = vunpack.c.l.b16 %v514
        %v1746 = vunpack.c.h.b16 %v514
        %v1747 = vunpack.c.l.b16 %v515
        %v1748 = vunpack.c.h.b16 %v515
        %v1749 = vunpack.c.l.b16 %v516
        %v1750 = vunpack.c.h.b16 %v516
        %v1751 = vunpack.c.l.b16 %v517
        %v1752 = vunpack.c.h.b16 %v517
        %v1753 = vunpack.c.l.b16 %v518
        %v1754 = vunpack.c.h.b16 %v518
        %v1755 = vunpack.c.l.b16 %v519
        %v1756 = vunpack.c.h.b16 %v519
        %v1757 = vunpack.c.l.b16 %v520
        %v1758 = vunpack.c.h.b16 %v520
        %v1759 = vunpack.c.l.b16 %v521
        %v1760 = vunpack.c.h.b16 %v521
        %v1761 = vunpack.c.l.b16 %v522
        %v1762 = vunpack.c.h.b16 %v522
        %v1763 = vunpack.c.l.b16 %v523
        %v1764 = vunpack.c.h.b16 %v523
        %v1765 = vunpack.c.l.b16 %v524
        %v1766 = vunpack.c.h.b16 %v524
        %v1767 = vunpack.c.l.b16 %v525
        %v1768 = vunpack.c.h.b16 %v525
        %v1769 = vunpack.c.l.b16 %v526
        %v1770 = vunpack.c.h.b16 %v526
        %v1771 = vunpack.c.l.b16 %v527
        %v1772 = vunpack.c.h.b16 %v527
        %v1773 = vunpack.c.l.b16 %v528
        %v1774 = vunpack.c.h.b16 %v528
        %v1775 = vunpack.c.l.b16 %v529
        %v1776 = vunpack.c.h.b16 %v529
        %v1777 = vunpack.c.l.b16 %v530
        %v1778 = vunpack.c.h.b16 %v530
        %v1779 = vunpack.c.l.b16 %v531
        %v1780 = vunpack.c.h.b16 %v531
        %v1781 = vunpack.c.l.b16 %v532
        %v1782 = vunpack.c.h.b16 %v532
        %v1783 = vunpack.c.l.b16 %v533
        %v1784 = vunpack.c.h.b16 %v533
        %v1785 = vunpack.c.l.b16 %v534
        %v1786 = vunpack.c.h.b16 %v534
        %v1787 = vunpack.c.l.b16 %v535
        %v1788 = vunpack.c.h.b16 %v535
        %v1789 = vunpack.c.l.b16 %v536
        %v1790 = vunpack.c.h.b16 %v536
        %v1791 = vunpack.c.l.b16 %v537
        %v1792 = vunpack.c.h.b16 %v537
        %v1793 = vunpack.c.l.b16 %v538
        %v1794 = vunpack.c.h.b16 %v538
        %v1795 = vunpack.c.l.b16 %v539
        %v1796 = vunpack.c.h.b16 %v539
        %v1797 = vunpack.c.l.b16 %v540
        %v1798 = vunpack.c.h.b16 %v540
        %v1799 = vunpack.c.l.b16 %v541
        %v1800 = vunpack.c.h.b16 %v541
        %v1801 = vunpack.c.l.b16 %v542
        %v1802 = vunpack.c.h.b16 %v542
        %v1803 = vunpack.c.l.b16 %v543
        %v1804 = vunpack.c.h.b16 %v543
        %v1805 = vunpack.c.l.b16 %v544
        %v1806 = vunpack.c.h.b16 %v544
        %v1807 = vunpack.c.l.b16 %v545
        %v1808 = vunpack.c.h.b16 %v545
        %v1809 = vunpack.c.l.b16 %v546
        %v1810 = vunpack.c.h.b16 %v546
        %v1811 = vunpack.c.l.b16 %v547
        %v1812 = vunpack.c.h.b16 %v547
        %v1813 = vunpack.c.l.b16 %v548
        %v1814 = vunpack.c.h.b16 %v548
        %v1815 = vunpack.c.l.b16 %v549
        %v1816 = vunpack.c.h.b16 %v549
        %v1817 = vunpack.c.l.b16 %v550
        %v1818 = vunpack.c.h.b16 %v550
        %v1819 = vunpack.c.l.b16 %v551
        %v1820 = vunpack.c.h.b16 %v551
        %v1821 = vunpack.c.l.b16 %v552
        %v1822 = vunpack.c.h.b16 %v552
        %v1823 = vunpack.c.l.b16 %v553
        %v1824 = vunpack.c.h.b16 %v553
        %v1825 = vunpack.c.l.b16 %v554
        %v1826 = vunpack.c.h.b16 %v554
        %v1827 = vunpack.c.l.b16 %v555
        %v1828 = vunpack.c.h.b16 %v555
        %v1829 = vunpack.c.l.b16 %v556
        %v1830 = vunpack.c.h.b16 %v556
        %v1831 = vunpack.c.l.b16 %v557
        %v1832 = vunpack.c.h.b16 %v557
        %v1833 = vunpack.c.l.b16 %v558
        %v1834 = vunpack.c.h.b16 %v558
        %v1835 = vunpack.c.l.b16 %v559
        %v1836 = vunpack.c.h.b16 %v559
        %v1837 = vunpack.c.l.b16 %v560
        %v1838 = vunpack.c.h.b16 %v560
        %v1839 = vunpack.c.l.b16 %v561
        %v1840 = vunpack.c.h.b16 %v561
        %v1841 = vunpack.c.l.b16 %v562
        %v1842 = vunpack.c.h.b16 %v562
        %v1843 = vunpack.c.l.b16 %v563
        %v1844 = vunpack.c.h.b16 %v563
        %v1845 = vunpack.c.l.b16 %v564
        %v1846 = vunpack.c.h.b16 %v564
        %v1847 = vunpack.c.l.b16 %v565
        %v1848 = vunpack.c.h.b16 %v565
        %v1849 = vunpack.c.l.b16 %v566
        %v1850 = vunpack.c.h.b16 %v566
        %v1851 = vunpack.c.l.b16 %v567
        %v1852 = vunpack.c.h.b16 %v567
        %v1853 = vunpack.c.l.b16 %v568
        %v1854 = vunpack.c.h.b16 %v568
        %v1855 = vunpack.c.l.b16 %v569
        %v1856 = vunpack.c.h.b16 %v569
        %v1857 = vunpack.c.l.b16 %v570
        %v1858 = vunpack.c.h.b16 %v570
        %v1859 = vunpack.c.l.b16 %v571
        %v1860 = vunpack.c.h.b16 %v571
        %v1861 = vunpack.c.l.b16 %v572
        %v1862 = vunpack.c.h.b16 %v572
        %v1863 = vunpack.c.l.b16 %v573
        %v1864 = vunpack.c.h.b16 %v573
        %v1865 = vunpack.c.l.b16 %v574
        %v1866 = vunpack.c.h.b16 %v574
        %v1867 = vunpack.c.l.b16 %v575
        %v1868 = vunpack.c.h.b16 %v575
        %v1869 = vunpack.c.l.b16 %v576
        %v1870 = vunpack.c.h.b16 %v576
        %v1871 = vunpack.c.l.b16 %v577
        %v1872 = vunpack.c.h.b16 %v577
        %v1873 = vunpack.c.l.b16 %v578
        %v1874 = vunpack.c.h.b16 %v578
        %v1875 = vunpack.c.l.b16 %v579
        %v1876 = vunpack.c.h.b16 %v579
        %v1877 = vunpack.c.l.b16 %v580
        %v1878 = vunpack.c.h.b16 %v580
        %v1879 = vunpack.c.l.b16 %v581
        %v1880 = vunpack.c.h.b16 %v581
        %v1881 = vunpack.c.l.b16 %v582
        %v1882 = vunpack.c.h.b16 %v582
        %v1883 = vunpack.c.l.b16 %v583
        %v1884 = vunpack.c.h.b16 %v583
        %v1885 = vunpack.c.l.b16 %v584
        %v1886 = vunpack.c.h.b16 %v584
        %v1887 = vunpack.c.l.b16 %v585
        %v1888 = vunpack.c.h.b16 %v585
        %v1889 = vunpack.c.l.b16 %v586
        %v1890 = vunpack.c.h.b16 %v586
        %v1891 = vunpack.c.l.b16 %v587
        %v1892 = vunpack.c.h.b16 %v587
        %v1893 = vunpack.c.l.b16 %v588
        %v1894 = vunpack.c.h.b16 %v588
        %v1895 = vunpack.c.l.b16 %v589
        %v1896 = vunpack.c.h.b16 %v589
        %v1897 = vunpack.c.l.b16 %v590
        %v1898 = vunpack.c.h.b16 %v590
        %v1899 = vunpack.c.l.b16 %v591
        %v1900 = vunpack.c.h.b16 %v591
        %v1901 = vunpack.c.l.b16 %v592
        %v1902 = vunpack.c.h.b16 %v592
        %v1903 = vunpack.c.l.b16 %v593
        %v1904 = vunpack.c.h.b16 %v593
        %v1905 = vunpack.c.l.b16 %v594
        %v1906 = vunpack.c.h.b16 %v594
        %v1907 = vunpack.c.l.b16 %v595
        %v1908 = vunpack.c.h.b16 %v595
        %v1909 = vunpack.c.l.b16 %v596
        %v1910 = vunpack.c.h.b16 %v596
        %v1911 = vunpack.c.l.b16 %v597
        %v1912 = vunpack.c.h.b16 %v597
        %v1913 = vunpack.c.l.b16 %v598
        %v1914 = vunpack.c.h.b16 %v598
        %v1915 = vunpack.c.l.b16 %v599
        %v1916 = vunpack.c.h.b16 %v599
        %v1917 = vunpack.c.l.b16 %v600
        %v1918 = vunpack.c.h.b16 %v600
        %v1919 = vunpack.c.l.b16 %v601
        %v1920 = vunpack.c.h.b16 %v601
        %v1921 = vunpack.c.l.b16 %v602
        %v1922 = vunpack.c.h.b16 %v602
        %v1923 = vunpack.c.l.b16 %v603
        %v1924 = vunpack.c.h.b16 %v603
        %v1925 = vunpack.c.l.b16 %v604
        %v1926 = vunpack.c.h.b16 %v604
        %v1927 = vunpack.c.l.b16 %v605
        %v1928 = vunpack.c.h.b16 %v605
        %v1929 = vunpack.c.l.b16 %v606
        %v1930 = vunpack.c.h.b16 %v606
        %v1931 = vunpack.c.l.b16 %v607
        %v1932 = vunpack.c.h.b16 %v607
        %v1933 = vunpack.c.l.b16 %v608
        %v1934 = vunpack.c.h.b16 %v608
        %v1935 = vunpack.c.l.b16 %v609
        %v1936 = vunpack.c.h.b16 %v609
        %v1937 = vunpack.c.l.b16 %v610
        %v1938 = vunpack.c.h.b16 %v610
        %v1939 = vunpack.c.l.b16 %v611
        %v1940 = vunpack.c.h.b16 %v611
        %v1941 = vunpack.c.l.b16 %v612
        %v1942 = vunpack.c.h.b16 %v612
        %v1943 = vunpack.c.l.b16 %v613
        %v1944 = vunpack.c.h.b16 %v613
        %v1945 = vunpack.c.l.b16 %v614
        %v1946 = vunpack.c.h.b16 %v614
        %v1947 = vunpack.c.l.b16 %v615
        %v1948 = vunpack.c.h.b16 %v615
        %v1949 = vunpack.c.l.b16 %v616
        %v1950 = vunpack.c.h.b16 %v616
        %v1951 = vunpack.c.l.b16 %v617
        %v1952 = vunpack.c.h.b16 %v617
        %v1953 = vunpack.c.l.b16 %v618
        %v1954 = vunpack.c.h.b16 %v618
        %v1955 = vunpack.c.l.b16 %v619
        %v1956 = vunpack.c.h.b16 %v619
        %v1957 = vunpack.c.l.b16 %v620
        %v1958 = vunpack.c.h.b16 %v620
        %v1959 = vunpack.c.l.b16 %v621
        %v1960 = vunpack.c.h.b16 %v621
        %v1961 = vunpack.c.l.b16 %v622
        %v1962 = vunpack.c.h.b16 %v622
        %v1963 = vunpack.c.l.b16 %v623
        %v1964 = vunpack.c.h.b16 %v623
        %v1965 = vunpack.c.l.b16 %v624
        %v1966 = vunpack.c.h.b16 %v624
        %v1967 = vunpack.c.l.b16 %v625
        %v1968 = vunpack.c.h.b16 %v625
        %v1969 = vunpack.c.l.b16 %v626
        %v1970 = vunpack.c.h.b16 %v626
        %v1971 = vunpack.c.l.b16 %v627
        %v1972 = vunpack.c.h.b16 %v627
        %v1973 = vunpack.c.l.b16 %v628
        %v1974 = vunpack.c.h.b16 %v628
        %v1975 = vunpack.c.l.b16 %v629
        %v1976 = vunpack.c.h.b16 %v629
        %v1977 = vunpack.c.l.b16 %v630
        %v1978 = vunpack.c.h.b16 %v630
        %v1979 = vunpack.c.l.b16 %v631
        %v1980 = vunpack.c.h.b16 %v631
        %v1981 = vunpack.c.l.b16 %v632
        %v1982 = vunpack.c.h.b16 %v632
        %v1983 = vunpack.c.l.b16 %v633
        %v1984 = vunpack.c.h.b16 %v633
        %v1985 = vunpack.c.l.b16 %v634
        %v1986 = vunpack.c.h.b16 %v634
        %v1987 = vunpack.c.l.b16 %v635
        %v1988 = vunpack.c.h.b16 %v635
        %v1989 = vunpack.c.l.b16 %v636
        %v1990 = vunpack.c.h.b16 %v636
        %v1991 = vunpack.c.l.b16 %v637
        %v1992 = vunpack.c.h.b16 %v637
        %v1993 = vunpack.c.l.b16 %v638
        %v1994 = vunpack.c.h.b16 %v638
        %v1995 = vunpack.c.l.b16 %v639
        %v1996 = vunpack.c.h.b16 %v639
        %v1997 = vunpack.c.l.b16 %v640
        %v1998 = vunpack.c.h.b16 %v640
        %v1999 = vunpack.c.l.b16 %v641
        %v2000 = vunpack.c.h.b16 %v641
        %v2001 = vunpack.c.l.b16 %v642
        %v2002 = vunpack.c.h.b16 %v642
        %v2003 = vunpack.c.l.b16 %v643
        %v2004 = vunpack.c.h.b16 %v643
        %v2005 = vunpack.c.l.b16 %v644
        %v2006 = vunpack.c.h.b16 %v644
        %v2007 = vunpack.c.l.b16 %v645
        %v2008 = vunpack.c.h.b16 %v645
        %v2009 = vunpack.c.l.b16 %v646
        %v2010 = vunpack.c.h.b16 %v646
        %v2011 = vunpack.c.l.b16 %v647
        %v2012 = vunpack.c.h.b16 %v647
        %v2013 = vunpack.c.l.b16 %v648
        %v2014 = vunpack.c.h.b16 %v648
        %v2015 = vunpack.c.l.b16 %v649
        %v2016 = vunpack.c.h.b16 %v649
        %v2017 = vunpack.c.l.b16 %v650
        %v2018 = vunpack.c.h.b16 %v650
        %v2019 = vunpack.c.l.b16 %v651
        %v2020 = vunpack.c.h.b16 %v651
        %v2021 = vunpack.c.l.b16 %v652
        %v2022 = vunpack.c.h.b16 %v652
        %v2023 = vunpack.c.l.b16 %v653
        %v2024 = vunpack.c.h.b16 %v653
        %v2025 = vunpack.c.l.b16 %v654
        %v2026 = vunpack.c.h.b16 %v654
        %v2027 = vunpack.c.l.b16 %v655
        %v2028 = vunpack.c.h.b16 %v655
        %v2029 = vunpack.c.l.b16 %v656
        %v2030 = vunpack.c.h.b16 %v656
        %v2031 = vunpack.c.l.b16 %v657
        %v2032 = vunpack.c.h.b16 %v657
        %v2033 = vunpack.c.l.b16 %v658
        %v2034 = vunpack.c.h.b16 %v658
        %v2035 = vunpack.c.l.b16 %v659
        %v2036 = vunpack.c.h.b16 %v659
        %v2037 = vunpack.c.l.b16 %v660
        %v2038 = vunpack.c.h.b16 %v660
        %v2039 = vunpack.c.l.b16 %v661
        %v2040 = vunpack.c.h.b16 %v661
        %v2041 = vunpack.c.l.b16 %v662
        %v2042 = vunpack.c.h.b16 %v662
        %v2043 = vunpack.c.l.b16 %v663
        %v2044 = vunpack.c.h.b16 %v663
        %v2045 = vunpack.c.l.b16 %v664
        %v2046 = vunpack.c.h.b16 %v664
        %v2047 = vunpack.c.l.b16 %v665
        %v2048 = vunpack.c.h.b16 %v665
        %v2049 = vunpack.c.l.b16 %v666
        %v2050 = vunpack.c.h.b16 %v666
        %v2051 = vunpack.c.l.b16 %v667
        %v2052 = vunpack.c.h.b16 %v667
        %v2053 = vunpack.c.l.b16 %v668
        %v2054 = vunpack.c.h.b16 %v668
        %v2055 = vunpack.c.l.b16 %v669
        %v2056 = vunpack.c.h.b16 %v669
        %v2057 = vunpack.c.l.b16 %v670
        %v2058 = vunpack.c.h.b16 %v670
        %v2059 = vunpack.c.l.b16 %v671
        %v2060 = vunpack.c.h.b16 %v671
        %v2061 = vunpack.c.l.b16 %v672
        %v2062 = vunpack.c.h.b16 %v672
        %v2063 = vunpack.c.l.b16 %v673
        %v2064 = vunpack.c.h.b16 %v673
        %v2065 = vunpack.c.l.b16 %v674
        %v2066 = vunpack.c.h.b16 %v674
        %v2067 = vunpack.c.l.b16 %v675
        %v2068 = vunpack.c.h.b16 %v675
        %v2069 = vunpack.c.l.b16 %v676
        %v2070 = vunpack.c.h.b16 %v676
        %v2071 = vunpack.c.l.b16 %v677
        %v2072 = vunpack.c.h.b16 %v677
        %v2073 = vunpack.c.l.b16 %v678
        %v2074 = vunpack.c.h.b16 %v678
        %v2075 = vunpack.c.l.b16 %v679
        %v2076 = vunpack.c.h.b16 %v679
        %v2077 = vunpack.c.l.b16 %v680
        %v2078 = vunpack.c.h.b16 %v680
        %v2079 = vunpack.c.l.b16 %v681
        %v2080 = vunpack.c.h.b16 %v681
        %v2081 = vunpack.c.l.b16 %v682
        %v2082 = vunpack.c.h.b16 %v682
        %v2083 = vunpack.c.l.b16 %v683
        %v2084 = vunpack.c.h.b16 %v683
        %v2085 = vunpack.c.l.b16 %v684
        %v2086 = vunpack.c.h.b16 %v684
        %v2087 = vunpack.c.l.b16 %v685
        %v2088 = vunpack.c.h.b16 %v685
        %v2089 = vunpack.c.l.b16 %v686
        %v2090 = vunpack.c.h.b16 %v686
        %v2091 = vunpack.c.l.b16 %v687
        %v2092 = vunpack.c.h.b16 %v687
        %v2093 = vunpack.c.l.b16 %v688
        %v2094 = vunpack.c.h.b16 %v688
        %v2095 = vunpack.c.l.b16 %v689
        %v2096 = vunpack.c.h.b16 %v689
        %v2097 = vunpack.c.l.b16 %v690
        %v2098 = vunpack.c.h.b16 %v690
        %v2099 = vunpack.c.l.b16 %v691
        %v2100 = vunpack.c.h.b16 %v691
        %v2101 = vunpack.c.l.b16 %v692
        %v2102 = vunpack.c.h.b16 %v692
        %v2103 = vunpack.c.l.b16 %v693
        %v2104 = vunpack.c.h.b16 %v693
        %v2105 = vunpack.c.l.b16 %v694
        %v2106 = vunpack.c.h.b16 %v694
        %v2107 = vunpack.c.l.b16 %v695
        %v2108 = vunpack.c.h.b16 %v695
        %v2109 = vunpack.c.l.b16 %v696
        %v2110 = vunpack.c.h.b16 %v696
        %v2111 = vunpack.c.l.b16 %v697
        %v2112 = vunpack.c.h.b16 %v697
        %v2113 = vunpack.c.l.b16 %v698
        %v2114 = vunpack.c.h.b16 %v698
        %v2115 = vunpack.c.l.b16 %v699
        %v2116 = vunpack.c.h.b16 %v699
        %v2117 = vunpack.c.l.b16 %v700
        %v2118 = vunpack.c.h.b16 %v700
        %v2119 = vunpack.c.l.b16 %v701
        %v2120 = vunpack.c.h.b16 %v701
        %v2121 = vunpack.c.l.b16 %v702
        %v2122 = vunpack.c.h.b16 %v702
        %v2123 = vunpack.c.l.b16 %v703
        %v2124 = vunpack.c.h.b16 %v703
        %v2125 = vunpack.c.l.b16 %v704
        %v2126 = vunpack.c.h.b16 %v704
        %v2127 = vunpack.c.l.b16 %v705
        %v2128 = vunpack.c.h.b16 %v705
        %v2129 = vunpack.c.l.b16 %v706
        %v2130 = vunpack.c.h.b16 %v706
        %v2131 = vunpack.c.l.b16 %v707
        %v2132 = vunpack.c.h.b16 %v707
        %v2133 = vunpack.c.l.b16 %v708
        %v2134 = vunpack.c.h.b16 %v708
        %v2135 = vunpack.c.l.b16 %v709
        %v2136 = vunpack.c.h.b16 %v709
        %v2137 = vunpack.c.l.b16 %v710
        %v2138 = vunpack.c.h.b16 %v710
        %v2139 = vunpack.c.l.b16 %v711
        %v2140 = vunpack.c.h.b16 %v711
        %v2141 = vunpack.c.l.b16 %v712
        %v2142 = vunpack.c.h.b16 %v712
        %v2143 = vunpack.c.l.b16 %v713
        %v2144 = vunpack.c.h.b16 %v713
        %v2145 = vunpack.c.l.b16 %v714
        %v2146 = vunpack.c.h.b16 %v714
        %v2147 = vunpack.c.l.b16 %v715
        %v2148 = vunpack.c.h.b16 %v715
        %v2149 = vunpack.c.l.b16 %v716
        %v2150 = vunpack.c.h.b16 %v716
        %v2151 = vunpack.c.l.b16 %v717
        %v2152 = vunpack.c.h.b16 %v717
        %v2153 = vunpack.c.l.b16 %v718
        %v2154 = vunpack.c.h.b16 %v718
        %v2155 = vunpack.c.l.b16 %v719
        %v2156 = vunpack.c.h.b16 %v719
        %v2157 = vunpack.c.l.b16 %v720
        %v2158 = vunpack.c.h.b16 %v720
        %v2159 = vunpack.c.l.b16 %v721
        %v2160 = vunpack.c.h.b16 %v721
        %v2161 = vunpack.c.l.b16 %v722
        %v2162 = vunpack.c.h.b16 %v722
        %v2163 = vunpack.c.l.b16 %v723
        %v2164 = vunpack.c.h.b16 %v723
        %v2165 = vunpack.c.l.b16 %v724
        %v2166 = vunpack.c.h.b16 %v724
        %v2167 = vunpack.c.l.b16 %v725
        %v2168 = vunpack.c.h.b16 %v725
        %v2169 = vunpack.c.l.b16 %v726
        %v2170 = vunpack.c.h.b16 %v726
        %v2171 = vunpack.c.l.b16 %v727
        %v2172 = vunpack.c.h.b16 %v727
        %v2173 = vunpack.c.l.b16 %v728
        %v2174 = vunpack.c.h.b16 %v728
        %v2175 = vunpack.c.l.b16 %v729
        %v2176 = vunpack.c.h.b16 %v729
        %v2177 = vunpack.c.l.b16 %v730
        %v2178 = vunpack.c.h.b16 %v730
        %v2179 = vunpack.c.l.b16 %v731
        %v2180 = vunpack.c.h.b16 %v731
        %v2181 = vunpack.c.l.b16 %v732
        %v2182 = vunpack.c.h.b16 %v732
        %v2183 = vunpack.c.l.b16 %v733
        %v2184 = vunpack.c.h.b16 %v733
        %v2185 = vunpack.c.l.b16 %v734
        %v2186 = vunpack.c.h.b16 %v734
        %v2187 = vunpack.c.l.b16 %v735
        %v2188 = vunpack.c.h.b16 %v735
        %v2189 = vunpack.c.l.b16 %v736
        %v2190 = vunpack.c.h.b16 %v736
        %v2191 = vunpack.c.l.b16 %v737
        %v2192 = vunpack.c.h.b16 %v737
        %v2193 = vunpack.c.l.b16 %v738
        %v2194 = vunpack.c.h.b16 %v738
        %v2195 = vunpack.c.l.b16 %v739
        %v2196 = vunpack.c.h.b16 %v739
        %v2197 = vunpack.c.l.b16 %v740
        %v2198 = vunpack.c.h.b16 %v740
        %v2199 = vunpack.c.l.b16 %v741
        %v2200 = vunpack.c.h.b16 %v741
        %v2201 = vunpack.c.l.b16 %v742
        %v2202 = vunpack.c.h.b16 %v742
        %v2203 = vunpack.c.l.b16 %v743
        %v2204 = vunpack.c.h.b16 %v743
        %v2205 = vunpack.c.l.b16 %v744
        %v2206 = vunpack.c.h.b16 %v744
        %v2207 = vunpack.c.l.b16 %v745
        %v2208 = vunpack.c.h.b16 %v745
        %v2209 = vunpack.c.l.b16 %v746
        %v2210 = vunpack.c.h.b16 %v746
        %v2211 = vunpack.c.l.b16 %v747
        %v2212 = vunpack.c.h.b16 %v747
        %v2213 = vunpack.c.l.b16 %v748
        %v2214 = vunpack.c.h.b16 %v748
        %v2215 = vunpack.c.l.b16 %v749
        %v2216 = vunpack.c.h.b16 %v749
        %v2217 = vunpack.c.l.b16 %v750
        %v2218 = vunpack.c.h.b16 %v750
        %v2219 = vunpack.c.l.b16 %v751
        %v2220 = vunpack.c.h.b16 %v751
        %v2221 = vunpack.c.l.b16 %v752
        %v2222 = vunpack.c.h.b16 %v752
        %v2223 = vunpack.c.l.b16 %v753
        %v2224 = vunpack.c.h.b16 %v753
        %v2225 = vunpack.c.l.b16 %v754
        %v2226 = vunpack.c.h.b16 %v754
        %v2227 = vunpack.c.l.b16 %v755
        %v2228 = vunpack.c.h.b16 %v755
        %v2229 = vunpack.c.l.b16 %v756
        %v2230 = vunpack.c.h.b16 %v756
        %v2231 = vunpack.c.l.b16 %v757
        %v2232 = vunpack.c.h.b16 %v757
        %v2233 = vunpack.c.l.b16 %v758
        %v2234 = vunpack.c.h.b16 %v758
        %v2235 = vunpack.c.l.b16 %v759
        %v2236 = vunpack.c.h.b16 %v759
        %v2237 = vunpack.c.l.b16 %v760
        %v2238 = vunpack.c.h.b16 %v760
        %v2239 = vunpack.c.l.b16 %v761
        %v2240 = vunpack.c.h.b16 %v761
        %v2241 = vunpack.c.l.b16 %v762
        %v2242 = vunpack.c.h.b16 %v762
        %v2243 = vunpack.c.l.b16 %v763
        %v2244 = vunpack.c.h.b16 %v763
        %v2245 = vunpack.c.l.b16 %v764
        %v2246 = vunpack.c.h.b16 %v764
        %v2247 = vunpack.c.l.b16 %v765
        %v2248 = vunpack.c.h.b16 %v765
        %v2249 = vunpack.c.l.b16 %v766
        %v2250 = vunpack.c.h.b16 %v766
        %v2251 = vunpack.c.l.b16 %v767
        %v2252 = vunpack.c.h.b16 %v767
        %v2253 = vunpack.c.l.b16 %v768
        %v2254 = vunpack.c.h.b16 %v768
        %v2255 = vunpack.c.l.b16 %v769
        %v2256 = vunpack.c.h.b16 %v769
        %v2257 = vunpack.c.l.b16 %v770
        %v2258 = vunpack.c.h.b16 %v770
        %v2259 = vunpack.c.l.b16 %v771
        %v2260 = vunpack.c.h.b16 %v771
        %v2261 = vunpack.c.l.b16 %v772
        %v2262 = vunpack.c.h.b16 %v772
        %v2263 = vunpack.c.l.b16 %v773
        %v2264 = vunpack.c.h.b16 %v773
        %v2265 = vunpack.c.l.b16 %v774
        %v2266 = vunpack.c.h.b16 %v774
        %v2267 = vunpack.c.l.b16 %v775
        %v2268 = vunpack.c.h.b16 %v775
        %v2269 = vunpack.c.l.b16 %v776
        %v2270 = vunpack.c.h.b16 %v776
        %v2271 = vunpack.c.l.b16 %v777
        %v2272 = vunpack.c.h.b16 %v777
        %v2273 = vunpack.c.l.b16 %v778
        %v2274 = vunpack.c.h.b16 %v778
        %v2275 = vunpack.c.l.b16 %v779
        %v2276 = vunpack.c.h.b16 %v779
        %v2277 = vunpack.c.l.b16 %v780
        %v2278 = vunpack.c.h.b16 %v780
        %v2279 = vunpack.c.l.b16 %v781
        %v2280 = vunpack.c.h.b16 %v781
        %v2281 = vunpack.c.l.b16 %v782
        %v2282 = vunpack.c.h.b16 %v782
        %v2283 = vunpack.c.l.b16 %v783
        %v2284 = vunpack.c.h.b16 %v783
        %v2285 = vunpack.c.l.b16 %v784
        %v2286 = vunpack.c.h.b16 %v784
        %v2287 = vunpack.c.l.b16 %v785
        %v2288 = vunpack.c.h.b16 %v785
        %v2289 = vunpack.c.l.b16 %v786
        %v2290 = vunpack.c.h.b16 %v786
        %v2291 = vunpack.c.l.b16 %v787
        %v2292 = vunpack.c.h.b16 %v787
        %v2293 = vunpack.c.l.b16 %v788
        %v2294 = vunpack.c.h.b16 %v788
        %v2295 = vunpack.c.l.b16 %v789
        %v2296 = vunpack.c.h.b16 %v789
        %v2297 = vunpack.c.l.b16 %v790
        %v2298 = vunpack.c.h.b16 %v790
        %v2299 = vunpack.c.l.b16 %v791
        %v2300 = vunpack.c.h.b16 %v791
        %v2301 = vunpack.c.l.b16 %v792
        %v2302 = vunpack.c.h.b16 %v792
        %v2303 = vunpack.c.l.b16 %v793
        %v2304 = vunpack.c.h.b16 %v793
        %v2305 = vunpack.c.l.b16 %v794
        %v2306 = vunpack.c.h.b16 %v794
        %v2307 = vunpack.c.l.b16 %v795
        %v2308 = vunpack.c.h.b16 %v795
        %v2309 = vunpack.c.l.b16 %v796
        %v2310 = vunpack.c.h.b16 %v796
        %v2311 = vunpack.c.l.b16 %v797
        %v2312 = vunpack.c.h.b16 %v797
        %v2313 = vunpack.c.l.b16 %v798
        %v2314 = vunpack.c.h.b16 %v798
        %v2315 = vunpack.c.l.b16 %v799
        %v2316 = vunpack.c.h.b16 %v799
        %v2317 = vunpack.c.l.b16 %v800
        %v2318 = vunpack.c.h.b16 %v800
        %v2319 = vunpack.c.l.b16 %v801
        %v2320 = vunpack.c.h.b16 %v801
        %v2321 = vunpack.c.l.b16 %v802
        %v2322 = vunpack.c.h.b16 %v802
        %v2323 = vunpack.c.l.b16 %v803
        %v2324 = vunpack.c.h.b16 %v803
        %v2325 = vunpack.c.l.b16 %v804
        %v2326 = vunpack.c.h.b16 %v804
        %v2327 = vunpack.c.l.b16 %v805
        %v2328 = vunpack.c.h.b16 %v805
        %v2329 = vunpack.c.l.b16 %v806
        %v2330 = vunpack.c.h.b16 %v806
        %v2331 = vunpack.c.l.b16 %v807
        %v2332 = vunpack.c.h.b16 %v807
        %v2333 = vunpack.c.l.b16 %v808
        %v2334 = vunpack.c.h.b16 %v808
        %v2335 = vunpack.c.l.b16 %v809
        %v2336 = vunpack.c.h.b16 %v809
        %v2337 = vunpack.c.l.b16 %v810
        %v2338 = vunpack.c.h.b16 %v810
        %v2339 = vunpack.c.l.b16 %v811
        %v2340 = vunpack.c.h.b16 %v811
        %v2341 = vunpack.c.l.b16 %v812
        %v2342 = vunpack.c.h.b16 %v812
        %v2343 = vunpack.c.l.b16 %v813
        %v2344 = vunpack.c.h.b16 %v813
        %v2345 = vunpack.c.l.b16 %v814
        %v2346 = vunpack.c.h.b16 %v814
        %v2347 = vunpack.c.l.b16 %v815
        %v2348 = vunpack.c.h.b16 %v815
        %v2349 = vunpack.c.l.b16 %v816
        %v2350 = vunpack.c.h.b16 %v816
        %v2351 = vunpack.c.l.b16 %v817
        %v2352 = vunpack.c.h.b16 %v817
        %v2353 = vunpack.c.l.b16 %v818
        %v2354 = vunpack.c.h.b16 %v818
        %v2355 = vunpack.c.l.b16 %v819
        %v2356 = vunpack.c.h.b16 %v819
        %v2357 = vunpack.c.l.b16 %v820
        %v2358 = vunpack.c.h.b16 %v820
        %v2359 = vunpack.c.l.b16 %v821
        %v2360 = vunpack.c.h.b16 %v821
        %v2361 = vunpack.c.l.b16 %v822
        %v2362 = vunpack.c.h.b16 %v822
        %v2363 = vunpack.c.l.b16 %v823
        %v2364 = vunpack.c.h.b16 %v823
        %v2365 = vunpack.c.l.b16 %v824
        %v2366 = vunpack.c.h.b16 %v824
        %v2367 = vunpack.c.l.b16 %v825
        %v2368 = vunpack.c.h.b16 %v825
        %v2369 = vunpack.c.l.b16 %v826
        %v2370 = vunpack.c.h.b16 %v826
        %v2371 = vunpack.c.l.b16 %v827
        %v2372 = vunpack.c.h.b16 %v827
        %v2373 = vunpack.c.l.b16 %v828
        %v2374 = vunpack.c.h.b16 %v828
        %v2375 = vunpack.c.l.b16 %v829
        %v2376 = vunpack.c.h.b16 %v829
        %v2377 = vunpack.c.l.b16 %v830
        %v2378 = vunpack.c.h.b16 %v830
        %v2379 = vunpack.c.l.b16 %v831
        %v2380 = vunpack.c.h.b16 %v831
        %v2381 = vunpack.c.l.b16 %v832
        %v2382 = vunpack.c.h.b16 %v832
        %v2383 = vunpack.c.l.b16 %v833
        %v2384 = vunpack.c.h.b16 %v833
        %v2385 = vunpack.c.l.b16 %v834
        %v2386 = vunpack.c.h.b16 %v834
        %v2387 = vunpack.c.l.b16 %v835
        %v2388 = vunpack.c.h.b16 %v835
        %v2389 = vunpack.c.l.b16 %v836
        %v2390 = vunpack.c.h.b16 %v836
        %v2391 = vunpack.c.l.b16 %v837
        %v2392 = vunpack.c.h.b16 %v837
        %v2393 = vunpack.c.l.b16 %v838
        %v2394 = vunpack.c.h.b16 %v838
        %v2395 = vunpack.c.l.b16 %v839
        %v2396 = vunpack.c.h.b16 %v839
        %v2397 = vunpack.c.l.b16 %v840
        %v2398 = vunpack.c.h.b16 %v840
        %v2399 = vunpack.c.l.b16 %v841
        %v2400 = vunpack.c.h.b16 %v841
        %v2401 = vunpack.c.l.b16 %v842
        %v2402 = vunpack.c.h.b16 %v842
        %v2403 = vunpack.c.l.b16 %v843
        %v2404 = vunpack.c.h.b16 %v843
        %v2405 = vunpack.c.l.b16 %v844
        %v2406 = vunpack.c.h.b16 %v844
        %v2407 = vunpack.c.l.b16 %v845
        %v2408 = vunpack.c.h.b16 %v845
        %v2409 = vunpack.c.l.b16 %v846
        %v2410 = vunpack.c.h.b16 %v846
        %v2411 = vunpack.c.l.b16 %v847
        %v2412 = vunpack.c.h.b16 %v847
        %v2413 = vunpack.c.l.b16 %v848
        %v2414 = vunpack.c.h.b16 %v848
        %v2415 = vunpack.c.l.b16 %v849
        %v2416 = vunpack.c.h.b16 %v849
        %v2417 = vunpack.c.l.b16 %v850
        %v2418 = vunpack.c.h.b16 %v850
        %v2419 = vunpack.c.l.b16 %v851
        %v2420 = vunpack.c.h.b16 %v851
        %v2421 = vunpack.c.l.b16 %v852
        %v2422 = vunpack.c.h.b16 %v852
        %v2423 = vunpack.c.l.b16 %v853
        %v2424 = vunpack.c.h.b16 %v853
        %v2425 = vunpack.c.l.b16 %v854
        %v2426 = vunpack.c.h.b16 %v854
        %v2427 = vunpack.c.l.b16 %v855
        %v2428 = vunpack.c.h.b16 %v855
        %v2429 = vunpack.c.l.b16 %v856
        %v2430 = vunpack.c.h.b16 %v856
        %v2431 = vunpack.c.l.b16 %v857
        %v2432 = vunpack.c.h.b16 %v857
        %v2433 = vunpack.c.l.b16 %v858
        %v2434 = vunpack.c.h.b16 %v858
        %v2435 = vunpack.c.l.b16 %v859
        %v2436 = vunpack.c.h.b16 %v859
        %v2437 = vunpack.c.l.b16 %v860
        %v2438 = vunpack.c.h.b16 %v860
        %v2439 = vunpack.c.l.b16 %v861
        %v2440 = vunpack.c.h.b16 %v861
        %v2441 = vunpack.c.l.b16 %v862
        %v2442 = vunpack.c.h.b16 %v862
        %v2443 = vunpack.c.l.b16 %v863
        %v2444 = vunpack.c.h.b16 %v863
        %v2445 = vunpack.c.l.b16 %v864
        %v2446 = vunpack.c.h.b16 %v864
        %v2447 = vunpack.c.l.b16 %v865
        %v2448 = vunpack.c.h.b16 %v865
        %v2449 = vunpack.c.l.b16 %v866
        %v2450 = vunpack.c.h.b16 %v866
        %v2451 = vunpack.c.l.b16 %v867
        %v2452 = vunpack.c.h.b16 %v867
        %v2453 = vunpack.c.l.b16 %v868
        %v2454 = vunpack.c.h.b16 %v868
        %v2455 = vunpack.c.l.b16 %v869
        %v2456 = vunpack.c.h.b16 %v869
        %v2457 = vunpack.c.l.b16 %v870
        %v2458 = vunpack.c.h.b16 %v870
        %v2459 = vunpack.c.l.b16 %v871
        %v2460 = vunpack.c.h.b16 %v871
        %v2461 = vunpack.c.l.b16 %v872
        %v2462 = vunpack.c.h.b16 %v872
        %v2463 = vunpack.c.l.b16 %v873
        %v2464 = vunpack.c.h.b16 %v873
        %v2465 = vunpack.c.l.b16 %v874
        %v2466 = vunpack.c.h.b16 %v874
        %v2467 = vunpack.c.l.b16 %v875
        %v2468 = vunpack.c.h.b16 %v875
        %v2469 = vunpack.c.l.b16 %v876
        %v2470 = vunpack.c.h.b16 %v876
        %v2471 = vunpack.c.l.b16 %v877
        %v2472 = vunpack.c.h.b16 %v877
        %v2473 = vunpack.c.l.b16 %v878
        %v2474 = vunpack.c.h.b16 %v878
        %v2475 = vunpack.c.l.b16 %v879
        %v2476 = vunpack.c.h.b16 %v879
        %v2477 = vunpack.c.l.b16 %v880
        %v2478 = vunpack.c.h.b16 %v880
        %v2479 = vunpack.c.l.b16 %v881
        %v2480 = vunpack.c.h.b16 %v881
        %v2481 = vunpack.c.l.b16 %v882
        %v2482 = vunpack.c.h.b16 %v882
        %v2483 = vunpack.c.l.b16 %v883
        %v2484 = vunpack.c.h.b16 %v883
        %v2485 = vunpack.c.l.b16 %v884
        %v2486 = vunpack.c.h.b16 %v884
        %v2487 = vunpack.c.l.b16 %v885
        %v2488 = vunpack.c.h.b16 %v885
        %v2489 = vunpack.c.l.b16 %v886
        %v2490 = vunpack.c.h.b16 %v886
        %v2491 = vunpack.c.l.b16 %v887
        %v2492 = vunpack.c.h.b16 %v887
        %v2493 = vunpack.c.l.b16 %v888
        %v2494 = vunpack.c.h.b16 %v888
        %v2495 = vunpack.c.l.b16 %v889
        %v2496 = vunpack.c.h.b16 %v889
        %v2497 = vunpack.c.l.b16 %v890
        %v2498 = vunpack.c.h.b16 %v890
        %v2499 = vunpack.c.l.b16 %v891
        %v2500 = vunpack.c.h.b16 %v891
        %v2501 = vunpack.c.l.b16 %v892
        %v2502 = vunpack.c.h.b16 %v892
        %v2503 = vunpack.c.l.b16 %v893
        %v2504 = vunpack.c.h.b16 %v893
        %v2505 = vunpack.c.l.b16 %v894
        %v2506 = vunpack.c.h.b16 %v894
        %v2507 = vunpack.c.l.b16 %v895
        %v2508 = vunpack.c.h.b16 %v895
        %v2509 = vunpack.c.l.b16 %v896
        %v2510 = vunpack.c.h.b16 %v896
        %v2511 = vunpack.c.l.b16 %v897
        %v2512 = vunpack.c.h.b16 %v897
        %v2513 = vunpack.c.l.b16 %v898
        %v2514 = vunpack.c.h.b16 %v898
        %v2515 = vunpack.c.l.b16 %v899
        %v2516 = vunpack.c.h.b16 %v899
        %v2517 = vunpack.c.l.b16 %v900
        %v2518 = vunpack.c.h.b16 %v900
        %v2519 = vunpack.c.l.b16 %v901
        %v2520 = vunpack.c.h.b16 %v901
        %v2521 = vunpack.c.l.b16 %v902
        %v2522 = vunpack.c.h.b16 %v902
        %v2523 = vunpack.c.l.b16 %v903
        %v2524 = vunpack.c.h.b16 %v903
        %v2525 = vunpack.c.l.b16 %v904
        %v2526 = vunpack.c.h.b16 %v904
        %v2527 = vunpack.c.l.b16 %v905
        %v2528 = vunpack.c.h.b16 %v905
        %v2529 = vunpack.c.l.b16 %v906
        %v2530 = vunpack.c.h.b16 %v906
        %v2531 = vunpack.c.l.b16 %v907
        %v2532 = vunpack.c.h.b16 %v907
        %v2533 = vunpack.c.l.b16 %v908
        %v2534 = vunpack.c.h.b16 %v908
        %v2535 = vunpack.c.l.b16 %v909
        %v2536 = vunpack.c.h.b16 %v909
        %v2537 = vunpack.c.l.b16 %v910
        %v2538 = vunpack.c.h.b16 %v910
        %v2539 = vunpack.c.l.b16 %v911
        %v2540 = vunpack.c.h.b16 %v911
        %v2541 = vunpack.c.l.b16 %v912
        %v2542 = vunpack.c.h.b16 %v912
        %v2543 = vunpack.c.l.b16 %v913
        %v2544 = vunpack.c.h.b16 %v913
        %v2545 = vunpack.c.l.b16 %v914
        %v2546 = vunpack.c.h.b16 %v914
        %v2547 = vunpack.c.l.b16 %v915
        %v2548 = vunpack.c.h.b16 %v915
        %v2549 = vunpack.c.l.b16 %v916
        %v2550 = vunpack.c.h.b16 %v916
        %v2551 = vunpack.c.l.b16 %v917
        %v2552 = vunpack.c.h.b16 %v917
        %v2553 = vunpack.c.l.b16 %v918
        %v2554 = vunpack.c.h.b16 %v918
        %v2555 = vunpack.c.l.b16 %v919
        %v2556 = vunpack.c.h.b16 %v919
        %v2557 = vunpack.c.l.b16 %v920
        %v2558 = vunpack.c.h.b16 %v920
        %v2559 = vunpack.c.l.b16 %v921
        %v2560 = vunpack.c.h.b16 %v921
        %v2561 = vunpack.c.l.b16 %v922
        %v2562 = vunpack.c.h.b16 %v922
        %v2563 = vunpack.c.l.b16 %v923
        %v2564 = vunpack.c.h.b16 %v923
        %v2565 = vunpack.c.l.b16 %v924
        %v2566 = vunpack.c.h.b16 %v924
        %v2567 = vunpack.c.l.b16 %v925
        %v2568 = vunpack.c.h.b16 %v925
        %v2569 = vunpack.c.l.b16 %v926
        %v2570 = vunpack.c.h.b16 %v926
        %v2571 = vunpack.c.l.b16 %v927
        %v2572 = vunpack.c.h.b16 %v927
        %v2573 = vunpack.c.l.b16 %v928
        %v2574 = vunpack.c.h.b16 %v928
        %v2575 = vunpack.c.l.b16 %v929
        %v2576 = vunpack.c.h.b16 %v929
        %v2577 = vunpack.c.l.b16 %v930
        %v2578 = vunpack.c.h.b16 %v930
        %v2579 = vunpack.c.l.b16 %v931
        %v2580 = vunpack.c.h.b16 %v931
        %v2581 = vunpack.c.l.b16 %v932
        %v2582 = vunpack.c.h.b16 %v932
        %v2583 = vunpack.c.l.b16 %v933
        %v2584 = vunpack.c.h.b16 %v933
        %v2585 = vunpack.c.l.b16 %v934
        %v2586 = vunpack.c.h.b16 %v934
        %v2587 = vunpack.c.l.b16 %v935
        %v2588 = vunpack.c.h.b16 %v935
        %v2589 = vunpack.c.l.b16 %v936
        %v2590 = vunpack.c.h.b16 %v936
        %v2591 = vunpack.c.l.b16 %v937
        %v2592 = vunpack.c.h.b16 %v937
        %v2593 = vunpack.c.l.b16 %v938
        %v2594 = vunpack.c.h.b16 %v938
        %v2595 = vunpack.c.l.b16 %v939
        %v2596 = vunpack.c.h.b16 %v939
        %v2597 = vunpack.c.l.b16 %v940
        %v2598 = vunpack.c.h.b16 %v940
        %v2599 = vunpack.c.l.b16 %v941
        %v2600 = vunpack.c.h.b16 %v941
        %v2601 = vunpack.c.l.b16 %v942
        %v2602 = vunpack.c.h.b16 %v942
        %v2603 = vunpack.c.l.b16 %v943
        %v2604 = vunpack.c.h.b16 %v943
        %v2605 = vunpack.c.l.b16 %v944
        %v2606 = vunpack.c.h.b16 %v944
        %v2607 = vunpack.c.l.b16 %v945
        %v2608 = vunpack.c.h.b16 %v945
        %v2609 = vunpack.c.l.b16 %v946
        %v2610 = vunpack.c.h.b16 %v946
        %v2611 = vunpack.c.l.b16 %v947
        %v2612 = vunpack.c.h.b16 %v947
        %v2613 = vunpack.c.l.b16 %v948
        %v2614 = vunpack.c.h.b16 %v948
        %v2615 = vunpack.c.l.b16 %v949
        %v2616 = vunpack.c.h.b16 %v949
        %v2617 = vunpack.c.l.b16 %v950
        %v2618 = vunpack.c.h.b16 %v950
        %v2619 = vunpack.c.l.b16 %v951
        %v2620 = vunpack.c.h.b16 %v951
        %v2621 = vunpack.c.l.b16 %v952
        %v2622 = vunpack.c.h.b16 %v952
        %v2623 = vunpack.c.l.b16 %v953
        %v2624 = vunpack.c.h.b16 %v953
        %v2625 = vunpack.c.l.b16 %v954
        %v2626 = vunpack.c.h.b16 %v954
        %v2627 = vunpack.c.l.b16 %v955
        %v2628 = vunpack.c.h.b16 %v955
        %v2629 = vunpack.c.l.b16 %v956
        %v2630 = vunpack.c.h.b16 %v956
        %v2631 = vpack.c.b16 %v1611, %v1607
        %v2632 = vpack.c.b16 %v1612, %v1608
        %v2633 = vpack.c.b16 %v1613, %v1609
        %v2634 = vpack.c.b16 %v1614, %v1610
        %v2635 = vpack.c.b16 %v1619, %v1615
        %v2636 = vpack.c.b16 %v1620, %v1616
        %v2637 = vpack.c.b16 %v1621, %v1617
        %v2638 = vpack.c.b16 %v1622, %v1618
        %v2639 = vpack.c.b16 %v1627, %v1623
        %v2640 = vpack.c.b16 %v1628, %v1624
        %v2641 = vpack.c.b16 %v1629, %v1625
        %v2642 = vpack.c.b16 %v1630, %v1626
        %v2643 = vpack.c.b16 %v1635, %v1631
        %v2644 = vpack.c.b16 %v1636, %v1632
        %v2645 = vpack.c.b16 %v1637, %v1633
        %v2646 = vpack.c.b16 %v1638, %v1634
        %v2647 = vpack.c.b16 %v1643, %v1639
        %v2648 = vpack.c.b16 %v1644, %v1640
        %v2649 = vpack.c.b16 %v1645, %v1641
        %v2650 = vpack.c.b16 %v1646, %v1642
        %v2651 = vpack.c.b16 %v1651, %v1647
        %v2652 = vpack.c.b16 %v1652, %v1648
        %v2653 = vpack.c.b16 %v1653, %v1649
        %v2654 = vpack.c.b16 %v1654, %v1650
        %v2655 = vpack.c.b16 %v1659, %v1655
        %v2656 = vpack.c.b16 %v1660, %v1656
        %v2657 = vpack.c.b16 %v1661, %v1657
        %v2658 = vpack.c.b16 %v1662, %v1658
        %v2659 = vpack.c.b16 %v1667, %v1663
        %v2660 = vpack.c.b16 %v1668, %v1664
        %v2661 = vpack.c.b16 %v1669, %v1665
        %v2662 = vpack.c.b16 %v1670, %v1666
        %v2663 = vpack.c.b16 %v1675, %v1671
        %v2664 = vpack.c.b16 %v1676, %v1672
        %v2665 = vpack.c.b16 %v1677, %v1673
        %v2666 = vpack.c.b16 %v1678, %v1674
        %v2667 = vpack.c.b16 %v1683, %v1679
        %v2668 = vpack.c.b16 %v1684, %v1680
        %v2669 = vpack.c.b16 %v1685, %v1681
        %v2670 = vpack.c.b16 %v1686, %v1682
        %v2671 = vpack.c.b16 %v1691, %v1687
        %v2672 = vpack.c.b16 %v1692, %v1688
        %v2673 = vpack.c.b16 %v1693, %v1689
        %v2674 = vpack.c.b16 %v1694, %v1690
        %v2675 = vpack.c.b16 %v1699, %v1695
        %v2676 = vpack.c.b16 %v1700, %v1696
        %v2677 = vpack.c.b16 %v1701, %v1697
        %v2678 = vpack.c.b16 %v1702, %v1698
        %v2679 = vpack.c.b16 %v1707, %v1703
        %v2680 = vpack.c.b16 %v1708, %v1704
        %v2681 = vpack.c.b16 %v1709, %v1705
        %v2682 = vpack.c.b16 %v1710, %v1706
        %v2683 = vpack.c.b16 %v1715, %v1711
        %v2684 = vpack.c.b16 %v1716, %v1712
        %v2685 = vpack.c.b16 %v1717, %v1713
        %v2686 = vpack.c.b16 %v1718, %v1714
        %v2687 = vpack.c.b16 %v1723, %v1719
        %v2688 = vpack.c.b16 %v1724, %v1720
        %v2689 = vpack.c.b16 %v1725, %v1721
        %v2690 = vpack.c.b16 %v1726, %v1722
        %v2691 = vpack.c.b16 %v1731, %v1727
        %v2692 = vpack.c.b16 %v1732, %v1728
        %v2693 = vpack.c.b16 %v1733, %v1729
        %v2694 = vpack.c.b16 %v1734, %v1730
        %v2695 = vpack.c.b16 %v1739, %v1735
        %v2696 = vpack.c.b16 %v1740, %v1736
        %v2697 = vpack.c.b16 %v1741, %v1737
        %v2698 = vpack.c.b16 %v1742, %v1738
        %v2699 = vpack.c.b16 %v1747, %v1743
        %v2700 = vpack.c.b16 %v1748, %v1744
        %v2701 = vpack.c.b16 %v1749, %v1745
        %v2702 = vpack.c.b16 %v1750, %v1746
        %v2703 = vpack.c.b16 %v1755, %v1751
        %v2704 = vpack.c.b16 %v1756, %v1752
        %v2705 = vpack.c.b16 %v1757, %v1753
        %v2706 = vpack.c.b16 %v1758, %v1754
        %v2707 = vpack.c.b16 %v1763, %v1759
        %v2708 = vpack.c.b16 %v1764, %v1760
        %v2709 = vpack.c.b16 %v1765, %v1761
        %v2710 = vpack.c.b16 %v1766, %v1762
        %v2711 = vpack.c.b16 %v1771, %v1767
        %v2712 = vpack.c.b16 %v1772, %v1768
        %v2713 = vpack.c.b16 %v1773, %v1769
        %v2714 = vpack.c.b16 %v1774, %v1770
        %v2715 = vpack.c.b16 %v1779, %v1775
        %v2716 = vpack.c.b16 %v1780, %v1776
        %v2717 = vpack.c.b16 %v1781, %v1777
        %v2718 = vpack.c.b16 %v1782, %v1778
        %v2719 = vpack.c.b16 %v1787, %v1783
        %v2720 = vpack.c.b16 %v1788, %v1784
        %v2721 = vpack.c.b16 %v1789, %v1785
        %v2722 = vpack.c.b16 %v1790, %v1786
        %v2723 = vpack.c.b16 %v1795, %v1791
        %v2724 = vpack.c.b16 %v1796, %v1792
        %v2725 = vpack.c.b16 %v1797, %v1793
        %v2726 = vpack.c.b16 %v1798, %v1794
        %v2727 = vpack.c.b16 %v1803, %v1799
        %v2728 = vpack.c.b16 %v1804, %v1800
        %v2729 = vpack.c.b16 %v1805, %v1801
        %v2730 = vpack.c.b16 %v1806, %v1802
        %v2731 = vpack.c.b16 %v1811, %v1807
        %v2732 = vpack.c.b16 %v1812, %v1808
        %v2733 = vpack.c.b16 %v1813, %v1809
        %v2734 = vpack.c.b16 %v1814, %v1810
        %v2735 = vpack.c.b16 %v1819, %v1815
        %v2736 = vpack.c.b16 %v1820, %v1816
        %v2737 = vpack.c.b16 %v1821, %v1817
        %v2738 = vpack.c.b16 %v1822, %v1818
        %v2739 = vpack.c.b16 %v1827, %v1823
        %v2740 = vpack.c.b16 %v1828, %v1824
        %v2741 = vpack.c.b16 %v1829, %v1825
        %v2742 = vpack.c.b16 %v1830, %v1826
        %v2743 = vpack.c.b16 %v1835, %v1831
        %v2744 = vpack.c.b16 %v1836, %v1832
        %v2745 = vpack.c.b16 %v1837, %v1833
        %v2746 = vpack.c.b16 %v1838, %v1834
        %v2747 = vpack.c.b16 %v1843, %v1839
        %v2748 = vpack.c.b16 %v1844, %v1840
        %v2749 = vpack.c.b16 %v1845, %v1841
        %v2750 = vpack.c.b16 %v1846, %v1842
        %v2751 = vpack.c.b16 %v1851, %v1847
        %v2752 = vpack.c.b16 %v1852, %v1848
        %v2753 = vpack.c.b16 %v1853, %v1849
        %v2754 = vpack.c.b16 %v1854, %v1850
        %v2755 = vpack.c.b16 %v1859, %v1855
        %v2756 = vpack.c.b16 %v1860, %v1856
        %v2757 = vpack.c.b16 %v1861, %v1857
        %v2758 = vpack.c.b16 %v1862, %v1858
        %v2759 = vpack.c.b16 %v1867, %v1863
        %v2760 = vpack.c.b16 %v1868, %v1864
        %v2761 = vpack.c.b16 %v1869, %v1865
        %v2762 = vpack.c.b16 %v1870, %v1866
        %v2763 = vpack.c.b16 %v1875, %v1871
        %v2764 = vpack.c.b16 %v1876, %v1872
        %v2765 = vpack.c.b16 %v1877, %v1873
        %v2766 = vpack.c.b16 %v1878, %v1874
        %v2767 = vpack.c.b16 %v1883, %v1879
        %v2768 = vpack.c.b16 %v1884, %v1880
        %v2769 = vpack.c.b16 %v1885, %v1881
        %v2770 = vpack.c.b16 %v1886, %v1882
        %v2771 = vpack.c.b16 %v1891, %v1887
        %v2772 = vpack.c.b16 %v1892, %v1888
        %v2773 = vpack.c.b16 %v1893, %v1889
        %v2774 = vpack.c.b16 %v1894, %v1890
        %v2775 = vpack.c.b16 %v1899, %v1895
        %v2776 = vpack.c.b16 %v1900, %v1896
        %v2777 = vpack.c.b16 %v1901, %v1897
        %v2778 = vpack.c.b16 %v1902, %v1898
        %v2779 = vpack.c.b16 %v1907, %v1903
        %v2780 = vpack.c.b16 %v1908, %v1904
        %v2781 = vpack.c.b16 %v1909, %v1905
        %v2782 = vpack.c.b16 %v1910, %v1906
        %v2783 = vpack.c.b16 %v1915, %v1911
        %v2784 = vpack.c.b16 %v1916, %v1912
        %v2785 = vpack.c.b16 %v1917, %v1913
        %v2786 = vpack.c.b16 %v1918, %v1914
        %v2787 = vpack.c.b16 %v1923, %v1919
        %v2788 = vpack.c.b16 %v1924, %v1920
        %v2789 = vpack.c.b16 %v1925, %v1921
        %v2790 = vpack.c.b16 %v1926, %v1922
        %v2791 = vpack.c.b16 %v1931, %v1927
        %v2792 = vpack.c.b16 %v1932, %v1928
        %v2793 = vpack.c.b16 %v1933, %v1929
        %v2794 = vpack.c.b16 %v1934, %v1930
        %v2795 = vpack.c.b16 %v1939, %v1935
        %v2796 = vpack.c.b16 %v1940, %v1936
        %v2797 = vpack.c.b16 %v1941, %v1937
        %v2798 = vpack.c.b16 %v1942, %v1938
        %v2799 = vpack.c.b16 %v1947, %v1943
        %v2800 = vpack.c.b16 %v1948, %v1944
        %v2801 = vpack.c.b16 %v1949, %v1945
        %v2802 = vpack.c.b16 %v1950, %v1946
        %v2803 = vpack.c.b16 %v1955, %v1951
        %v2804 = vpack.c.b16 %v1956, %v1952
        %v2805 = vpack.c.b16 %v1957, %v1953
        %v2806 = vpack.c.b16 %v1958, %v1954
        %v2807 = vpack.c.b16 %v1963, %v1959
        %v2808 = vpack.c.b16 %v1964, %v1960
        %v2809 = vpack.c.b16 %v1965, %v1961
        %v2810 = vpack.c.b16 %v1966, %v1962
        %v2811 = vpack.c.b16 %v1971, %v1967
        %v2812 = vpack.c.b16 %v1972, %v1968
        %v2813 = vpack.c.b16 %v1973, %v1969
        %v2814 = vpack.c.b16 %v1974, %v1970
        %v2815 = vpack.c.b16 %v1979, %v1975
        %v2816 = vpack.c.b16 %v1980, %v1976
        %v2817 = vpack.c.b16 %v1981, %v1977
        %v2818 = vpack.c.b16 %v1982, %v1978
        %v2819 = vpack.c.b16 %v1987, %v1983
        %v2820 = vpack.c.b16 %v1988, %v1984
        %v2821 = vpack.c.b16 %v1989, %v1985
        %v2822 = vpack.c.b16 %v1990, %v1986
        %v2823 = vpack.c.b16 %v1995, %v1991
        %v2824 = vpack.c.b16 %v1996, %v1992
        %v2825 = vpack.c.b16 %v1997, %v1993
        %v2826 = vpack.c.b16 %v1998, %v1994
        %v2827 = vpack.c.b16 %v2003, %v1999
        %v2828 = vpack.c.b16 %v2004, %v2000
        %v2829 = vpack.c.b16 %v2005, %v2001
        %v2830 = vpack.c.b16 %v2006, %v2002
        %v2831 = vpack.c.b16 %v2011, %v2007
        %v2832 = vpack.c.b16 %v2012, %v2008
        %v2833 = vpack.c.b16 %v2013, %v2009
        %v2834 = vpack.c.b16 %v2014, %v2010
        %v2835 = vpack.c.b16 %v2019, %v2015
        %v2836 = vpack.c.b16 %v2020, %v2016
        %v2837 = vpack.c.b16 %v2021, %v2017
        %v2838 = vpack.c.b16 %v2022, %v2018
        %v2839 = vpack.c.b16 %v2027, %v2023
        %v2840 = vpack.c.b16 %v2028, %v2024
        %v2841 = vpack.c.b16 %v2029, %v2025
        %v2842 = vpack.c.b16 %v2030, %v2026
        %v2843 = vpack.c.b16 %v2035, %v2031
        %v2844 = vpack.c.b16 %v2036, %v2032
        %v2845 = vpack.c.b16 %v2037, %v2033
        %v2846 = vpack.c.b16 %v2038, %v2034
        %v2847 = vpack.c.b16 %v2043, %v2039
        %v2848 = vpack.c.b16 %v2044, %v2040
        %v2849 = vpack.c.b16 %v2045, %v2041
        %v2850 = vpack.c.b16 %v2046, %v2042
        %v2851 = vpack.c.b16 %v2051, %v2047
        %v2852 = vpack.c.b16 %v2052, %v2048
        %v2853 = vpack.c.b16 %v2053, %v2049
        %v2854 = vpack.c.b16 %v2054, %v2050
        %v2855 = vpack.c.b16 %v2059, %v2055
        %v2856 = vpack.c.b16 %v2060, %v2056
        %v2857 = vpack.c.b16 %v2061, %v2057
        %v2858 = vpack.c.b16 %v2062, %v2058
        %v2859 = vpack.c.b16 %v2067, %v2063
        %v2860 = vpack.c.b16 %v2068, %v2064
        %v2861 = vpack.c.b16 %v2069, %v2065
        %v2862 = vpack.c.b16 %v2070, %v2066
        %v2863 = vpack.c.b16 %v2075, %v2071
        %v2864 = vpack.c.b16 %v2076, %v2072
        %v2865 = vpack.c.b16 %v2077, %v2073
        %v2866 = vpack.c.b16 %v2078, %v2074
        %v2867 = vpack.c.b16 %v2083, %v2079
        %v2868 = vpack.c.b16 %v2084, %v2080
        %v2869 = vpack.c.b16 %v2085, %v2081
        %v2870 = vpack.c.b16 %v2086, %v2082
        %v2871 = vpack.c.b16 %v2091, %v2087
        %v2872 = vpack.c.b16 %v2092, %v2088
        %v2873 = vpack.c.b16 %v2093, %v2089
        %v2874 = vpack.c.b16 %v2094, %v2090
        %v2875 = vpack.c.b16 %v2099, %v2095
        %v2876 = vpack.c.b16 %v2100, %v2096
        %v2877 = vpack.c.b16 %v2101, %v2097
        %v2878 = vpack.c.b16 %v2102, %v2098
        %v2879 = vpack.c.b16 %v2107, %v2103
        %v2880 = vpack.c.b16 %v2108, %v2104
        %v2881 = vpack.c.b16 %v2109, %v2105
        %v2882 = vpack.c.b16 %v2110, %v2106
        %v2883 = vpack.c.b16 %v2115, %v2111
        %v2884 = vpack.c.b16 %v2116, %v2112
        %v2885 = vpack.c.b16 %v2117, %v2113
        %v2886 = vpack.c.b16 %v2118, %v2114
        %v2887 = vpack.c.b16 %v2123, %v2119
        %v2888 = vpack.c.b16 %v2124, %v2120
        %v2889 = vpack.c.b16 %v2125, %v2121
        %v2890 = vpack.c.b16 %v2126, %v2122
        %v2891 = vpack.c.b16 %v2131, %v2127
        %v2892 = vpack.c.b16 %v2132, %v2128
        %v2893 = vpack.c.b16 %v2133, %v2129
        %v2894 = vpack.c.b16 %v2134, %v2130
        %v2895 = vpack.c.b16 %v2139, %v2135
        %v2896 = vpack.c.b16 %v2140, %v2136
        %v2897 = vpack.c.b16 %v2141, %v2137
        %v2898 = vpack.c.b16 %v2142, %v2138
        %v2899 = vpack.c.b16 %v2147, %v2143
        %v2900 = vpack.c.b16 %v2148, %v2144
        %v2901 = vpack.c.b16 %v2149, %v2145
        %v2902 = vpack.c.b16 %v2150, %v2146
        %v2903 = vpack.c.b16 %v2155, %v2151
        %v2904 = vpack.c.b16 %v2156, %v2152
        %v2905 = vpack.c.b16 %v2157, %v2153
        %v2906 = vpack.c.b16 %v2158, %v2154
        %v2907 = vpack.c.b16 %v2163, %v2159
        %v2908 = vpack.c.b16 %v2164, %v2160
        %v2909 = vpack.c.b16 %v2165, %v2161
        %v2910 = vpack.c.b16 %v2166, %v2162
        %v2911 = vpack.c.b16 %v2171, %v2167
        %v2912 = vpack.c.b16 %v2172, %v2168
        %v2913 = vpack.c.b16 %v2173, %v2169
        %v2914 = vpack.c.b16 %v2174, %v2170
        %v2915 = vpack.c.b16 %v2179, %v2175
        %v2916 = vpack.c.b16 %v2180, %v2176
        %v2917 = vpack.c.b16 %v2181, %v2177
        %v2918 = vpack.c.b16 %v2182, %v2178
        %v2919 = vpack.c.b16 %v2187, %v2183
        %v2920 = vpack.c.b16 %v2188, %v2184
        %v2921 = vpack.c.b16 %v2189, %v2185
        %v2922 = vpack.c.b16 %v2190, %v2186
        %v2923 = vpack.c.b16 %v2195, %v2191
        %v2924 = vpack.c.b16 %v2196, %v2192
        %v2925 = vpack.c.b16 %v2197, %v2193
        %v2926 = vpack.c.b16 %v2198, %v2194
        %v2927 = vpack.c.b16 %v2203, %v2199
        %v2928 = vpack.c.b16 %v2204, %v2200
        %v2929 = vpack.c.b16 %v2205, %v2201
        %v2930 = vpack.c.b16 %v2206, %v2202
        %v2931 = vpack.c.b16 %v2211, %v2207
        %v2932 = vpack.c.b16 %v2212, %v2208
        %v2933 = vpack.c.b16 %v2213, %v2209
        %v2934 = vpack.c.b16 %v2214, %v2210
        %v2935 = vpack.c.b16 %v2219, %v2215
        %v2936 = vpack.c.b16 %v2220, %v2216
        %v2937 = vpack.c.b16 %v2221, %v2217
        %v2938 = vpack.c.b16 %v2222, %v2218
        %v2939 = vpack.c.b16 %v2227, %v2223
        %v2940 = vpack.c.b16 %v2228, %v2224
        %v2941 = vpack.c.b16 %v2229, %v2225
        %v2942 = vpack.c.b16 %v2230, %v2226
        %v2943 = vpack.c.b16 %v2235, %v2231
        %v2944 = vpack.c.b16 %v2236, %v2232
        %v2945 = vpack.c.b16 %v2237, %v2233
        %v2946 = vpack.c.b16 %v2238, %v2234
        %v2947 = vpack.c.b16 %v2243, %v2239
        %v2948 = vpack.c.b16 %v2244, %v2240
        %v2949 = vpack.c.b16 %v2245, %v2241
        %v2950 = vpack.c.b16 %v2246, %v2242
        %v2951 = vpack.c.b16 %v2251, %v2247
        %v2952 = vpack.c.b16 %v2252, %v2248
        %v2953 = vpack.c.b16 %v2253, %v2249
        %v2954 = vpack.c.b16 %v2254, %v2250
        %v2955 = vpack.c.b16 %v2259, %v2255
        %v2956 = vpack.c.b16 %v2260, %v2256
        %v2957 = vpack.c.b16 %v2261, %v2257
        %v2958 = vpack.c.b16 %v2262, %v2258
        %v2959 = vpack.c.b16 %v2267, %v2263
        %v2960 = vpack.c.b16 %v2268, %v2264
        %v2961 = vpack.c.b16 %v2269, %v2265
        %v2962 = vpack.c.b16 %v2270, %v2266
        %v2963 = vpack.c.b16 %v2275, %v2271
        %v2964 = vpack.c.b16 %v2276, %v2272
        %v2965 = vpack.c.b16 %v2277, %v2273
        %v2966 = vpack.c.b16 %v2278, %v2274
        %v2967 = vpack.c.b16 %v2283, %v2279
        %v2968 = vpack.c.b16 %v2284, %v2280
        %v2969 = vpack.c.b16 %v2285, %v2281
        %v2970 = vpack.c.b16 %v2286, %v2282
        %v2971 = vpack.c.b16 %v2291, %v2287
        %v2972 = vpack.c.b16 %v2292, %v2288
        %v2973 = vpack.c.b16 %v2293, %v2289
        %v2974 = vpack.c.b16 %v2294, %v2290
        %v2975 = vpack.c.b16 %v2299, %v2295
        %v2976 = vpack.c.b16 %v2300, %v2296
        %v2977 = vpack.c.b16 %v2301, %v2297
        %v2978 = vpack.c.b16 %v2302, %v2298
        %v2979 = vpack.c.b16 %v2307, %v2303
        %v2980 = vpack.c.b16 %v2308, %v2304
        %v2981 = vpack.c.b16 %v2309, %v2305
        %v2982 = vpack.c.b16 %v2310, %v2306
        %v2983 = vpack.c.b16 %v2315, %v2311
        %v2984 = vpack.c.b16 %v2316, %v2312
        %v2985 = vpack.c.b16 %v2317, %v2313
        %v2986 = vpack.c.b16 %v2318, %v2314
        %v2987 = vpack.c.b16 %v2323, %v2319
        %v2988 = vpack.c.b16 %v2324, %v2320
        %v2989 = vpack.c.b16 %v2325, %v2321
        %v2990 = vpack.c.b16 %v2326, %v2322
        %v2991 = vpack.c.b16 %v2331, %v2327
        %v2992 = vpack.c.b16 %v2332, %v2328
        %v2993 = vpack.c.b16 %v2333, %v2329
        %v2994 = vpack.c.b16 %v2334, %v2330
        %v2995 = vpack.c.b16 %v2339, %v2335
        %v2996 = vpack.c.b16 %v2340, %v2336
        %v2997 = vpack.c.b16 %v2341, %v2337
        %v2998 = vpack.c.b16 %v2342, %v2338
        %v2999 = vpack.c.b16 %v2347, %v2343
        %v3000 = vpack.c.b16 %v2348, %v2344
        %v3001 = vpack.c.b16 %v2349, %v2345
        %v3002 = vpack.c.b16 %v2350, %v2346
        %v3003 = vpack.c.b16 %v2355, %v2351
        %v3004 = vpack.c.b16 %v2356, %v2352
        %v3005 = vpack.c.b16 %v2357, %v2353
        %v3006 = vpack.c.b16 %v2358, %v2354
        %v3007 = vpack.c.b16 %v2363, %v2359
        %v3008 = vpack.c.b16 %v2364, %v2360
        %v3009 = vpack.c.b16 %v2365, %v2361
        %v3010 = vpack.c.b16 %v2366, %v2362
        %v3011 = vpack.c.b16 %v2371, %v2367
        %v3012 = vpack.c.b16 %v2372, %v2368
        %v3013 = vpack.c.b16 %v2373, %v2369
        %v3014 = vpack.c.b16 %v2374, %v2370
        %v3015 = vpack.c.b16 %v2379, %v2375
        %v3016 = vpack.c.b16 %v2380, %v2376
        %v3017 = vpack.c.b16 %v2381, %v2377
        %v3018 = vpack.c.b16 %v2382, %v2378
        %v3019 = vpack.c.b16 %v2387, %v2383
        %v3020 = vpack.c.b16 %v2388, %v2384
        %v3021 = vpack.c.b16 %v2389, %v2385
        %v3022 = vpack.c.b16 %v2390, %v2386
        %v3023 = vpack.c.b16 %v2395, %v2391
        %v3024 = vpack.c.b16 %v2396, %v2392
        %v3025 = vpack.c.b16 %v2397, %v2393
        %v3026 = vpack.c.b16 %v2398, %v2394
        %v3027 = vpack.c.b16 %v2403, %v2399
        %v3028 = vpack.c.b16 %v2404, %v2400
        %v3029 = vpack.c.b16 %v2405, %v2401
        %v3030 = vpack.c.b16 %v2406, %v2402
        %v3031 = vpack.c.b16 %v2411, %v2407
        %v3032 = vpack.c.b16 %v2412, %v2408
        %v3033 = vpack.c.b16 %v2413, %v2409
        %v3034 = vpack.c.b16 %v2414, %v2410
        %v3035 = vpack.c.b16 %v2419, %v2415
        %v3036 = vpack.c.b16 %v2420, %v2416
        %v3037 = vpack.c.b16 %v2421, %v2417
        %v3038 = vpack.c.b16 %v2422, %v2418
        %v3039 = vpack.c.b16 %v2427, %v2423
        %v3040 = vpack.c.b16 %v2428, %v2424
        %v3041 = vpack.c.b16 %v2429, %v2425
        %v3042 = vpack.c.b16 %v2430, %v2426
        %v3043 = vpack.c.b16 %v2435, %v2431
        %v3044 = vpack.c.b16 %v2436, %v2432
        %v3045 = vpack.c.b16 %v2437, %v2433
        %v3046 = vpack.c.b16 %v2438, %v2434
        %v3047 = vpack.c.b16 %v2443, %v2439
        %v3048 = vpack.c.b16 %v2444, %v2440
        %v3049 = vpack.c.b16 %v2445, %v2441
        %v3050 = vpack.c.b16 %v2446, %v2442
        %v3051 = vpack.c.b16 %v2451, %v2447
        %v3052 = vpack.c.b16 %v2452, %v2448
        %v3053 = vpack.c.b16 %v2453, %v2449
        %v3054 = vpack.c.b16 %v2454, %v2450
        %v3055 = vpack.c.b16 %v2459, %v2455
        %v3056 = vpack.c.b16 %v2460, %v2456
        %v3057 = vpack.c.b16 %v2461, %v2457
        %v3058 = vpack.c.b16 %v2462, %v2458
        %v3059 = vpack.c.b16 %v2467, %v2463
        %v3060 = vpack.c.b16 %v2468, %v2464
        %v3061 = vpack.c.b16 %v2469, %v2465
        %v3062 = vpack.c.b16 %v2470, %v2466
        %v3063 = vpack.c.b16 %v2475, %v2471
        %v3064 = vpack.c.b16 %v2476, %v2472
        %v3065 = vpack.c.b16 %v2477, %v2473
        %v3066 = vpack.c.b16 %v2478, %v2474
        %v3067 = vpack.c.b16 %v2483, %v2479
        %v3068 = vpack.c.b16 %v2484, %v2480
        %v3069 = vpack.c.b16 %v2485, %v2481
        %v3070 = vpack.c.b16 %v2486, %v2482
        %v3071 = vpack.c.b16 %v2491, %v2487
        %v3072 = vpack.c.b16 %v2492, %v2488
        %v3073 = vpack.c.b16 %v2493, %v2489
        %v3074 = vpack.c.b16 %v2494, %v2490
        %v3075 = vpack.c.b16 %v2499, %v2495
        %v3076 = vpack.c.b16 %v2500, %v2496
        %v3077 = vpack.c.b16 %v2501, %v2497
        %v3078 = vpack.c.b16 %v2502, %v2498
        %v3079 = vpack.c.b16 %v2507, %v2503
        %v3080 = vpack.c.b16 %v2508, %v2504
        %v3081 = vpack.c.b16 %v2509, %v2505
        %v3082 = vpack.c.b16 %v2510, %v2506
        %v3083 = vpack.c.b16 %v2515, %v2511
        %v3084 = vpack.c.b16 %v2516, %v2512
        %v3085 = vpack.c.b16 %v2517, %v2513
        %v3086 = vpack.c.b16 %v2518, %v2514
        %v3087 = vpack.c.b16 %v2523, %v2519
        %v3088 = vpack.c.b16 %v2524, %v2520
        %v3089 = vpack.c.b16 %v2525, %v2521
        %v3090 = vpack.c.b16 %v2526, %v2522
        %v3091 = vpack.c.b16 %v2531, %v2527
        %v3092 = vpack.c.b16 %v2532, %v2528
        %v3093 = vpack.c.b16 %v2533, %v2529
        %v3094 = vpack.c.b16 %v2534, %v2530
        %v3095 = vpack.c.b16 %v2539, %v2535
        %v3096 = vpack.c.b16 %v2540, %v2536
        %v3097 = vpack.c.b16 %v2541, %v2537
        %v3098 = vpack.c.b16 %v2542, %v2538
        %v3099 = vpack.c.b16 %v2547, %v2543
        %v3100 = vpack.c.b16 %v2548, %v2544
        %v3101 = vpack.c.b16 %v2549, %v2545
        %v3102 = vpack.c.b16 %v2550, %v2546
        %v3103 = vpack.c.b16 %v2555, %v2551
        %v3104 = vpack.c.b16 %v2556, %v2552
        %v3105 = vpack.c.b16 %v2557, %v2553
        %v3106 = vpack.c.b16 %v2558, %v2554
        %v3107 = vpack.c.b16 %v2563, %v2559
        %v3108 = vpack.c.b16 %v2564, %v2560
        %v3109 = vpack.c.b16 %v2565, %v2561
        %v3110 = vpack.c.b16 %v2566, %v2562
        %v3111 = vpack.c.b16 %v2571, %v2567
        %v3112 = vpack.c.b16 %v2572, %v2568
        %v3113 = vpack.c.b16 %v2573, %v2569
        %v3114 = vpack.c.b16 %v2574, %v2570
        %v3115 = vpack.c.b16 %v2579, %v2575
        %v3116 = vpack.c.b16 %v2580, %v2576
        %v3117 = vpack.c.b16 %v2581, %v2577
        %v3118 = vpack.c.b16 %v2582, %v2578
        %v3119 = vpack.c.b16 %v2587, %v2583
        %v3120 = vpack.c.b16 %v2588, %v2584
        %v3121 = vpack.c.b16 %v2589, %v2585
        %v3122 = vpack.c.b16 %v2590, %v2586
        %v3123 = vpack.c.b16 %v2595, %v2591
        %v3124 = vpack.c.b16 %v2596, %v2592
        %v3125 = vpack.c.b16 %v2597, %v2593
        %v3126 = vpack.c.b16 %v2598, %v2594
        %v3127 = vpack.c.b16 %v2603, %v2599
        %v3128 = vpack.c.b16 %v2604, %v2600
        %v3129 = vpack.c.b16 %v2605, %v2601
        %v3130 = vpack.c.b16 %v2606, %v2602
        %v3131 = vpack.c.b16 %v2611, %v2607
        %v3132 = vpack.c.b16 %v2612, %v2608
        %v3133 = vpack.c.b16 %v2613, %v2609
        %v3134 = vpack.c.b16 %v2614, %v2610
        %v3135 = vpack.c.b16 %v2619, %v2615
        %v3136 = vpack.c.b16 %v2620, %v2616
        %v3137 = vpack.c.b16 %v2621, %v2617
        %v3138 = vpack.c.b16 %v2622, %v2618
        %v3139 = vpack.c.b16 %v2627, %v2623
        %v3140 = vpack.c.b16 %v2628, %v2624
        %v3141 = vpack.c.b16 %v2629, %v2625
        %v3142 = vpack.c.b16 %v2630, %v2626
        %3655 = vmatprep.subr.bf16.mxu0 %v2632
        %3656 = vmatpush1.bf16.msra.mxu0 %v2631
        %3657 = vmatprep.subr.bf16.mxu0 %v2636
        %3658 = vmatpush1.bf16.msra.mxu0 %v2635
        %3659 = vmatprep.subr.bf16.mxu0 %v2640
        %3660 = vmatpush1.bf16.msra.mxu0 %v2639
        %3661 = vmatprep.subr.bf16.mxu0 %v2644
        %3662 = vmatpush1.bf16.msra.mxu0 %v2643
        %3663 = vmatprep.subr.bf16.mxu0 %v2648
        %3664 = vmatpush1.bf16.msra.mxu0 %v2647
        %3665 = vmatprep.subr.bf16.mxu0 %v2652
        %3666 = vmatpush1.bf16.msra.mxu0 %v2651
        %3667 = vmatprep.subr.bf16.mxu0 %v2656
        %3668 = vmatpush1.bf16.msra.mxu0 %v2655
        %3669 = vmatprep.subr.bf16.mxu0 %v2660
        %3670 = vmatpush1.bf16.msra.mxu0 %v2659
        %3671 = vmatprep.subr.bf16.mxu0 %v2664
        %3672 = vmatpush1.bf16.msra.mxu0 %v2663
        %3673 = vmatprep.subr.bf16.mxu0 %v2668
        %3674 = vmatpush1.bf16.msra.mxu0 %v2667
        %3675 = vmatprep.subr.bf16.mxu0 %v2672
        %3676 = vmatpush1.bf16.msra.mxu0 %v2671
        %3677 = vmatprep.subr.bf16.mxu0 %v2676
        %3678 = vmatpush1.bf16.msra.mxu0 %v2675
        %3679 = vmatprep.subr.bf16.mxu0 %v2680
        %3680 = vmatpush1.bf16.msra.mxu0 %v2679
        %3681 = vmatprep.subr.bf16.mxu0 %v2684
        %3682 = vmatpush1.bf16.msra.mxu0 %v2683
        %3683 = vmatprep.subr.bf16.mxu0 %v2688
        %3684 = vmatpush1.bf16.msra.mxu0 %v2687
        %3685 = vmatprep.subr.bf16.mxu0 %v2692
        %3686 = vmatpush1.bf16.msra.mxu0 %v2691
        %3687 = vmatprep.mubr.bf16.mxu0 %v1018
        %3688 = vmatmul.mubr.bf16.gmra.mrb[0].mxu0 %v1004
        %v3689 = vpop.f32.mrb[0].mxu0
        %v3690 = vadd.f32 %v962, %v3689
        %v3691 = vpop.f32.mrb[0].mxu0
        %v3692 = vadd.f32 %v966, %v3691
        %v3693 = vpop.f32.mrb[0].mxu0
        %v3694 = vpop.f32.mrb[0].mxu0
        %3695 = vdwg.mxu0
        %3696 = vmatprep.subr.bf16.mxu0 %v2696
        %3697 = vmatpush1.bf16.msra.mxu0 %v2695
        %3698 = vmatprep.subr.bf16.mxu0 %v2700
        %3699 = vmatpush1.bf16.msra.mxu0 %v2699
        %3700 = vmatprep.subr.bf16.mxu0 %v2704
        %3701 = vmatpush1.bf16.msra.mxu0 %v2703
        %3702 = vmatprep.subr.bf16.mxu0 %v2708
        %3703 = vmatpush1.bf16.msra.mxu0 %v2707
        %3704 = vmatprep.subr.bf16.mxu0 %v2712
        %3705 = vmatpush1.bf16.msra.mxu0 %v2711
        %3706 = vmatprep.subr.bf16.mxu0 %v2716
        %3707 = vmatpush1.bf16.msra.mxu0 %v2715
        %3708 = vmatprep.subr.bf16.mxu0 %v2720
        %3709 = vmatpush1.bf16.msra.mxu0 %v2719
        %3710 = vmatprep.subr.bf16.mxu0 %v2724
        %3711 = vmatpush1.bf16.msra.mxu0 %v2723
        %3712 = vmatprep.subr.bf16.mxu0 %v2728
        %3713 = vmatpush1.bf16.msra.mxu0 %v2727
        %3714 = vmatprep.subr.bf16.mxu0 %v2732
        %3715 = vmatpush1.bf16.msra.mxu0 %v2731
        %3716 = vmatprep.subr.bf16.mxu0 %v2736
        %3717 = vmatpush1.bf16.msra.mxu0 %v2735
        %3718 = vmatprep.subr.bf16.mxu0 %v2740
        %3719 = vmatpush1.bf16.msra.mxu0 %v2739
        %3720 = vmatprep.subr.bf16.mxu0 %v2744
        %3721 = vmatpush1.bf16.msra.mxu0 %v2743
        %3722 = vmatprep.subr.bf16.mxu0 %v2748
        %3723 = vmatpush1.bf16.msra.mxu0 %v2747
        %3724 = vmatprep.subr.bf16.mxu0 %v2752
        %3725 = vmatpush1.bf16.msra.mxu0 %v2751
        %3726 = vmatprep.subr.bf16.mxu0 %v2756
        %3727 = vmatpush1.bf16.msra.mxu0 %v2755
        %3728 = vmatprep.mubr.bf16.mxu0 %v1028
        %3729 = vmatmul.mubr.bf16.gmra.mrb[0].mxu0 %v1026
        %v3730 = vpop.f32.mrb[0].mxu0
        %v3731 = vadd.f32 %v3690, %v3730
        %v3732 = vpop.f32.mrb[0].mxu0
        %v3733 = vadd.f32 %v3692, %v3732
        %v3734 = vpop.f32.mrb[0].mxu0
        %v3735 = vpop.f32.mrb[0].mxu0
        %3736 = vdwg.mxu0
        %3737 = vmatprep.subr.bf16.mxu0 %v2760
        %3738 = vmatpush1.bf16.msra.mxu0 %v2759
        %3739 = vmatprep.subr.bf16.mxu0 %v2764
        %3740 = vmatpush1.bf16.msra.mxu0 %v2763
        %3741 = vmatprep.subr.bf16.mxu0 %v2768
        %3742 = vmatpush1.bf16.msra.mxu0 %v2767
        %3743 = vmatprep.subr.bf16.mxu0 %v2772
        %3744 = vmatpush1.bf16.msra.mxu0 %v2771
        %3745 = vmatprep.subr.bf16.mxu0 %v2776
        %3746 = vmatpush1.bf16.msra.mxu0 %v2775
        %3747 = vmatprep.subr.bf16.mxu0 %v2780
        %3748 = vmatpush1.bf16.msra.mxu0 %v2779
        %3749 = vmatprep.subr.bf16.mxu0 %v2784
        %3750 = vmatpush1.bf16.msra.mxu0 %v2783
        %3751 = vmatprep.subr.bf16.mxu0 %v2788
        %3752 = vmatpush1.bf16.msra.mxu0 %v2787
        %3753 = vmatprep.subr.bf16.mxu0 %v2792
        %3754 = vmatpush1.bf16.msra.mxu0 %v2791
        %3755 = vmatprep.subr.bf16.mxu0 %v2796
        %3756 = vmatpush1.bf16.msra.mxu0 %v2795
        %3757 = vmatprep.subr.bf16.mxu0 %v2800
        %3758 = vmatpush1.bf16.msra.mxu0 %v2799
        %3759 = vmatprep.subr.bf16.mxu0 %v2804
        %3760 = vmatpush1.bf16.msra.mxu0 %v2803
        %3761 = vmatprep.subr.bf16.mxu0 %v2808
        %3762 = vmatpush1.bf16.msra.mxu0 %v2807
        %3763 = vmatprep.subr.bf16.mxu0 %v2812
        %3764 = vmatpush1.bf16.msra.mxu0 %v2811
        %3765 = vmatprep.subr.bf16.mxu0 %v2816
        %3766 = vmatpush1.bf16.msra.mxu0 %v2815
        %3767 = vmatprep.subr.bf16.mxu0 %v2820
        %3768 = vmatpush1.bf16.msra.mxu0 %v2819
        %3769 = vmatprep.mubr.bf16.mxu0 %v1025
        %3770 = vmatmul.mubr.bf16.gmra.mrb[0].mxu0 %v1011
        %v3771 = vpop.f32.mrb[0].mxu0
        %v3772 = vadd.f32 %v3731, %v3771
        %v3773 = vpop.f32.mrb[0].mxu0
        %v3774 = vadd.f32 %v3733, %v3773
        %v3775 = vpop.f32.mrb[0].mxu0
        %v3776 = vpop.f32.mrb[0].mxu0
        %3777 = vdwg.mxu0
        %3778 = vmatprep.subr.bf16.mxu0 %v2824
        %3779 = vmatpush1.bf16.msra.mxu0 %v2823
        %3780 = vmatprep.subr.bf16.mxu0 %v2828
        %3781 = vmatpush1.bf16.msra.mxu0 %v2827
        %3782 = vmatprep.subr.bf16.mxu0 %v2832
        %3783 = vmatpush1.bf16.msra.mxu0 %v2831
        %3784 = vmatprep.subr.bf16.mxu0 %v2836
        %3785 = vmatpush1.bf16.msra.mxu0 %v2835
        %3786 = vmatprep.subr.bf16.mxu0 %v2840
        %3787 = vmatpush1.bf16.msra.mxu0 %v2839
        %3788 = vmatprep.subr.bf16.mxu0 %v2844
        %3789 = vmatpush1.bf16.msra.mxu0 %v2843
        %3790 = vmatprep.subr.bf16.mxu0 %v2848
        %3791 = vmatpush1.bf16.msra.mxu0 %v2847
        %3792 = vmatprep.subr.bf16.mxu0 %v2852
        %3793 = vmatpush1.bf16.msra.mxu0 %v2851
        %3794 = vmatprep.subr.bf16.mxu0 %v2856
        %3795 = vmatpush1.bf16.msra.mxu0 %v2855
        %3796 = vmatprep.subr.bf16.mxu0 %v2860
        %3797 = vmatpush1.bf16.msra.mxu0 %v2859
        %3798 = vmatprep.subr.bf16.mxu0 %v2864
        %3799 = vmatpush1.bf16.msra.mxu0 %v2863
        %3800 = vmatprep.subr.bf16.mxu0 %v2868
        %3801 = vmatpush1.bf16.msra.mxu0 %v2867
        %3802 = vmatprep.subr.bf16.mxu0 %v2872
        %3803 = vmatpush1.bf16.msra.mxu0 %v2871
        %3804 = vmatprep.subr.bf16.mxu0 %v2876
        %3805 = vmatpush1.bf16.msra.mxu0 %v2875
        %3806 = vmatprep.subr.bf16.mxu0 %v2880
        %3807 = vmatpush1.bf16.msra.mxu0 %v2879
        %3808 = vmatprep.subr.bf16.mxu0 %v2884
        %3809 = vmatpush1.bf16.msra.mxu0 %v2883
        %3810 = vmatprep.mubr.bf16.mxu0 %v1029
        %3811 = vmatmul.mubr.bf16.gmra.mrb[0].mxu0 %v1027
        %v3812 = vpop.f32.mrb[0].mxu0
        %v3813 = vadd.f32 %v3772, %v3812
        %v3814 = vpop.f32.mrb[0].mxu0
        %v3815 = vadd.f32 %v3774, %v3814
        %v3816 = vpop.f32.mrb[0].mxu0
        %v3817 = vpop.f32.mrb[0].mxu0
        %3818 = vdwg.mxu0
        %3819 = vmatprep.subr.bf16.mxu0 %v2888
        %3820 = vmatpush1.bf16.msra.mxu0 %v2887
        %3821 = vmatprep.subr.bf16.mxu0 %v2892
        %3822 = vmatpush1.bf16.msra.mxu0 %v2891
        %3823 = vmatprep.subr.bf16.mxu0 %v2896
        %3824 = vmatpush1.bf16.msra.mxu0 %v2895
        %3825 = vmatprep.subr.bf16.mxu0 %v2900
        %3826 = vmatpush1.bf16.msra.mxu0 %v2899
        %3827 = vmatprep.subr.bf16.mxu0 %v2904
        %3828 = vmatpush1.bf16.msra.mxu0 %v2903
        %3829 = vmatprep.subr.bf16.mxu0 %v2908
        %3830 = vmatpush1.bf16.msra.mxu0 %v2907
        %3831 = vmatprep.subr.bf16.mxu0 %v2912
        %3832 = vmatpush1.bf16.msra.mxu0 %v2911
        %3833 = vmatprep.subr.bf16.mxu0 %v2916
        %3834 = vmatpush1.bf16.msra.mxu0 %v2915
        %3835 = vmatprep.subr.bf16.mxu0 %v2920
        %3836 = vmatpush1.bf16.msra.mxu0 %v2919
        %3837 = vmatprep.subr.bf16.mxu0 %v2924
        %3838 = vmatpush1.bf16.msra.mxu0 %v2923
        %3839 = vmatprep.subr.bf16.mxu0 %v2928
        %3840 = vmatpush1.bf16.msra.mxu0 %v2927
        %3841 = vmatprep.subr.bf16.mxu0 %v2932
        %3842 = vmatpush1.bf16.msra.mxu0 %v2931
        %3843 = vmatprep.subr.bf16.mxu0 %v2936
        %3844 = vmatpush1.bf16.msra.mxu0 %v2935
        %3845 = vmatprep.subr.bf16.mxu0 %v2940
        %3846 = vmatpush1.bf16.msra.mxu0 %v2939
        %3847 = vmatprep.subr.bf16.mxu0 %v2944
        %3848 = vmatpush1.bf16.msra.mxu0 %v2943
        %3849 = vmatprep.subr.bf16.mxu0 %v2948
        %3850 = vmatpush1.bf16.msra.mxu0 %v2947
        %3851 = vmatprep.mubr.bf16.mxu0 %v1067
        %3852 = vmatmul.mubr.bf16.gmra.mrb[0].mxu0 %v1053
        %v3853 = vpop.f32.mrb[0].mxu0
        %v3854 = vadd.f32 %v3813, %v3853
        %v3855 = vpop.f32.mrb[0].mxu0
        %v3856 = vadd.f32 %v3815, %v3855
        %v3857 = vpop.f32.mrb[0].mxu0
        %v3858 = vpop.f32.mrb[0].mxu0
        %3859 = vdwg.mxu0
        %3860 = vmatprep.subr.bf16.mxu0 %v2952
        %3861 = vmatpush1.bf16.msra.mxu0 %v2951
        %3862 = vmatprep.subr.bf16.mxu0 %v2956
        %3863 = vmatpush1.bf16.msra.mxu0 %v2955
        %3864 = vmatprep.subr.bf16.mxu0 %v2960
        %3865 = vmatpush1.bf16.msra.mxu0 %v2959
        %3866 = vmatprep.subr.bf16.mxu0 %v2964
        %3867 = vmatpush1.bf16.msra.mxu0 %v2963
        %3868 = vmatprep.subr.bf16.mxu0 %v2968
        %3869 = vmatpush1.bf16.msra.mxu0 %v2967
        %3870 = vmatprep.subr.bf16.mxu0 %v2972
        %3871 = vmatpush1.bf16.msra.mxu0 %v2971
        %3872 = vmatprep.subr.bf16.mxu0 %v2976
        %3873 = vmatpush1.bf16.msra.mxu0 %v2975
        %3874 = vmatprep.subr.bf16.mxu0 %v2980
        %3875 = vmatpush1.bf16.msra.mxu0 %v2979
        %3876 = vmatprep.subr.bf16.mxu0 %v2984
        %3877 = vmatpush1.bf16.msra.mxu0 %v2983
        %3878 = vmatprep.subr.bf16.mxu0 %v2988
        %3879 = vmatpush1.bf16.msra.mxu0 %v2987
        %3880 = vmatprep.subr.bf16.mxu0 %v2992
        %3881 = vmatpush1.bf16.msra.mxu0 %v2991
        %3882 = vmatprep.subr.bf16.mxu0 %v2996
        %3883 = vmatpush1.bf16.msra.mxu0 %v2995
        %3884 = vmatprep.subr.bf16.mxu0 %v3000
        %3885 = vmatpush1.bf16.msra.mxu0 %v2999
        %3886 = vmatprep.subr.bf16.mxu0 %v3004
        %3887 = vmatpush1.bf16.msra.mxu0 %v3003
        %3888 = vmatprep.subr.bf16.mxu0 %v3008
        %3889 = vmatpush1.bf16.msra.mxu0 %v3007
        %3890 = vmatprep.subr.bf16.mxu0 %v3012
        %3891 = vmatpush1.bf16.msra.mxu0 %v3011
        %3892 = vmatprep.mubr.bf16.mxu0 %v1077
        %3893 = vmatmul.mubr.bf16.gmra.mrb[0].mxu0 %v1075
        %v3894 = vpop.f32.mrb[0].mxu0
        %v3895 = vadd.f32 %v3854, %v3894
        %v3896 = vpop.f32.mrb[0].mxu0
        %v3897 = vadd.f32 %v3856, %v3896
        %v3898 = vpop.f32.mrb[0].mxu0
        %v3899 = vpop.f32.mrb[0].mxu0
        %3900 = vdwg.mxu0
        %3901 = vmatprep.subr.bf16.mxu0 %v3016
        %3902 = vmatpush1.bf16.msra.mxu0 %v3015
        %3903 = vmatprep.subr.bf16.mxu0 %v3020
        %3904 = vmatpush1.bf16.msra.mxu0 %v3019
        %3905 = vmatprep.subr.bf16.mxu0 %v3024
        %3906 = vmatpush1.bf16.msra.mxu0 %v3023
        %3907 = vmatprep.subr.bf16.mxu0 %v3028
        %3908 = vmatpush1.bf16.msra.mxu0 %v3027
        %3909 = vmatprep.subr.bf16.mxu0 %v3032
        %3910 = vmatpush1.bf16.msra.mxu0 %v3031
        %3911 = vmatprep.subr.bf16.mxu0 %v3036
        %3912 = vmatpush1.bf16.msra.mxu0 %v3035
        %3913 = vmatprep.subr.bf16.mxu0 %v3040
        %3914 = vmatpush1.bf16.msra.mxu0 %v3039
        %3915 = vmatprep.subr.bf16.mxu0 %v3044
        %3916 = vmatpush1.bf16.msra.mxu0 %v3043
        %3917 = vmatprep.subr.bf16.mxu0 %v3048
        %3918 = vmatpush1.bf16.msra.mxu0 %v3047
        %3919 = vmatprep.subr.bf16.mxu0 %v3052
        %3920 = vmatpush1.bf16.msra.mxu0 %v3051
        %3921 = vmatprep.subr.bf16.mxu0 %v3056
        %3922 = vmatpush1.bf16.msra.mxu0 %v3055
        %3923 = vmatprep.subr.bf16.mxu0 %v3060
        %3924 = vmatpush1.bf16.msra.mxu0 %v3059
        %3925 = vmatprep.subr.bf16.mxu0 %v3064
        %3926 = vmatpush1.bf16.msra.mxu0 %v3063
        %3927 = vmatprep.subr.bf16.mxu0 %v3068
        %3928 = vmatpush1.bf16.msra.mxu0 %v3067
        %3929 = vmatprep.subr.bf16.mxu0 %v3072
        %3930 = vmatpush1.bf16.msra.mxu0 %v3071
        %3931 = vmatprep.subr.bf16.mxu0 %v3076
        %3932 = vmatpush1.bf16.msra.mxu0 %v3075
        %3933 = vmatprep.mubr.bf16.mxu0 %v1074
        %3934 = vmatmul.mubr.bf16.gmra.mrb[0].mxu0 %v1060
        %v3935 = vpop.f32.mrb[0].mxu0
        %v3936 = vadd.f32 %v3895, %v3935
        %v3937 = vpop.f32.mrb[0].mxu0
        %v3938 = vadd.f32 %v3897, %v3937
        %v3939 = vpop.f32.mrb[0].mxu0
        %v3940 = vpop.f32.mrb[0].mxu0
        %3941 = vdwg.mxu0
        %3942 = vmatprep.subr.bf16.mxu0 %v3080
        %3943 = vmatpush1.bf16.msra.mxu0 %v3079
        %3944 = vmatprep.subr.bf16.mxu0 %v3084
        %3945 = vmatpush1.bf16.msra.mxu0 %v3083
        %3946 = vmatprep.subr.bf16.mxu0 %v3088
        %3947 = vmatpush1.bf16.msra.mxu0 %v3087
        %3948 = vmatprep.subr.bf16.mxu0 %v3092
        %3949 = vmatpush1.bf16.msra.mxu0 %v3091
        %3950 = vmatprep.subr.bf16.mxu0 %v3096
        %3951 = vmatpush1.bf16.msra.mxu0 %v3095
        %3952 = vmatprep.subr.bf16.mxu0 %v3100
        %3953 = vmatpush1.bf16.msra.mxu0 %v3099
        %3954 = vmatprep.subr.bf16.mxu0 %v3104
        %3955 = vmatpush1.bf16.msra.mxu0 %v3103
        %3956 = vmatprep.subr.bf16.mxu0 %v3108
        %3957 = vmatpush1.bf16.msra.mxu0 %v3107
        %3958 = vmatprep.subr.bf16.mxu0 %v3112
        %3959 = vmatpush1.bf16.msra.mxu0 %v3111
        %3960 = vmatprep.subr.bf16.mxu0 %v3116
        %3961 = vmatpush1.bf16.msra.mxu0 %v3115
        %3962 = vmatprep.subr.bf16.mxu0 %v3120
        %3963 = vmatpush1.bf16.msra.mxu0 %v3119
        %3964 = vmatprep.subr.bf16.mxu0 %v3124
        %3965 = vmatpush1.bf16.msra.mxu0 %v3123
        %3966 = vmatprep.subr.bf16.mxu0 %v3128
        %3967 = vmatpush1.bf16.msra.mxu0 %v3127
        %3968 = vmatprep.subr.bf16.mxu0 %v3132
        %3969 = vmatpush1.bf16.msra.mxu0 %v3131
        %3970 = vmatprep.subr.bf16.mxu0 %v3136
        %3971 = vmatpush1.bf16.msra.mxu0 %v3135
        %3972 = vmatprep.subr.bf16.mxu0 %v3140
        %3973 = vmatpush1.bf16.msra.mxu0 %v3139
        %3974 = vmatprep.mubr.bf16.mxu0 %v1078
        %3975 = vmatmul.mubr.bf16.gmra.mrb[0].mxu0 %v1076
        %v3976 = vpop.f32.mrb[0].mxu0
        %v3977 = vadd.f32 %v3936, %v3976
        %v3978 = vpop.f32.mrb[0].mxu0
        %v3979 = vadd.f32 %v3938, %v3978
        %v3980 = vpop.f32.mrb[0].mxu0
        %v3981 = vpop.f32.mrb[0].mxu0
        %3982 = vdwg.mxu0
        %3983 = vmatprep.subr.bf16.mxu0 %v2634
        %3984 = vmatpush1.bf16.msra.mxu0 %v2633
        %3985 = vmatprep.subr.bf16.mxu0 %v2638
        %3986 = vmatpush1.bf16.msra.mxu0 %v2637
        %3987 = vmatprep.subr.bf16.mxu0 %v2642
        %3988 = vmatpush1.bf16.msra.mxu0 %v2641
        %3989 = vmatprep.subr.bf16.mxu0 %v2646
        %3990 = vmatpush1.bf16.msra.mxu0 %v2645
        %3991 = vmatprep.subr.bf16.mxu0 %v2650
        %3992 = vmatpush1.bf16.msra.mxu0 %v2649
        %3993 = vmatprep.subr.bf16.mxu0 %v2654
        %3994 = vmatpush1.bf16.msra.mxu0 %v2653
        %3995 = vmatprep.subr.bf16.mxu0 %v2658
        %3996 = vmatpush1.bf16.msra.mxu0 %v2657
        %3997 = vmatprep.subr.bf16.mxu0 %v2662
        %3998 = vmatpush1.bf16.msra.mxu0 %v2661
        %3999 = vmatprep.subr.bf16.mxu0 %v2666
        %4000 = vmatpush1.bf16.msra.mxu0 %v2665
        %4001 = vmatprep.subr.bf16.mxu0 %v2670
        %4002 = vmatpush1.bf16.msra.mxu0 %v2669
        %4003 = vmatprep.subr.bf16.mxu0 %v2674
        %4004 = vmatpush1.bf16.msra.mxu0 %v2673
        %4005 = vmatprep.subr.bf16.mxu0 %v2678
        %4006 = vmatpush1.bf16.msra.mxu0 %v2677
        %4007 = vmatprep.subr.bf16.mxu0 %v2682
        %4008 = vmatpush1.bf16.msra.mxu0 %v2681
        %4009 = vmatprep.subr.bf16.mxu0 %v2686
        %4010 = vmatpush1.bf16.msra.mxu0 %v2685
        %4011 = vmatprep.subr.bf16.mxu0 %v2690
        %4012 = vmatpush1.bf16.msra.mxu0 %v2689
        %4013 = vmatprep.subr.bf16.mxu0 %v2694
        %4014 = vmatpush1.bf16.msra.mxu0 %v2693
        %4015 = vmatprep.mubr.bf16.mxu0 %v1018
        %4016 = vmatmul.mubr.bf16.gmra.mrb[0].mxu0 %v1004
        %v4017 = vpop.f32.mrb[0].mxu0
        %v4018 = vadd.f32 %v970, %v4017
        %v4019 = vpop.f32.mrb[0].mxu0
        %v4020 = vadd.f32 %v974, %v4019
        %v4021 = vpop.f32.mrb[0].mxu0
        %v4022 = vpop.f32.mrb[0].mxu0
        %4023 = vdwg.mxu0
        %4024 = vmatprep.subr.bf16.mxu0 %v2698
        %4025 = vmatpush1.bf16.msra.mxu0 %v2697
        %4026 = vmatprep.subr.bf16.mxu0 %v2702
        %4027 = vmatpush1.bf16.msra.mxu0 %v2701
        %4028 = vmatprep.subr.bf16.mxu0 %v2706
        %4029 = vmatpush1.bf16.msra.mxu0 %v2705
        %4030 = vmatprep.subr.bf16.mxu0 %v2710
        %4031 = vmatpush1.bf16.msra.mxu0 %v2709
        %4032 = vmatprep.subr.bf16.mxu0 %v2714
        %4033 = vmatpush1.bf16.msra.mxu0 %v2713
        %4034 = vmatprep.subr.bf16.mxu0 %v2718
        %4035 = vmatpush1.bf16.msra.mxu0 %v2717
        %4036 = vmatprep.subr.bf16.mxu0 %v2722
        %4037 = vmatpush1.bf16.msra.mxu0 %v2721
        %4038 = vmatprep.subr.bf16.mxu0 %v2726
        %4039 = vmatpush1.bf16.msra.mxu0 %v2725
        %4040 = vmatprep.subr.bf16.mxu0 %v2730
        %4041 = vmatpush1.bf16.msra.mxu0 %v2729
        %4042 = vmatprep.subr.bf16.mxu0 %v2734
        %4043 = vmatpush1.bf16.msra.mxu0 %v2733
        %4044 = vmatprep.subr.bf16.mxu0 %v2738
        %4045 = vmatpush1.bf16.msra.mxu0 %v2737
        %4046 = vmatprep.subr.bf16.mxu0 %v2742
        %4047 = vmatpush1.bf16.msra.mxu0 %v2741
        %4048 = vmatprep.subr.bf16.mxu0 %v2746
        %4049 = vmatpush1.bf16.msra.mxu0 %v2745
        %4050 = vmatprep.subr.bf16.mxu0 %v2750
        %4051 = vmatpush1.bf16.msra.mxu0 %v2749
        %4052 = vmatprep.subr.bf16.mxu0 %v2754
        %4053 = vmatpush1.bf16.msra.mxu0 %v2753
        %4054 = vmatprep.subr.bf16.mxu0 %v2758
        %4055 = vmatpush1.bf16.msra.mxu0 %v2757
        %4056 = vmatprep.mubr.bf16.mxu0 %v1028
        %4057 = vmatmul.mubr.bf16.gmra.mrb[0].mxu0 %v1026
        %v4058 = vpop.f32.mrb[0].mxu0
        %v4059 = vadd.f32 %v4018, %v4058
        %v4060 = vpop.f32.mrb[0].mxu0
        %v4061 = vadd.f32 %v4020, %v4060
        %v4062 = vpop.f32.mrb[0].mxu0
        %v4063 = vpop.f32.mrb[0].mxu0
        %4064 = vdwg.mxu0
        %4065 = vmatprep.subr.bf16.mxu0 %v2762
        %4066 = vmatpush1.bf16.msra.mxu0 %v2761
        %4067 = vmatprep.subr.bf16.mxu0 %v2766
        %4068 = vmatpush1.bf16.msra.mxu0 %v2765
        %4069 = vmatprep.subr.bf16.mxu0 %v2770
        %4070 = vmatpush1.bf16.msra.mxu0 %v2769
        %4071 = vmatprep.subr.bf16.mxu0 %v2774
        %4072 = vmatpush1.bf16.msra.mxu0 %v2773
        %4073 = vmatprep.subr.bf16.mxu0 %v2778
        %4074 = vmatpush1.bf16.msra.mxu0 %v2777
        %4075 = vmatprep.subr.bf16.mxu0 %v2782
        %4076 = vmatpush1.bf16.msra.mxu0 %v2781
        %4077 = vmatprep.subr.bf16.mxu0 %v2786
        %4078 = vmatpush1.bf16.msra.mxu0 %v2785
        %4079 = vmatprep.subr.bf16.mxu0 %v2790
        %4080 = vmatpush1.bf16.msra.mxu0 %v2789
        %4081 = vmatprep.subr.bf16.mxu0 %v2794
        %4082 = vmatpush1.bf16.msra.mxu0 %v2793
        %4083 = vmatprep.subr.bf16.mxu0 %v2798
        %4084 = vmatpush1.bf16.msra.mxu0 %v2797
        %4085 = vmatprep.subr.bf16.mxu0 %v2802
        %4086 = vmatpush1.bf16.msra.mxu0 %v2801
        %4087 = vmatprep.subr.bf16.mxu0 %v2806
        %4088 = vmatpush1.bf16.msra.mxu0 %v2805
        %4089 = vmatprep.subr.bf16.mxu0 %v2810
        %4090 = vmatpush1.bf16.msra.mxu0 %v2809
        %4091 = vmatprep.subr.bf16.mxu0 %v2814
        %4092 = vmatpush1.bf16.msra.mxu0 %v2813
        %4093 = vmatprep.subr.bf16.mxu0 %v2818
        %4094 = vmatpush1.bf16.msra.mxu0 %v2817
        %4095 = vmatprep.subr.bf16.mxu0 %v2822
        %4096 = vmatpush1.bf16.msra.mxu0 %v2821
        %4097 = vmatprep.mubr.bf16.mxu0 %v1025
        %4098 = vmatmul.mubr.bf16.gmra.mrb[0].mxu0 %v1011
        %v4099 = vpop.f32.mrb[0].mxu0
        %v4100 = vadd.f32 %v4059, %v4099
        %v4101 = vpop.f32.mrb[0].mxu0
        %v4102 = vadd.f32 %v4061, %v4101
        %v4103 = vpop.f32.mrb[0].mxu0
        %v4104 = vpop.f32.mrb[0].mxu0
        %4105 = vdwg.mxu0
        %4106 = vmatprep.subr.bf16.mxu0 %v2826
        %4107 = vmatpush1.bf16.msra.mxu0 %v2825
        %4108 = vmatprep.subr.bf16.mxu0 %v2830
        %4109 = vmatpush1.bf16.msra.mxu0 %v2829
        %4110 = vmatprep.subr.bf16.mxu0 %v2834
        %4111 = vmatpush1.bf16.msra.mxu0 %v2833
        %4112 = vmatprep.subr.bf16.mxu0 %v2838
        %4113 = vmatpush1.bf16.msra.mxu0 %v2837
        %4114 = vmatprep.subr.bf16.mxu0 %v2842
        %4115 = vmatpush1.bf16.msra.mxu0 %v2841
        %4116 = vmatprep.subr.bf16.mxu0 %v2846
        %4117 = vmatpush1.bf16.msra.mxu0 %v2845
        %4118 = vmatprep.subr.bf16.mxu0 %v2850
        %4119 = vmatpush1.bf16.msra.mxu0 %v2849
        %4120 = vmatprep.subr.bf16.mxu0 %v2854
        %4121 = vmatpush1.bf16.msra.mxu0 %v2853
        %4122 = vmatprep.subr.bf16.mxu0 %v2858
        %4123 = vmatpush1.bf16.msra.mxu0 %v2857
        %4124 = vmatprep.subr.bf16.mxu0 %v2862
        %4125 = vmatpush1.bf16.msra.mxu0 %v2861
        %4126 = vmatprep.subr.bf16.mxu0 %v2866
        %4127 = vmatpush1.bf16.msra.mxu0 %v2865
        %4128 = vmatprep.subr.bf16.mxu0 %v2870
        %4129 = vmatpush1.bf16.msra.mxu0 %v2869
        %4130 = vmatprep.subr.bf16.mxu0 %v2874
        %4131 = vmatpush1.bf16.msra.mxu0 %v2873
        %4132 = vmatprep.subr.bf16.mxu0 %v2878
        %4133 = vmatpush1.bf16.msra.mxu0 %v2877
        %4134 = vmatprep.subr.bf16.mxu0 %v2882
        %4135 = vmatpush1.bf16.msra.mxu0 %v2881
        %4136 = vmatprep.subr.bf16.mxu0 %v2886
        %4137 = vmatpush1.bf16.msra.mxu0 %v2885
        %4138 = vmatprep.mubr.bf16.mxu0 %v1029
        %4139 = vmatmul.mubr.bf16.gmra.mrb[0].mxu0 %v1027
        %v4140 = vpop.f32.mrb[0].mxu0
        %v4141 = vadd.f32 %v4100, %v4140
        %v4142 = vpop.f32.mrb[0].mxu0
        %v4143 = vadd.f32 %v4102, %v4142
        %v4144 = vpop.f32.mrb[0].mxu0
        %v4145 = vpop.f32.mrb[0].mxu0
        %4146 = vdwg.mxu0
        %4147 = vmatprep.subr.bf16.mxu0 %v2890
        %4148 = vmatpush1.bf16.msra.mxu0 %v2889
        %4149 = vmatprep.subr.bf16.mxu0 %v2894
        %4150 = vmatpush1.bf16.msra.mxu0 %v2893
        %4151 = vmatprep.subr.bf16.mxu0 %v2898
        %4152 = vmatpush1.bf16.msra.mxu0 %v2897
        %4153 = vmatprep.subr.bf16.mxu0 %v2902
        %4154 = vmatpush1.bf16.msra.mxu0 %v2901
        %4155 = vmatprep.subr.bf16.mxu0 %v2906
        %4156 = vmatpush1.bf16.msra.mxu0 %v2905
        %4157 = vmatprep.subr.bf16.mxu0 %v2910
        %4158 = vmatpush1.bf16.msra.mxu0 %v2909
        %4159 = vmatprep.subr.bf16.mxu0 %v2914
        %4160 = vmatpush1.bf16.msra.mxu0 %v2913
        %4161 = vmatprep.subr.bf16.mxu0 %v2918
        %4162 = vmatpush1.bf16.msra.mxu0 %v2917
        %4163 = vmatprep.subr.bf16.mxu0 %v2922
        %4164 = vmatpush1.bf16.msra.mxu0 %v2921
        %4165 = vmatprep.subr.bf16.mxu0 %v2926
        %4166 = vmatpush1.bf16.msra.mxu0 %v2925
        %4167 = vmatprep.subr.bf16.mxu0 %v2930
        %4168 = vmatpush1.bf16.msra.mxu0 %v2929
        %4169 = vmatprep.subr.bf16.mxu0 %v2934
        %4170 = vmatpush1.bf16.msra.mxu0 %v2933
        %4171 = vmatprep.subr.bf16.mxu0 %v2938
        %4172 = vmatpush1.bf16.msra.mxu0 %v2937
        %4173 = vmatprep.subr.bf16.mxu0 %v2942
        %4174 = vmatpush1.bf16.msra.mxu0 %v2941
        %4175 = vmatprep.subr.bf16.mxu0 %v2946
        %4176 = vmatpush1.bf16.msra.mxu0 %v2945
        %4177 = vmatprep.subr.bf16.mxu0 %v2950
        %4178 = vmatpush1.bf16.msra.mxu0 %v2949
        %4179 = vmatprep.mubr.bf16.mxu0 %v1067
        %4180 = vmatmul.mubr.bf16.gmra.mrb[0].mxu0 %v1053
        %v4181 = vpop.f32.mrb[0].mxu0
        %v4182 = vadd.f32 %v4141, %v4181
        %v4183 = vpop.f32.mrb[0].mxu0
        %v4184 = vadd.f32 %v4143, %v4183
        %v4185 = vpop.f32.mrb[0].mxu0
        %v4186 = vpop.f32.mrb[0].mxu0
        %4187 = vdwg.mxu0
        %4188 = vmatprep.subr.bf16.mxu0 %v2954
        %4189 = vmatpush1.bf16.msra.mxu0 %v2953
        %4190 = vmatprep.subr.bf16.mxu0 %v2958
        %4191 = vmatpush1.bf16.msra.mxu0 %v2957
        %4192 = vmatprep.subr.bf16.mxu0 %v2962
        %4193 = vmatpush1.bf16.msra.mxu0 %v2961
        %4194 = vmatprep.subr.bf16.mxu0 %v2966
        %4195 = vmatpush1.bf16.msra.mxu0 %v2965
        %4196 = vmatprep.subr.bf16.mxu0 %v2970
        %4197 = vmatpush1.bf16.msra.mxu0 %v2969
        %4198 = vmatprep.subr.bf16.mxu0 %v2974
        %4199 = vmatpush1.bf16.msra.mxu0 %v2973
        %4200 = vmatprep.subr.bf16.mxu0 %v2978
        %4201 = vmatpush1.bf16.msra.mxu0 %v2977
        %4202 = vmatprep.subr.bf16.mxu0 %v2982
        %4203 = vmatpush1.bf16.msra.mxu0 %v2981
        %4204 = vmatprep.subr.bf16.mxu0 %v2986
        %4205 = vmatpush1.bf16.msra.mxu0 %v2985
        %4206 = vmatprep.subr.bf16.mxu0 %v2990
        %4207 = vmatpush1.bf16.msra.mxu0 %v2989
        %4208 = vmatprep.subr.bf16.mxu0 %v2994
        %4209 = vmatpush1.bf16.msra.mxu0 %v2993
        %4210 = vmatprep.subr.bf16.mxu0 %v2998
        %4211 = vmatpush1.bf16.msra.mxu0 %v2997
        %4212 = vmatprep.subr.bf16.mxu0 %v3002
        %4213 = vmatpush1.bf16.msra.mxu0 %v3001
        %4214 = vmatprep.subr.bf16.mxu0 %v3006
        %4215 = vmatpush1.bf16.msra.mxu0 %v3005
        %4216 = vmatprep.subr.bf16.mxu0 %v3010
        %4217 = vmatpush1.bf16.msra.mxu0 %v3009
        %4218 = vmatprep.subr.bf16.mxu0 %v3014
        %4219 = vmatpush1.bf16.msra.mxu0 %v3013
        %4220 = vmatprep.mubr.bf16.mxu0 %v1077
        %4221 = vmatmul.mubr.bf16.gmra.mrb[0].mxu0 %v1075
        %v4222 = vpop.f32.mrb[0].mxu0
        %v4223 = vadd.f32 %v4182, %v4222
        %v4224 = vpop.f32.mrb[0].mxu0
        %v4225 = vadd.f32 %v4184, %v4224
        %v4226 = vpop.f32.mrb[0].mxu0
        %v4227 = vpop.f32.mrb[0].mxu0
        %4228 = vdwg.mxu0
        %4229 = vmatprep.subr.bf16.mxu0 %v3018
        %4230 = vmatpush1.bf16.msra.mxu0 %v3017
        %4231 = vmatprep.subr.bf16.mxu0 %v3022
        %4232 = vmatpush1.bf16.msra.mxu0 %v3021
        %4233 = vmatprep.subr.bf16.mxu0 %v3026
        %4234 = vmatpush1.bf16.msra.mxu0 %v3025
        %4235 = vmatprep.subr.bf16.mxu0 %v3030
        %4236 = vmatpush1.bf16.msra.mxu0 %v3029
        %4237 = vmatprep.subr.bf16.mxu0 %v3034
        %4238 = vmatpush1.bf16.msra.mxu0 %v3033
        %4239 = vmatprep.subr.bf16.mxu0 %v3038
        %4240 = vmatpush1.bf16.msra.mxu0 %v3037
        %4241 = vmatprep.subr.bf16.mxu0 %v3042
        %4242 = vmatpush1.bf16.msra.mxu0 %v3041
        %4243 = vmatprep.subr.bf16.mxu0 %v3046
        %4244 = vmatpush1.bf16.msra.mxu0 %v3045
        %4245 = vmatprep.subr.bf16.mxu0 %v3050
        %4246 = vmatpush1.bf16.msra.mxu0 %v3049
        %4247 = vmatprep.subr.bf16.mxu0 %v3054
        %4248 = vmatpush1.bf16.msra.mxu0 %v3053
        %4249 = vmatprep.subr.bf16.mxu0 %v3058
        %4250 = vmatpush1.bf16.msra.mxu0 %v3057
        %4251 = vmatprep.subr.bf16.mxu0 %v3062
        %4252 = vmatpush1.bf16.msra.mxu0 %v3061
        %4253 = vmatprep.subr.bf16.mxu0 %v3066
        %4254 = vmatpush1.bf16.msra.mxu0 %v3065
        %4255 = vmatprep.subr.bf16.mxu0 %v3070
        %4256 = vmatpush1.bf16.msra.mxu0 %v3069
        %4257 = vmatprep.subr.bf16.mxu0 %v3074
        %4258 = vmatpush1.bf16.msra.mxu0 %v3073
        %4259 = vmatprep.subr.bf16.mxu0 %v3078
        %4260 = vmatpush1.bf16.msra.mxu0 %v3077
        %4261 = vmatprep.mubr.bf16.mxu0 %v1074
        %4262 = vmatmul.mubr.bf16.gmra.mrb[0].mxu0 %v1060
        %v4263 = vpop.f32.mrb[0].mxu0
        %v4264 = vadd.f32 %v4223, %v4263
        %v4265 = vpop.f32.mrb[0].mxu0
        %v4266 = vadd.f32 %v4225, %v4265
        %v4267 = vpop.f32.mrb[0].mxu0
        %v4268 = vpop.f32.mrb[0].mxu0
        %4269 = vdwg.mxu0
        %4270 = vmatprep.subr.bf16.mxu0 %v3082
        %4271 = vmatpush1.bf16.msra.mxu0 %v3081
        %4272 = vmatprep.subr.bf16.mxu0 %v3086
        %4273 = vmatpush1.bf16.msra.mxu0 %v3085
        %4274 = vmatprep.subr.bf16.mxu0 %v3090
        %4275 = vmatpush1.bf16.msra.mxu0 %v3089
        %4276 = vmatprep.subr.bf16.mxu0 %v3094
        %4277 = vmatpush1.bf16.msra.mxu0 %v3093
        %4278 = vmatprep.subr.bf16.mxu0 %v3098
        %4279 = vmatpush1.bf16.msra.mxu0 %v3097
        %4280 = vmatprep.subr.bf16.mxu0 %v3102
        %4281 = vmatpush1.bf16.msra.mxu0 %v3101
        %4282 = vmatprep.subr.bf16.mxu0 %v3106
        %4283 = vmatpush1.bf16.msra.mxu0 %v3105
        %4284 = vmatprep.subr.bf16.mxu0 %v3110
        %4285 = vmatpush1.bf16.msra.mxu0 %v3109
        %4286 = vmatprep.subr.bf16.mxu0 %v3114
        %4287 = vmatpush1.bf16.msra.mxu0 %v3113
        %4288 = vmatprep.subr.bf16.mxu0 %v3118
        %4289 = vmatpush1.bf16.msra.mxu0 %v3117
        %4290 = vmatprep.subr.bf16.mxu0 %v3122
        %4291 = vmatpush1.bf16.msra.mxu0 %v3121
        %4292 = vmatprep.subr.bf16.mxu0 %v3126
        %4293 = vmatpush1.bf16.msra.mxu0 %v3125
        %4294 = vmatprep.subr.bf16.mxu0 %v3130
        %4295 = vmatpush1.bf16.msra.mxu0 %v3129
        %4296 = vmatprep.subr.bf16.mxu0 %v3134
        %4297 = vmatpush1.bf16.msra.mxu0 %v3133
        %4298 = vmatprep.subr.bf16.mxu0 %v3138
        %4299 = vmatpush1.bf16.msra.mxu0 %v3137
        %4300 = vmatprep.subr.bf16.mxu0 %v3142
        %4301 = vmatpush1.bf16.msra.mxu0 %v3141
        %4302 = vmatprep.mubr.bf16.mxu0 %v1078
        %4303 = vmatmul.mubr.bf16.gmra.mrb[0].mxu0 %v1076
        %v4304 = vpop.f32.mrb[0].mxu0
        %v4305 = vadd.f32 %v4264, %v4304
        %v4306 = vpop.f32.mrb[0].mxu0
        %v4307 = vadd.f32 %v4266, %v4306
        %v4308 = vpop.f32.mrb[0].mxu0
        %v4309 = vpop.f32.mrb[0].mxu0
        %4310 = vdwg.mxu0
        %vm4311 = vcmp.ge.f32.partialorder %v3977, 0.0
        %vm4312 = vcmp.ge.f32.partialorder %v3979, 0.0
        %vm4313 = vcmp.ge.f32.partialorder %v4305, 0.0
        %vm4314 = vcmp.ge.f32.partialorder %v4307, 0.0
        %v4315 = vmul.f32 %v3977, 0.2
        %v4316 = vmul.f32 %v3979, 0.2
        %v4317 = vmul.f32 %v4305, 0.2
        %v4318 = vmul.f32 %v4307, 0.2
        %v4319 = vsel %vm4311, %v3977, %v4315
        %v4320 = vsel %vm4312, %v3979, %v4316
        %v4321 = vsel %vm4313, %v4305, %v4317
        %v4322 = vsel %vm4314, %v4307, %v4318
        %v4323 = vld [vmem:[%s351] sm:$0xff]
        %v4325 = vcombine.high %v4323, %v4323
        %v4327 = vunpack.c.l.s4 1983009808
        %v4328 = vunpack.c.0.s8 %v4327
        %v4329 = vlaneseq
        %v4330 = vshrl.u32 %v4329, 7
        %v4331 = vsub.s32 %v4328, %v4330
        %v4332 = vrot.slane %v4323, %v4331
        %v4334 = vunpack.c.l.s4 1983009808
        %v4335 = vunpack.c.0.s8 %v4334
        %v4336 = vlaneseq
        %v4337 = vshrl.u32 %v4336, 7
        %v4338 = vsub.s32 %v4335, %v4337
        %v4339 = vrot.slane %v4325, %v4338
        %v4340 = vcombine.high %v4332, %v4332
        %v4341 = vcombine.high %v4339, %v4339
        %v4346 = vmul.f32 %v4319, %v4332
        %v4347 = vmul.f32 %v4320, %v4340
        %v4348 = vmul.f32 %v4321, %v4339
        %v4349 = vmul.f32 %v4322, %v4341
        %v4350 = vld [vmem:[%s378] sm:$0xff]
        %v4351 = vld [vmem:[%s378 + $0x8] sm:$0xff]
        %v4352 = vld [vmem:[%s378 + $0x10] sm:$0xff]
        %v4353 = vld [vmem:[%s378 + $0x18] sm:$0xff]
        %v4354 = vld [vmem:[%s378 + $0x20] sm:$0xff]
        %v4355 = vld [vmem:[%s378 + $0x28] sm:$0xff]
        %v4356 = vld [vmem:[%s378 + $0x30] sm:$0xff]
        %v4357 = vld [vmem:[%s378 + $0x38] sm:$0xff]
        %v4358 = vld [vmem:[%s378 + $0x40] sm:$0xff]
        %v4359 = vld [vmem:[%s378 + $0x48] sm:$0xff]
        %v4360 = vld [vmem:[%s378 + $0x50] sm:$0xff]
        %v4361 = vld [vmem:[%s378 + $0x58] sm:$0xff]
        %v4362 = vld [vmem:[%s378 + $0x60] sm:$0xff]
        %v4363 = vld [vmem:[%s378 + $0x68] sm:$0xff]
        %v4364 = vld [vmem:[%s378 + $0x70] sm:$0xff]
        %v4365 = vld [vmem:[%s378 + $0x78] sm:$0xff]
        %v4366 = vld [vmem:[%s378 + $0x80] sm:$0xff]
        %v4367 = vld [vmem:[%s378 + $0x88] sm:$0xff]
        %v4368 = vld [vmem:[%s378 + $0x90] sm:$0xff]
        %v4369 = vld [vmem:[%s378 + $0x98] sm:$0xff]
        %v4370 = vld [vmem:[%s378 + $0xa0] sm:$0xff]
        %v4371 = vld [vmem:[%s378 + $0xa8] sm:$0xff]
        %v4372 = vld [vmem:[%s378 + $0xb0] sm:$0xff]
        %v4373 = vld [vmem:[%s378 + $0xb8] sm:$0xff]
        %v4374 = vld [vmem:[%s378 + $0xc0] sm:$0xff]
        %v4375 = vld [vmem:[%s378 + $0xc8] sm:$0xff]
        %v4376 = vld [vmem:[%s378 + $0xd0] sm:$0xff]
        %v4377 = vld [vmem:[%s378 + $0xd8] sm:$0xff]
        %v4378 = vld [vmem:[%s378 + $0xe0] sm:$0xff]
        %v4379 = vld [vmem:[%s378 + $0xe8] sm:$0xff]
        %v4380 = vld [vmem:[%s378 + $0xf0] sm:$0xff]
        %v4381 = vld [vmem:[%s378 + $0xf8] sm:$0xff]
        %v4382 = vld [vmem:[%s378 + $0x100] sm:$0xff]
        %v4383 = vld [vmem:[%s378 + $0x108] sm:$0xff]
        %v4384 = vld [vmem:[%s378 + $0x110] sm:$0xff]
        %v4385 = vld [vmem:[%s378 + $0x118] sm:$0xff]
        %v4386 = vld [vmem:[%s378 + $0x120] sm:$0xff]
        %v4387 = vld [vmem:[%s378 + $0x128] sm:$0xff]
        %v4388 = vld [vmem:[%s378 + $0x130] sm:$0xff]
        %v4389 = vld [vmem:[%s378 + $0x138] sm:$0xff]
        %v4390 = vld [vmem:[%s378 + $0x140] sm:$0xff]
        %v4391 = vld [vmem:[%s378 + $0x148] sm:$0xff]
        %v4392 = vld [vmem:[%s378 + $0x150] sm:$0xff]
        %v4393 = vld [vmem:[%s378 + $0x158] sm:$0xff]
        %v4394 = vld [vmem:[%s378 + $0x160] sm:$0xff]
        %v4395 = vld [vmem:[%s378 + $0x168] sm:$0xff]
        %v4396 = vld [vmem:[%s378 + $0x170] sm:$0xff]
        %v4397 = vld [vmem:[%s378 + $0x178] sm:$0xff]
        %v4398 = vld [vmem:[%s378 + $0x180] sm:$0xff]
        %v4399 = vld [vmem:[%s378 + $0x188] sm:$0xff]
        %v4400 = vld [vmem:[%s378 + $0x190] sm:$0xff]
        %v4401 = vld [vmem:[%s378 + $0x198] sm:$0xff]
        %v4402 = vld [vmem:[%s378 + $0x1a0] sm:$0xff]
        %v4403 = vld [vmem:[%s378 + $0x1a8] sm:$0xff]
        %v4404 = vld [vmem:[%s378 + $0x1b0] sm:$0xff]
        %v4405 = vld [vmem:[%s378 + $0x1b8] sm:$0xff]
        %v4406 = vld [vmem:[%s378 + $0x1c0] sm:$0xff]
        %v4407 = vld [vmem:[%s378 + $0x1c8] sm:$0xff]
        %v4408 = vld [vmem:[%s378 + $0x1d0] sm:$0xff]
        %v4409 = vld [vmem:[%s378 + $0x1d8] sm:$0xff]
        %v4410 = vld [vmem:[%s378 + $0x1e0] sm:$0xff]
        %v4411 = vld [vmem:[%s378 + $0x1e8] sm:$0xff]
        %v4412 = vld [vmem:[%s378 + $0x1f0] sm:$0xff]
        %v4413 = vld [vmem:[%s378 + $0x1f8] sm:$0xff]
        %v4414 = vld [vmem:[%s378 + $0x200] sm:$0xff]
        %v4415 = vld [vmem:[%s378 + $0x208] sm:$0xff]
        %v4416 = vld [vmem:[%s378 + $0x210] sm:$0xff]
        %v4417 = vld [vmem:[%s378 + $0x218] sm:$0xff]
        %v4418 = vld [vmem:[%s378 + $0x220] sm:$0xff]
        %v4419 = vld [vmem:[%s378 + $0x228] sm:$0xff]
        %v4420 = vld [vmem:[%s378 + $0x230] sm:$0xff]
        %v4421 = vld [vmem:[%s378 + $0x238] sm:$0xff]
        %v4422 = vld [vmem:[%s378 + $0x240] sm:$0xff]
        %v4423 = vld [vmem:[%s378 + $0x248] sm:$0xff]
        %v4424 = vld [vmem:[%s378 + $0x250] sm:$0xff]
        %v4425 = vld [vmem:[%s378 + $0x258] sm:$0xff]
        %v4426 = vld [vmem:[%s378 + $0x260] sm:$0xff]
        %v4427 = vld [vmem:[%s378 + $0x268] sm:$0xff]
        %v4428 = vld [vmem:[%s378 + $0x270] sm:$0xff]
        %v4429 = vld [vmem:[%s378 + $0x278] sm:$0xff]
        %v4430 = vld [vmem:[%s378 + $0x280] sm:$0xff]
        %v4431 = vld [vmem:[%s378 + $0x288] sm:$0xff]
        %v4432 = vld [vmem:[%s378 + $0x290] sm:$0xff]
        %v4433 = vld [vmem:[%s378 + $0x298] sm:$0xff]
        %v4434 = vld [vmem:[%s378 + $0x2a0] sm:$0xff]
        %v4435 = vld [vmem:[%s378 + $0x2a8] sm:$0xff]
        %v4436 = vld [vmem:[%s378 + $0x2b0] sm:$0xff]
        %v4437 = vld [vmem:[%s378 + $0x2b8] sm:$0xff]
        %v4438 = vld [vmem:[%s378 + $0x2c0] sm:$0xff]
        %v4439 = vld [vmem:[%s378 + $0x2c8] sm:$0xff]
        %v4440 = vld [vmem:[%s378 + $0x2d0] sm:$0xff]
        %v4441 = vld [vmem:[%s378 + $0x2d8] sm:$0xff]
        %v4442 = vld [vmem:[%s378 + $0x2e0] sm:$0xff]
        %v4443 = vld [vmem:[%s378 + $0x2e8] sm:$0xff]
        %v4444 = vld [vmem:[%s378 + $0x2f0] sm:$0xff]
        %v4445 = vld [vmem:[%s378 + $0x2f8] sm:$0xff]
        %v4446 = vld [vmem:[%s378 + $0x300] sm:$0xff]
        %v4447 = vld [vmem:[%s378 + $0x308] sm:$0xff]
        %v4448 = vld [vmem:[%s378 + $0x310] sm:$0xff]
        %v4449 = vld [vmem:[%s378 + $0x318] sm:$0xff]
        %v4450 = vld [vmem:[%s378 + $0x320] sm:$0xff]
        %v4451 = vld [vmem:[%s378 + $0x328] sm:$0xff]
        %v4452 = vld [vmem:[%s378 + $0x330] sm:$0xff]
        %v4453 = vld [vmem:[%s378 + $0x338] sm:$0xff]
        %v4454 = vld [vmem:[%s378 + $0x340] sm:$0xff]
        %v4455 = vld [vmem:[%s378 + $0x348] sm:$0xff]
        %v4456 = vld [vmem:[%s378 + $0x350] sm:$0xff]
        %v4457 = vld [vmem:[%s378 + $0x358] sm:$0xff]
        %v4458 = vld [vmem:[%s378 + $0x360] sm:$0xff]
        %v4459 = vld [vmem:[%s378 + $0x368] sm:$0xff]
        %v4460 = vld [vmem:[%s378 + $0x370] sm:$0xff]
        %v4461 = vld [vmem:[%s378 + $0x378] sm:$0xff]
        %v4462 = vld [vmem:[%s378 + $0x380] sm:$0xff]
        %v4463 = vld [vmem:[%s378 + $0x388] sm:$0xff]
        %v4464 = vld [vmem:[%s378 + $0x390] sm:$0xff]
        %v4465 = vld [vmem:[%s378 + $0x398] sm:$0xff]
        %v4466 = vld [vmem:[%s378 + $0x3a0] sm:$0xff]
        %v4467 = vld [vmem:[%s378 + $0x3a8] sm:$0xff]
        %v4468 = vld [vmem:[%s378 + $0x3b0] sm:$0xff]
        %v4469 = vld [vmem:[%s378 + $0x3b8] sm:$0xff]
        %v4470 = vld [vmem:[%s378 + $0x3c0] sm:$0xff]
        %v4471 = vld [vmem:[%s378 + $0x3c8] sm:$0xff]
        %v4472 = vld [vmem:[%s378 + $0x3d0] sm:$0xff]
        %v4473 = vld [vmem:[%s378 + $0x3d8] sm:$0xff]
        %v4474 = vld [vmem:[%s378 + $0x3e0] sm:$0xff]
        %v4475 = vld [vmem:[%s378 + $0x3e8] sm:$0xff]
        %v4476 = vld [vmem:[%s378 + $0x3f0] sm:$0xff]
        %v4477 = vld [vmem:[%s378 + $0x3f8] sm:$0xff]
        %v4478 = vld [vmem:[%s387] sm:$0x3]
        %v4480 = vlaneseq
        %v4481 = vshrl.u32 %v4480, 7
        %v4482 = vsub.s32 0, %v4481
        %v4483 = vrot.slane %v4478, %v4482
        %v4484 = vlaneseq
        %v4485 = vshrl.u32 %v4484, 7
        %v4486 = vsub.s32 1, %v4485
        %v4487 = vrot.slane %v4478, %v4486
        %4490 = vmatprep.subr.mxu0 %v4351
        %4491 = vmatpush1.msra.mxu0 %v4350
        %4492 = vmatprep.subr.mxu0 %v4353
        %4493 = vmatpush1.msra.mxu0 %v4352
        %4494 = vmatprep.subr.mxu0 %v4355
        %4495 = vmatpush1.msra.mxu0 %v4354
        %4496 = vmatprep.subr.mxu0 %v4357
        %4497 = vmatpush1.msra.mxu0 %v4356
        %4498 = vmatprep.subr.mxu0 %v4359
        %4499 = vmatpush1.msra.mxu0 %v4358
        %4500 = vmatprep.subr.mxu0 %v4361
        %4501 = vmatpush1.msra.mxu0 %v4360
        %4502 = vmatprep.subr.mxu0 %v4363
        %4503 = vmatpush1.msra.mxu0 %v4362
        %4504 = vmatprep.subr.mxu0 %v4365
        %4505 = vmatpush1.msra.mxu0 %v4364
        %4506 = vmatprep.subr.mxu0 %v4367
        %4507 = vmatpush1.msra.mxu0 %v4366
        %4508 = vmatprep.subr.mxu0 %v4369
        %4509 = vmatpush1.msra.mxu0 %v4368
        %4510 = vmatprep.subr.mxu0 %v4371
        %4511 = vmatpush1.msra.mxu0 %v4370
        %4512 = vmatprep.subr.mxu0 %v4373
        %4513 = vmatpush1.msra.mxu0 %v4372
        %4514 = vmatprep.subr.mxu0 %v4375
        %4515 = vmatpush1.msra.mxu0 %v4374
        %4516 = vmatprep.subr.mxu0 %v4377
        %4517 = vmatpush1.msra.mxu0 %v4376
        %4518 = vmatprep.subr.mxu0 %v4379
        %4519 = vmatpush1.msra.mxu0 %v4378
        %4520 = vmatprep.subr.mxu0 %v4381
        %4521 = vmatpush1.msra.mxu0 %v4380
        %4522 = vmatprep.subr.mxu0 %v4383
        %4523 = vmatpush1.msra.mxu0 %v4382
        %4524 = vmatprep.subr.mxu0 %v4385
        %4525 = vmatpush1.msra.mxu0 %v4384
        %4526 = vmatprep.subr.mxu0 %v4387
        %4527 = vmatpush1.msra.mxu0 %v4386
        %4528 = vmatprep.subr.mxu0 %v4389
        %4529 = vmatpush1.msra.mxu0 %v4388
        %4530 = vmatprep.subr.mxu0 %v4391
        %4531 = vmatpush1.msra.mxu0 %v4390
        %4532 = vmatprep.subr.mxu0 %v4393
        %4533 = vmatpush1.msra.mxu0 %v4392
        %4534 = vmatprep.subr.mxu0 %v4395
        %4535 = vmatpush1.msra.mxu0 %v4394
        %4536 = vmatprep.subr.mxu0 %v4397
        %4537 = vmatpush1.msra.mxu0 %v4396
        %4538 = vmatprep.subr.mxu0 %v4399
        %4539 = vmatpush1.msra.mxu0 %v4398
        %4540 = vmatprep.subr.mxu0 %v4401
        %4541 = vmatpush1.msra.mxu0 %v4400
        %4542 = vmatprep.subr.mxu0 %v4403
        %4543 = vmatpush1.msra.mxu0 %v4402
        %4544 = vmatprep.subr.mxu0 %v4405
        %4545 = vmatpush1.msra.mxu0 %v4404
        %4546 = vmatprep.subr.mxu0 %v4407
        %4547 = vmatpush1.msra.mxu0 %v4406
        %4548 = vmatprep.subr.mxu0 %v4409
        %4549 = vmatpush1.msra.mxu0 %v4408
        %4550 = vmatprep.subr.mxu0 %v4411
        %4551 = vmatpush1.msra.mxu0 %v4410
        %4552 = vmatprep.subr.mxu0 %v4413
        %4553 = vmatpush1.msra.mxu0 %v4412
        %4554 = vmatprep.mubr.f32.mxu0 %v4347
        %4555 = vmatmul.mubr.f32.gmra.mrb[0].mxu0 %v4346
        %v4556 = vpop.f32.mrb[0].mxu0
        %v4557 = vadd.f32 %v4483, %v4556
        %v4558 = vpop.f32.mrb[0].mxu0
        %v4559 = vadd.f32 %v4487, %v4558
        %4560 = vdwg.mxu0
        %4561 = vmatprep.subr.mxu0 %v4415
        %4562 = vmatpush1.msra.mxu0 %v4414
        %4563 = vmatprep.subr.mxu0 %v4417
        %4564 = vmatpush1.msra.mxu0 %v4416
        %4565 = vmatprep.subr.mxu0 %v4419
        %4566 = vmatpush1.msra.mxu0 %v4418
        %4567 = vmatprep.subr.mxu0 %v4421
        %4568 = vmatpush1.msra.mxu0 %v4420
        %4569 = vmatprep.subr.mxu0 %v4423
        %4570 = vmatpush1.msra.mxu0 %v4422
        %4571 = vmatprep.subr.mxu0 %v4425
        %4572 = vmatpush1.msra.mxu0 %v4424
        %4573 = vmatprep.subr.mxu0 %v4427
        %4574 = vmatpush1.msra.mxu0 %v4426
        %4575 = vmatprep.subr.mxu0 %v4429
        %4576 = vmatpush1.msra.mxu0 %v4428
        %4577 = vmatprep.subr.mxu0 %v4431
        %4578 = vmatpush1.msra.mxu0 %v4430
        %4579 = vmatprep.subr.mxu0 %v4433
        %4580 = vmatpush1.msra.mxu0 %v4432
        %4581 = vmatprep.subr.mxu0 %v4435
        %4582 = vmatpush1.msra.mxu0 %v4434
        %4583 = vmatprep.subr.mxu0 %v4437
        %4584 = vmatpush1.msra.mxu0 %v4436
        %4585 = vmatprep.subr.mxu0 %v4439
        %4586 = vmatpush1.msra.mxu0 %v4438
        %4587 = vmatprep.subr.mxu0 %v4441
        %4588 = vmatpush1.msra.mxu0 %v4440
        %4589 = vmatprep.subr.mxu0 %v4443
        %4590 = vmatpush1.msra.mxu0 %v4442
        %4591 = vmatprep.subr.mxu0 %v4445
        %4592 = vmatpush1.msra.mxu0 %v4444
        %4593 = vmatprep.subr.mxu0 %v4447
        %4594 = vmatpush1.msra.mxu0 %v4446
        %4595 = vmatprep.subr.mxu0 %v4449
        %4596 = vmatpush1.msra.mxu0 %v4448
        %4597 = vmatprep.subr.mxu0 %v4451
        %4598 = vmatpush1.msra.mxu0 %v4450
        %4599 = vmatprep.subr.mxu0 %v4453
        %4600 = vmatpush1.msra.mxu0 %v4452
        %4601 = vmatprep.subr.mxu0 %v4455
        %4602 = vmatpush1.msra.mxu0 %v4454
        %4603 = vmatprep.subr.mxu0 %v4457
        %4604 = vmatpush1.msra.mxu0 %v4456
        %4605 = vmatprep.subr.mxu0 %v4459
        %4606 = vmatpush1.msra.mxu0 %v4458
        %4607 = vmatprep.subr.mxu0 %v4461
        %4608 = vmatpush1.msra.mxu0 %v4460
        %4609 = vmatprep.subr.mxu0 %v4463
        %4610 = vmatpush1.msra.mxu0 %v4462
        %4611 = vmatprep.subr.mxu0 %v4465
        %4612 = vmatpush1.msra.mxu0 %v4464
        %4613 = vmatprep.subr.mxu0 %v4467
        %4614 = vmatpush1.msra.mxu0 %v4466
        %4615 = vmatprep.subr.mxu0 %v4469
        %4616 = vmatpush1.msra.mxu0 %v4468
        %4617 = vmatprep.subr.mxu0 %v4471
        %4618 = vmatpush1.msra.mxu0 %v4470
        %4619 = vmatprep.subr.mxu0 %v4473
        %4620 = vmatpush1.msra.mxu0 %v4472
        %4621 = vmatprep.subr.mxu0 %v4475
        %4622 = vmatpush1.msra.mxu0 %v4474
        %4623 = vmatprep.subr.mxu0 %v4477
        %4624 = vmatpush1.msra.mxu0 %v4476
        %4625 = vmatprep.mubr.f32.mxu0 %v4349
        %4626 = vmatmul.mubr.f32.gmra.mrb[0].mxu0 %v4348
        %v4627 = vpop.f32.mrb[0].mxu0
        %v4628 = vadd.f32 %v4557, %v4627
        %v4629 = vpop.f32.mrb[0].mxu0
        %v4630 = vadd.f32 %v4559, %v4629
        %4631 = vdwg.mxu0
        %v4634 = vcombine.low %v4628, %v4630
        %v4636 = vunpack.c.l.s4 1983009808
        %v4637 = vunpack.c.0.s8 %v4636
        %v4638 = vlaneseq
        %v4639 = vshrl.u32 %v4638, 7
        %v4640 = vsub.s32 %v4637, %v4639
        %v4641 = vrot.slane %v4634, %v4640
        %4643 = vst [vmem:[%s435] sm:$0xf] %v4641
        %s4644 = sand.u32 %s191, 1
        %s4645 = scalar_lea.sflag [#allocation4], %s4644
        %s4646 = sand.u32 %s191, 1
        %s4647 = smul.addr %s4646, 4
        %s4648 = scalar_lea.vmem [#allocation13], %s4647
        // Predicated region
        $region69: #{tpu_custom_call.1} parent=43 // pred_check
          %p4649 = pneg %p201
        $region70: #{tpu_custom_call.1} parent=43 // pred_check_branch
          %4651 = sbr.rel (%p4649) target = $region72
        $region71: #{tpu_custom_call.1} parent=43 // pred_region
          %s4652 = smul.u32 2, %s30
          %s4654 = ssub.s32 64, 64
          %4655 = vsyncadd %s4645, %s4654
          %s4656 = smul.addr %s4652, 32
          %s4657 = scalar_lea.hbm %s6, %s4656
          %s4659 = sshll.u32 %s4648, 4
          %s4660 = int_to_ptr.vmem [resolvable:$true] %s4659
          %4662 = dma.vmem_to_hbm [thread:$0]  %s4660, 64, %s4657, %s4645
        $region72: #{tpu_custom_call.1} parent=43 // pred_fallthru
          _
      $region44: #{tpu_custom_call.1} parent=5 // pred_fallthru
        _
      %p4663 = scmp.le.s32.totalorder 2, %s25
      // Predicated region
      $region73: #{tpu_custom_call.1} parent=5 // pred_check
        %p4664 = pneg %p4663
      $region74: #{tpu_custom_call.1} parent=5 // pred_check_branch
        %4666 = sbr.rel (%p4664) target = $region76
      $region75: #{tpu_custom_call.1} parent=5 // pred_region
        %s4667 = ssub.s32 %s25, 2
        // Predicated region
        $region77: #{tpu_custom_call.1} parent=75 // pred_check
          %p4668 = pneg %p207
        $region78: #{tpu_custom_call.1} parent=75 // pred_check_branch
          %4670 = sbr.rel (%p4668) target = $region80
        $region79: #{tpu_custom_call.1} parent=75 // pred_region
          %s4671 = sand.u32 %s192, 1
          %s4672 = scalar_lea.sflag [#allocation4], %s4671
          %s4673 = sand.u32 %s192, 1
          %s4674 = smul.addr %s4673, 4
          %s4675 = scalar_lea.vmem [#allocation13], %s4674
          %4676 = dma.done %s4672, 64
        $region80: #{tpu_custom_call.1} parent=75 // pred_fallthru
          _
      $region76: #{tpu_custom_call.1} parent=5 // pred_fallthru
        _
    $region6: #{tpu_custom_call.1} parent=1 // loop_footer
      %s29 = sadd.s32 1, %s25
    $region7: #{tpu_custom_call.1} parent=1 // loop_footer_branch
      %24 = sbr.rel target = $region3
    $region8: #{tpu_custom_call.1} parent=1 // loop_exit
      _
    %4677 = vsyncpa [#allocation3], 1
    %s4678 = scalar_lea.sflag [#allocation3], 1
    %4679 = vsyncpa %s4678, 1
    %4680 = vsyncpa [#allocation6], 1
    %s4681 = scalar_lea.sflag [#allocation6], 1
    %4682 = vsyncpa %s4681, 1
    %4683 = vsyncpa [#allocation9], 1
    %s4684 = scalar_lea.sflag [#allocation9], 1
    %4685 = vsyncpa %s4684, 1
    %4686 = vsyncpa [#allocation12], 1
    %s4687 = scalar_lea.sflag [#allocation12], 1
    %4688 = vsyncpa %s4687, 1
    %4689 = vsyncpa [#allocation4], 1
    %s4690 = scalar_lea.sflag [#allocation4], 1
    %4691 = vsyncpa %s4690, 1

</llo_original>
